<compile_context>
chip_gen: v7x
topology: tpu7x:2x2x1
jax: 0.10.0
libtpu: 0.0.40
codegen_flags: <defaults>
</compile_context>

<pallas_src>
import functools

import jax
import jax.numpy as jnp
from jax.experimental import pallas as pl
from jax.experimental.pallas import tpu as pltpu


# -----------------------------------------------------------------------------
# In-kernel helpers (traced inside the Pallas kernel body)
# -----------------------------------------------------------------------------
def _smooth_l1(a, b):
  d = a - b
  ad = jnp.abs(d)
  return jnp.where(ad < 1.0, 0.5 * d * d, ad - 0.5)


def _pool3_sum(z):
  """3x3 'valid' sum pooling on (K, H, W) -> (K, H-2, W-2), separable."""
  k, h, w = z.shape
  t = z[:, :, 0:w - 2] + z[:, :, 1:w - 1] + z[:, :, 2:w]        # 1x3 along W
  return t[:, 0:h - 2, :] + t[:, 1:h - 1, :] + t[:, 2:h, :]     # 3x1 along H


# -----------------------------------------------------------------------------
# Pallas kernel.  Grid = (B, num_src_views).  Per step it sees one batch's
# ref image / depth (resident across the view axis) and one warped view+mask.
# All inputs are zero-padded by +1 row / +1 col so gradient shifts are plain
# static slices.  Emits per-batch partial sums into a lane-dense (8,128) block.
# -----------------------------------------------------------------------------
def _unsup_loss_kernel(ref_ref, warped_ref, mask_ref, depth_ref, out_ref,
                       min_ref, sums_ref):
  v = pl.program_id(1)
  nv = pl.num_programs(1)

  _, c, hp, wp = ref_ref.shape
  h = hp - 1
  w = wp - 1

  refp = ref_ref[0]            # (C, H+1, W+1)
  warpp = warped_ref[0]        # (C, H+1, W+1)
  maskp = mask_ref[0]          # (1, H+1, W+1)

  ref = refp[:, :h, :w]
  warped = warpp[:, :h, :w]
  mask = maskp[:, :h, :w]

  # Masked images on the padded grid (pad row/col of the mask is zero, so the
  # padded entries of the products are zero too).
  rm_p = refp * maskp
  wm_p = warpp * maskp
  rm = rm_p[:, :h, :w]
  wm = wm_p[:, :h, :w]

  # ---- per-pixel reconstruction map: 0.5*photo + 0.5*(grad_x + grad_y) -----
  photo = _smooth_l1(wm, rm)

  gx_w = wm - wm_p[:, :h, 1:w + 1]          # forward diff along W (lane axis)
  gx_r = rm - rm_p[:, :h, 1:w + 1]
  gy_w = wm - wm_p[:, 1:h + 1, :w]          # forward diff along H (sublanes)
  gy_r = rm - rm_p[:, 1:h + 1, :w]

  lane = jax.lax.broadcasted_iota(jnp.int32, (c, h, w), 2)
  sub = jax.lax.broadcasted_iota(jnp.int32, (c, h, w), 1)
  not_last_w = (lane < (w - 1)).astype(jnp.float32)   # zero out last column
  not_last_h = (sub < (h - 1)).astype(jnp.float32)    # zero out last row

  rmap = 0.5 * photo + 0.5 * (_smooth_l1(gx_w, gx_r) * not_last_w +
                              _smooth_l1(gy_w, gy_r) * not_last_h)
  reproj = rmap + 10000.0 * (1.0 - mask)    # (1,H,W) mask broadcasts over C

  # ---- per-batch init: running min, partial sums, depth smoothness ---------
  @pl.when(v == 0)
  def _init():
    min_ref[...] = reproj
    d = depth_ref[0][:, :h, :w]                       # (1, H, W)
    i_dx = ref[:, :, :w - 1] - ref[:, :, 1:w]         # (C, H, W-1)
    i_dy = ref[:, :h - 1, :] - ref[:, 1:h, :]         # (C, H-1, W)
    d_dx = d[:, :, :w - 1] - d[:, :, 1:w]             # (1, H, W-1)
    d_dy = d[:, :h - 1, :] - d[:, 1:h, :]             # (1, H-1, W)
    w_x = jnp.exp(-jnp.mean(jnp.abs(i_dx), axis=0, keepdims=True))   # lam=1.0
    w_y = jnp.exp(-jnp.mean(jnp.abs(i_dy), axis=0, keepdims=True))
    sums_ref[0] = jnp.float32(0.0)                    # ssim partial sum
    sums_ref[1] = jnp.sum(jnp.abs(d_dx * w_x))        # smoothness-x sum
    sums_ref[2] = jnp.sum(jnp.abs(d_dy * w_y))        # smoothness-y sum

  @pl.when(v > 0)
  def _update_min():
    min_ref[...] = jnp.minimum(min_ref[...], reproj)

  # ---- SSIM for the first two source views ("if view < 3") -----------------
  @pl.when(v < 2)
  def _ssim():
    inv9 = jnp.float32(1.0 / 9.0)
    mu_x = _pool3_sum(ref) * inv9
    mu_y = _pool3_sum(warped) * inv9
    mu_xx = _pool3_sum(ref * ref) * inv9
    mu_yy = _pool3_sum(warped * warped) * inv9
    mu_xy = _pool3_sum(ref * warped) * inv9
    ssim_mask = _pool3_sum(mask) * inv9               # (1, H-2, W-2)
    sigma_x = mu_xx - mu_x * mu_x
    sigma_y = mu_yy - mu_y * mu_y
    sigma_xy = mu_xy - mu_x * mu_y
    c1 = 0.01 ** 2
    c2 = 0.03 ** 2
    ssim_n = (2.0 * mu_x * mu_y + c1) * (2.0 * sigma_xy + c2)
    ssim_d = (mu_x * mu_x + sigma_x + c1) * (mu_y * mu_y + sigma_y + c2)
    ssim_val = (1.0 - ssim_n * pl.reciprocal(ssim_d, approx=True)) * 0.5
    ssim_map = ssim_mask * jnp.clip(ssim_val, 0.0, 1.0)
    sums_ref[0] = sums_ref[0] + jnp.sum(ssim_map)

  # ---- finalize this batch: min-over-views -> masked sum; emit partials ----
  @pl.when(v == nv - 1)
  def _finalize():
    mn = min_ref[...]
    recon_sum = jnp.sum(jnp.where(mn < 10000.0, mn, 0.0))
    lane8 = jax.lax.broadcasted_iota(jnp.int32, (8, 128), 1)
    sub8 = jax.lax.broadcasted_iota(jnp.int32, (8, 128), 0)
    row0 = sub8 == 0
    blk = jnp.where(row0 & (lane8 == 0), recon_sum, jnp.float32(0.0))
    blk = jnp.where(row0 & (lane8 == 1), sums_ref[0], blk)
    blk = jnp.where(row0 & (lane8 == 2), sums_ref[1], blk)
    blk = jnp.where(row0 & (lane8 == 3), sums_ref[2], blk)
    out_ref[0] = blk


def _run_loss_kernel(ref_p, warped_flat, mask_flat, depth_p, num_src, batch):
  """ref_p: (B,C,Hp,Wp); warped_flat: (NV*B,C,Hp,Wp); mask_flat: (NV*B,1,Hp,Wp);
     depth_p: (B,1,Hp,Wp).  Returns per-batch partial sums (B, 8, 128)."""
  b_, c_, hp, wp = ref_p.shape
  assert b_ == batch

  return pl.pallas_call(
      _unsup_loss_kernel,
      out_shape=jax.ShapeDtypeStruct((batch, 8, 128), jnp.float32),
      grid_spec=pltpu.PrefetchScalarGridSpec(
          num_scalar_prefetch=0,
          grid=(batch, num_src),
          in_specs=[
              pl.BlockSpec((1, c_, hp, wp), lambda b, v: (b, 0, 0, 0)),
              pl.BlockSpec((1, c_, hp, wp),
                           lambda b, v: (v * batch + b, 0, 0, 0)),
              pl.BlockSpec((1, 1, hp, wp),
                           lambda b, v: (v * batch + b, 0, 0, 0)),
              pl.BlockSpec((1, 1, hp, wp), lambda b, v: (b, 0, 0, 0)),
          ],
          out_specs=pl.BlockSpec((1, 8, 128), lambda b, v: (b, 0, 0)),
          scratch_shapes=[
              pltpu.VMEM((c_, hp - 1, wp - 1), jnp.float32),  # per-pixel min
              pltpu.SMEM((3,), jnp.float32),                  # ssim / sx / sy
          ],
      ),
      compiler_params=pltpu.CompilerParams(
          dimension_semantics=("parallel", "arbitrary"),
          vmem_limit_bytes=48 * 1024 * 1024,
      ),
  )(ref_p, warped_flat, mask_flat, depth_p)


# -----------------------------------------------------------------------------
# Plain-JAX glue: interpolation (nearest), camera math, inverse warping.
# -----------------------------------------------------------------------------
def _bilinear_sample_nchw(img, x, y):
  """img: (B,C,H,W); x, y: (B,H,W) pixel coords. Returns warped, mask."""
  # TODO(synk): data-dependent bilinear gather (jnp.take_along_axis) has no
  # clean Pallas/TPU equivalent here; kept in plain JAX glue.
  b, c, h, w = img.shape
  x0 = jnp.floor(x)
  y0 = jnp.floor(y)
  x1 = x0 + 1.0
  y1 = y0 + 1.0
  valid = (x >= 0.0) & (x <= w - 1.0) & (y >= 0.0) & (y <= h - 1.0)
  x0c = jnp.clip(x0, 0, w - 1).astype(jnp.int32)
  x1c = jnp.clip(x1, 0, w - 1).astype(jnp.int32)
  y0c = jnp.clip(y0, 0, h - 1).astype(jnp.int32)
  y1c = jnp.clip(y1, 0, h - 1).astype(jnp.int32)

  flat = img.reshape(b, c, h * w)

  def gather(yi, xi):
    idx = (yi * w + xi).reshape(b, 1, h * w)
    return jnp.take_along_axis(flat, idx, axis=2).reshape(b, c, h, w)

  ia = gather(y0c, x0c)
  ib = gather(y1c, x0c)
  ic = gather(y0c, x1c)
  id_ = gather(y1c, x1c)
  wa = ((x1 - x) * (y1 - y))[:, None]
  wb = ((x1 - x) * (y - y0))[:, None]
  wc = ((x - x0) * (y1 - y))[:, None]
  wd = ((x - x0) * (y - y0))[:, None]
  warped = wa * ia + wb * ib + wc * ic + wd * id_
  mask = valid.astype(jnp.float32)[:, None]
  return warped * mask, mask


def _inverse_warping(view_img, ref_cam, view_cam, depth):
  """Warp view_img (B,C,H,W) into the reference frame using ref depth (B,H,W).

  cams: (B,2,4,4) = [extrinsic, intrinsic].
  """
  b, c, h, w = view_img.shape
  e_ref, e_view = ref_cam[:, 0], view_cam[:, 0]
  k_ref, k_view = ref_cam[:, 1, :3, :3], view_cam[:, 1, :3, :3]
  r_ref, t_ref = e_ref[:, :3, :3], e_ref[:, :3, 3:4]
  r_view, t_view = e_view[:, :3, :3], e_view[:, :3, 3:4]

  # relative pose ref-cam -> view-cam
  r_rel = r_view @ jnp.swapaxes(r_ref, -1, -2)
  t_rel = t_view - r_rel @ t_ref

  ys, xs = jnp.meshgrid(jnp.arange(h, dtype=jnp.float32),
                        jnp.arange(w, dtype=jnp.float32), indexing="ij")
  pix = jnp.stack([xs, ys, jnp.ones_like(xs)], axis=0).reshape(3, -1)   # (3,HW)

  k_ref_inv = jnp.linalg.inv(k_ref)                                     # (B,3,3)
  cam_pts = (k_ref_inv @ pix[None]) * depth.reshape(b, 1, -1)           # (B,3,HW)
  cam_pts_v = r_rel @ cam_pts + t_rel
  proj = k_view @ cam_pts_v
  px = (proj[:, 0] / (proj[:, 2] + 1e-10)).reshape(b, h, w)
  py = (proj[:, 1] / (proj[:, 2] + 1e-10)).reshape(b, h, w)
  return _bilinear_sample_nchw(view_img, px, py)


def _nearest_downsample(img_nchw, factor):
  # F.interpolate default mode='nearest' with integer downscale == strided slice
  return img_nchw[:, :, ::factor, ::factor]


@functools.partial(jax.jit, static_argnums=(3,))
def unsup_loss_07(imgs, cams, depth, stage_idx):
  """imgs: (B, V, C, H, W) float32, cams: (B, V, 2, 4, 4),
     depth: (B, h, w) at the stage resolution."""
  num_views = imgs.shape[1]
  img_list = [imgs[:, v] for v in range(num_views)]   # torch.unbind(imgs, 1)
  cam_list = [cams[:, v] for v in range(num_views)]

  def stage_resize(x):
    if stage_idx == 0:
      return _nearest_downsample(x, 4)
    elif stage_idx == 1:
      return _nearest_downsample(x, 2)
    return x

  ref_img = stage_resize(img_list[0]).astype(jnp.float32)   # (B, C, H, W)
  ref_cam = cam_list[0]
  batch, chan, height, width = ref_img.shape

  warped_list, mask_list = [], []
  for view in range(1, num_views):
    view_img = stage_resize(img_list[view]).astype(jnp.float32)
    warped, mask = _inverse_warping(view_img, ref_cam, cam_list[view], depth)
    warped_list.append(warped)
    mask_list.append(mask)

  num_src = num_views - 1
  warped_stack = jnp.stack(warped_list, axis=0)   # (NV, B, C, H, W)
  mask_stack = jnp.stack(mask_list, axis=0)       # (NV, B, 1, H, W)
  depth4 = depth[:, None, :, :].astype(jnp.float32)

  # +1 row / +1 col zero padding so the kernel's gradient shifts are static
  # full-size slices (no in-kernel concatenate).
  pad_hw = ((0, 0), (0, 0), (0, 1), (0, 1))
  ref_p = jnp.pad(ref_img, pad_hw)
  dep_p = jnp.pad(depth4, pad_hw)
  wrp_p = jnp.pad(warped_stack, ((0, 0),) + pad_hw)
  msk_p = jnp.pad(mask_stack, ((0, 0),) + pad_hw)

  hp, wp = height + 1, width + 1
  wrp_flat = wrp_p.reshape(num_src * batch, chan, hp, wp)
  msk_flat = msk_p.reshape(num_src * batch, 1, hp, wp)

  out = _run_loss_kernel(ref_p, wrp_flat, msk_flat, dep_p, num_src, batch)

  r_sum = jnp.sum(out[:, 0, 0])
  ssim_sum = jnp.sum(out[:, 0, 1])
  sx = jnp.sum(out[:, 0, 2])
  sy = jnp.sum(out[:, 0, 3])

  reconstr_loss = r_sum / jnp.float32(batch * chan * height * width)
  ssim_loss = ssim_sum / jnp.float32(batch * chan * (height - 2) * (width - 2))
  smooth_loss = (sx / jnp.float32(batch * height * (width - 1)) +
                 sy / jnp.float32(batch * (height - 1) * width))
  return 12.0 * reconstr_loss + 6.0 * ssim_loss + 0.19 * smooth_loss


# -----------------------------------------------------------------------------
# Demo
# -----------------------------------------------------------------------------
def _make_cams(batch, num_views, height, width):
  k = jnp.array([[20.0, 0.0, width / 2.0],
                 [0.0, 20.0, height / 2.0],
                 [0.0, 0.0, 1.0]], dtype=jnp.float32)
  k4 = jnp.zeros((4, 4), jnp.float32).at[:3, :3].set(k).at[3, 3].set(1.0)
  per_view = []
  for v in range(num_views):
    e = jnp.eye(4, dtype=jnp.float32)
    e = e.at[0, 3].set(0.08 * v).at[1, 3].set(-0.05 * v)
    per_view.append(jnp.stack([e, k4], axis=0))        # (2, 4, 4)
  cams = jnp.stack(per_view, axis=0)                   # (V, 2, 4, 4)
  return jnp.broadcast_to(cams[None], (batch, num_views, 2, 4, 4))


if __name__ == "__main__":
  key = jax.random.PRNGKey(0)
  k_img, k_depth = jax.random.split(key)

  B, V, C, H, W = 2, 3, 3, 16, 16
  imgs = jax.random.uniform(k_img, (B, V, C, H, W), dtype=jnp.float32)
  cams = _make_cams(B, V, H, W)
  depth = 1.0 + jax.random.uniform(k_depth, (B, H, W), dtype=jnp.float32)

  loss = unsup_loss_07(imgs, cams, depth, 2)           # stage_idx=2 (no resize)
  jax.block_until_ready(loss)
  print("KERNEL_OK")
</pallas_src>

<mosaic_0001>
module attributes {stable_mosaic.version = 11 : i64} {
  func.func @_unsup_loss_kernel(%arg0: i32, %arg1: i32, %arg2: memref<1x3x17x17xf32, #tpu.memory_space<vmem>>, %arg3: memref<1x3x17x17xf32, #tpu.memory_space<vmem>>, %arg4: memref<1x1x17x17xf32, #tpu.memory_space<vmem>>, %arg5: memref<1x1x17x17xf32, #tpu.memory_space<vmem>>, %arg6: memref<1x8x128xf32, #tpu.memory_space<vmem>>, %arg7: memref<3x16x16xf32, #tpu.memory_space<vmem>>, %arg8: memref<3xf32, #tpu.memory_space<smem>>) attributes {dimension_semantics = [#tpu.dimension_semantics<parallel>, #tpu.dimension_semantics<arbitrary>], iteration_bounds = array<i64: 2, 2>, scalar_prefetch = 0 : i64, scratch_operands = 2 : i64, tpu.core_type = #tpu.core_type<tc>, window_params = [{transform_indices = @transform_0, window_bounds = array<i64: 1, 3, 17, 17>}, {transform_indices = @transform_1, window_bounds = array<i64: 1, 3, 17, 17>}, {transform_indices = @transform_2, window_bounds = array<i64: 1, 1, 17, 17>}, {transform_indices = @transform_3, window_bounds = array<i64: 1, 1, 17, 17>}, {transform_indices = @transform_4, window_bounds = array<i64: 1, 8, 128>}]} {
    %c0 = arith.constant 0 : index
    %c0_0 = arith.constant 0 : index
    %c0_1 = arith.constant 0 : index
    %c0_2 = arith.constant 0 : index
    %0 = vector.load %arg2[%c0, %c0_0, %c0_1, %c0_2] : memref<1x3x17x17xf32, #tpu.memory_space<vmem>>, vector<1x3x17x17xf32>
    %1 = vector.shape_cast %0 : vector<1x3x17x17xf32> to vector<3x17x17xf32>
    %c0_3 = arith.constant 0 : index
    %c0_4 = arith.constant 0 : index
    %c0_5 = arith.constant 0 : index
    %c0_6 = arith.constant 0 : index
    %2 = vector.load %arg3[%c0_3, %c0_4, %c0_5, %c0_6] : memref<1x3x17x17xf32, #tpu.memory_space<vmem>>, vector<1x3x17x17xf32>
    %3 = vector.shape_cast %2 : vector<1x3x17x17xf32> to vector<3x17x17xf32>
    %c0_7 = arith.constant 0 : index
    %c0_8 = arith.constant 0 : index
    %c0_9 = arith.constant 0 : index
    %c0_10 = arith.constant 0 : index
    %4 = vector.load %arg4[%c0_7, %c0_8, %c0_9, %c0_10] : memref<1x1x17x17xf32, #tpu.memory_space<vmem>>, vector<1x1x17x17xf32>
    %5 = vector.shape_cast %4 : vector<1x1x17x17xf32> to vector<1x17x17xf32>
    %6 = vector.extract_strided_slice %1 {offsets = [0, 0, 0], sizes = [3, 16, 16], strides = [1, 1, 1]} : vector<3x17x17xf32> to vector<3x16x16xf32>
    %7 = vector.extract_strided_slice %3 {offsets = [0, 0, 0], sizes = [3, 16, 16], strides = [1, 1, 1]} : vector<3x17x17xf32> to vector<3x16x16xf32>
    %8 = vector.extract_strided_slice %5 {offsets = [0, 0, 0], sizes = [1, 16, 16], strides = [1, 1, 1]} : vector<1x17x17xf32> to vector<1x16x16xf32>
    %9 = vector.broadcast %5 : vector<1x17x17xf32> to vector<3x17x17xf32>
    %10 = arith.mulf %1, %9 : vector<3x17x17xf32>
    %11 = vector.broadcast %5 : vector<1x17x17xf32> to vector<3x17x17xf32>
    %12 = arith.mulf %3, %11 : vector<3x17x17xf32>
    %13 = vector.extract_strided_slice %10 {offsets = [0, 0, 0], sizes = [3, 16, 16], strides = [1, 1, 1]} : vector<3x17x17xf32> to vector<3x16x16xf32>
    %14 = vector.extract_strided_slice %12 {offsets = [0, 0, 0], sizes = [3, 16, 16], strides = [1, 1, 1]} : vector<3x17x17xf32> to vector<3x16x16xf32>
    %15 = arith.subf %14, %13 : vector<3x16x16xf32>
    %16 = math.absf %15 : vector<3x16x16xf32>
    %cst = arith.constant 1.000000e+00 : f32
    %17 = vector.broadcast %cst : f32 to vector<3x16x16xf32>
    %18 = arith.cmpf olt, %16, %17 : vector<3x16x16xf32>
    %cst_11 = arith.constant 5.000000e-01 : f32
    %19 = vector.broadcast %cst_11 : f32 to vector<3x16x16xf32>
    %20 = arith.mulf %19, %15 : vector<3x16x16xf32>
    %21 = arith.mulf %20, %15 : vector<3x16x16xf32>
    %cst_12 = arith.constant 5.000000e-01 : f32
    %22 = vector.broadcast %cst_12 : f32 to vector<3x16x16xf32>
    %23 = arith.subf %16, %22 : vector<3x16x16xf32>
    %24 = arith.select %18, %21, %23 : vector<3x16x16xi1>, vector<3x16x16xf32>
    %25 = vector.extract_strided_slice %12 {offsets = [0, 0, 1], sizes = [3, 16, 16], strides = [1, 1, 1]} : vector<3x17x17xf32> to vector<3x16x16xf32>
    %26 = arith.subf %14, %25 : vector<3x16x16xf32>
    %27 = vector.extract_strided_slice %10 {offsets = [0, 0, 1], sizes = [3, 16, 16], strides = [1, 1, 1]} : vector<3x17x17xf32> to vector<3x16x16xf32>
    %28 = arith.subf %13, %27 : vector<3x16x16xf32>
    %29 = vector.extract_strided_slice %12 {offsets = [0, 1, 0], sizes = [3, 16, 16], strides = [1, 1, 1]} : vector<3x17x17xf32> to vector<3x16x16xf32>
    %30 = arith.subf %14, %29 : vector<3x16x16xf32>
    %31 = vector.extract_strided_slice %10 {offsets = [0, 1, 0], sizes = [3, 16, 16], strides = [1, 1, 1]} : vector<3x17x17xf32> to vector<3x16x16xf32>
    %32 = arith.subf %13, %31 : vector<3x16x16xf32>
    %33 = tpu.iota {dimensions = array<i32: 2>} : vector<3x16x16xi32>
    %34 = tpu.iota {dimensions = array<i32: 1>} : vector<3x16x16xi32>
    %c15_i32 = arith.constant 15 : i32
    %35 = vector.broadcast %c15_i32 : i32 to vector<3x16x16xi32>
    %36 = arith.cmpi slt, %33, %35 : vector<3x16x16xi32>
    %37 = arith.extui %36 : vector<3x16x16xi1> to vector<3x16x16xi32>
    %38 = arith.sitofp %37 : vector<3x16x16xi32> to vector<3x16x16xf32>
    %c15_i32_13 = arith.constant 15 : i32
    %39 = vector.broadcast %c15_i32_13 : i32 to vector<3x16x16xi32>
    %40 = arith.cmpi slt, %34, %39 : vector<3x16x16xi32>
    %41 = arith.extui %40 : vector<3x16x16xi1> to vector<3x16x16xi32>
    %42 = arith.sitofp %41 : vector<3x16x16xi32> to vector<3x16x16xf32>
    %cst_14 = arith.constant 5.000000e-01 : f32
    %43 = vector.broadcast %cst_14 : f32 to vector<3x16x16xf32>
    %44 = arith.mulf %43, %24 : vector<3x16x16xf32>
    %45 = arith.subf %26, %28 : vector<3x16x16xf32>
    %46 = math.absf %45 : vector<3x16x16xf32>
    %cst_15 = arith.constant 1.000000e+00 : f32
    %47 = vector.broadcast %cst_15 : f32 to vector<3x16x16xf32>
    %48 = arith.cmpf olt, %46, %47 : vector<3x16x16xf32>
    %cst_16 = arith.constant 5.000000e-01 : f32
    %49 = vector.broadcast %cst_16 : f32 to vector<3x16x16xf32>
    %50 = arith.mulf %49, %45 : vector<3x16x16xf32>
    %51 = arith.mulf %50, %45 : vector<3x16x16xf32>
    %cst_17 = arith.constant 5.000000e-01 : f32
    %52 = vector.broadcast %cst_17 : f32 to vector<3x16x16xf32>
    %53 = arith.subf %46, %52 : vector<3x16x16xf32>
    %54 = arith.select %48, %51, %53 : vector<3x16x16xi1>, vector<3x16x16xf32>
    %55 = arith.mulf %54, %38 : vector<3x16x16xf32>
    %56 = arith.subf %30, %32 : vector<3x16x16xf32>
    %57 = math.absf %56 : vector<3x16x16xf32>
    %cst_18 = arith.constant 1.000000e+00 : f32
    %58 = vector.broadcast %cst_18 : f32 to vector<3x16x16xf32>
    %59 = arith.cmpf olt, %57, %58 : vector<3x16x16xf32>
    %cst_19 = arith.constant 5.000000e-01 : f32
    %60 = vector.broadcast %cst_19 : f32 to vector<3x16x16xf32>
    %61 = arith.mulf %60, %56 : vector<3x16x16xf32>
    %62 = arith.mulf %61, %56 : vector<3x16x16xf32>
    %cst_20 = arith.constant 5.000000e-01 : f32
    %63 = vector.broadcast %cst_20 : f32 to vector<3x16x16xf32>
    %64 = arith.subf %57, %63 : vector<3x16x16xf32>
    %65 = arith.select %59, %62, %64 : vector<3x16x16xi1>, vector<3x16x16xf32>
    %66 = arith.mulf %65, %42 : vector<3x16x16xf32>
    %67 = arith.addf %55, %66 : vector<3x16x16xf32>
    %cst_21 = arith.constant 5.000000e-01 : f32
    %68 = vector.broadcast %cst_21 : f32 to vector<3x16x16xf32>
    %69 = arith.mulf %68, %67 : vector<3x16x16xf32>
    %70 = arith.addf %44, %69 : vector<3x16x16xf32>
    %cst_22 = arith.constant 1.000000e+00 : f32
    %71 = vector.broadcast %cst_22 : f32 to vector<1x16x16xf32>
    %72 = arith.subf %71, %8 : vector<1x16x16xf32>
    %cst_23 = arith.constant 1.000000e+04 : f32
    %73 = vector.broadcast %cst_23 : f32 to vector<1x16x16xf32>
    %74 = arith.mulf %73, %72 : vector<1x16x16xf32>
    %75 = vector.broadcast %74 : vector<1x16x16xf32> to vector<3x16x16xf32>
    %76 = arith.addf %70, %75 : vector<3x16x16xf32>
    %c0_i32 = arith.constant 0 : i32
    %77 = arith.cmpi eq, %arg1, %c0_i32 : i32
    %78 = arith.extui %77 : i1 to i32
    %c0_i32_24 = arith.constant 0 : i32
    %79 = arith.cmpi ne, %78, %c0_i32_24 : i32
    scf.if %79 {
      %c0_29 = arith.constant 0 : index
      %c0_30 = arith.constant 0 : index
      %c0_31 = arith.constant 0 : index
      %89 = vector.load %arg7[%c0_29, %c0_30, %c0_31] : memref<3x16x16xf32, #tpu.memory_space<vmem>>, vector<3x16x16xf32>
      tpu.vector_store %arg7[%c0_29, %c0_30, %c0_31], %76 {strides = array<i32>} : memref<3x16x16xf32, #tpu.memory_space<vmem>>, vector<3x16x16xf32>,
      %c0_32 = arith.constant 0 : index
      %c0_33 = arith.constant 0 : index
      %c0_34 = arith.constant 0 : index
      %c0_35 = arith.constant 0 : index
      %90 = vector.load %arg5[%c0_32, %c0_33, %c0_34, %c0_35] : memref<1x1x17x17xf32, #tpu.memory_space<vmem>>, vector<1x1x17x17xf32>
      %91 = vector.shape_cast %90 : vector<1x1x17x17xf32> to vector<1x17x17xf32>
      %92 = vector.extract_strided_slice %91 {offsets = [0, 0, 0], sizes = [1, 16, 16], strides = [1, 1, 1]} : vector<1x17x17xf32> to vector<1x16x16xf32>
      %93 = vector.extract_strided_slice %6 {offsets = [0, 0, 0], sizes = [3, 16, 15], strides = [1, 1, 1]} : vector<3x16x16xf32> to vector<3x16x15xf32>
      %94 = vector.extract_strided_slice %6 {offsets = [0, 0, 1], sizes = [3, 16, 15], strides = [1, 1, 1]} : vector<3x16x16xf32> to vector<3x16x15xf32>
      %95 = arith.subf %93, %94 : vector<3x16x15xf32>
      %96 = vector.extract_strided_slice %6 {offsets = [0, 0, 0], sizes = [3, 15, 16], strides = [1, 1, 1]} : vector<3x16x16xf32> to vector<3x15x16xf32>
      %97 = vector.extract_strided_slice %6 {offsets = [0, 1, 0], sizes = [3, 15, 16], strides = [1, 1, 1]} : vector<3x16x16xf32> to vector<3x15x16xf32>
      %98 = arith.subf %96, %97 : vector<3x15x16xf32>
      %99 = vector.extract_strided_slice %92 {offsets = [0, 0, 0], sizes = [1, 16, 15], strides = [1, 1, 1]} : vector<1x16x16xf32> to vector<1x16x15xf32>
      %100 = vector.extract_strided_slice %92 {offsets = [0, 0, 1], sizes = [1, 16, 15], strides = [1, 1, 1]} : vector<1x16x16xf32> to vector<1x16x15xf32>
      %101 = arith.subf %99, %100 : vector<1x16x15xf32>
      %102 = vector.extract_strided_slice %92 {offsets = [0, 0, 0], sizes = [1, 15, 16], strides = [1, 1, 1]} : vector<1x16x16xf32> to vector<1x15x16xf32>
      %103 = vector.extract_strided_slice %92 {offsets = [0, 1, 0], sizes = [1, 15, 16], strides = [1, 1, 1]} : vector<1x16x16xf32> to vector<1x15x16xf32>
      %104 = arith.subf %102, %103 : vector<1x15x16xf32>
      %105 = math.absf %95 : vector<3x16x15xf32>
      %cst_36 = arith.constant dense<0.000000e+00> : vector<16x15xf32>
      %106 = vector.multi_reduction <add>, %105, %cst_36 [0] : vector<3x16x15xf32> to vector<16x15xf32>
      %107 = vector.shape_cast %106 : vector<16x15xf32> to vector<1x16x15xf32>
      %cst_37 = arith.constant 3.000000e+00 : f32
      %108 = vector.broadcast %cst_37 : f32 to vector<1x16x15xf32>
      %109 = arith.divf %107, %108 : vector<1x16x15xf32>
      %cst_38 = arith.constant 0.000000e+00 : f32
      %110 = vector.broadcast %cst_38 : f32 to vector<1x16x15xf32>
      %111 = arith.subf %110, %109 : vector<1x16x15xf32>
      %112 = math.exp %111 : vector<1x16x15xf32>
      %113 = math.absf %98 : vector<3x15x16xf32>
      %cst_39 = arith.constant dense<0.000000e+00> : vector<15x16xf32>
      %114 = vector.multi_reduction <add>, %113, %cst_39 [0] : vector<3x15x16xf32> to vector<15x16xf32>
      %115 = vector.shape_cast %114 : vector<15x16xf32> to vector<1x15x16xf32>
      %cst_40 = arith.constant 3.000000e+00 : f32
      %116 = vector.broadcast %cst_40 : f32 to vector<1x15x16xf32>
      %117 = arith.divf %115, %116 : vector<1x15x16xf32>
      %cst_41 = arith.constant 0.000000e+00 : f32
      %118 = vector.broadcast %cst_41 : f32 to vector<1x15x16xf32>
      %119 = arith.subf %118, %117 : vector<1x15x16xf32>
      %120 = math.exp %119 : vector<1x15x16xf32>
      %cst_42 = arith.constant 0.000000e+00 : f32
      %c0_43 = arith.constant 0 : index
      %121 = memref.load %arg8[%c0_43] : memref<3xf32, #tpu.memory_space<smem>>
      memref.store %cst_42, %arg8[%c0_43] : memref<3xf32, #tpu.memory_space<smem>>
      %122 = arith.mulf %101, %112 : vector<1x16x15xf32>
      %123 = math.absf %122 : vector<1x16x15xf32>
      %124 = vector.shape_cast %123 : vector<1x16x15xf32> to vector<1x1x16x15xf32>
      %cst_44 = arith.constant dense<0.000000e+00> : vector<1xf32>
      %125 = vector.multi_reduction <add>, %124, %cst_44 [1, 2, 3] : vector<1x1x16x15xf32> to vector<1xf32>
      %126 = vector.shape_cast %125 : vector<1xf32> to vector<1x1x1x1xf32>
      %127 = vector.extract %126[0, 0, 0, 0] : f32 from vector<1x1x1x1xf32>
      %c1 = arith.constant 1 : index
      %128 = memref.load %arg8[%c1] : memref<3xf32, #tpu.memory_space<smem>>
      memref.store %127, %arg8[%c1] : memref<3xf32, #tpu.memory_space<smem>>
      %129 = arith.mulf %104, %120 : vector<1x15x16xf32>
      %130 = math.absf %129 : vector<1x15x16xf32>
      %131 = vector.shape_cast %130 : vector<1x15x16xf32> to vector<1x1x15x16xf32>
      %cst_45 = arith.constant dense<0.000000e+00> : vector<1xf32>
      %132 = vector.multi_reduction <add>, %131, %cst_45 [1, 2, 3] : vector<1x1x15x16xf32> to vector<1xf32>
      %133 = vector.shape_cast %132 : vector<1xf32> to vector<1x1x1x1xf32>
      %134 = vector.extract %133[0, 0, 0, 0] : f32 from vector<1x1x1x1xf32>
      %c2 = arith.constant 2 : index
      %135 = memref.load %arg8[%c2] : memref<3xf32, #tpu.memory_space<smem>>
      memref.store %134, %arg8[%c2] : memref<3xf32, #tpu.memory_space<smem>>
    } else {
    }
    %c0_i32_25 = arith.constant 0 : i32
    %80 = arith.cmpi sgt, %arg1, %c0_i32_25 : i32
    %81 = arith.extui %80 : i1 to i32
    %c0_i32_26 = arith.constant 0 : i32
    %82 = arith.cmpi ne, %81, %c0_i32_26 : i32
    scf.if %82 {
      %c0_29 = arith.constant 0 : index
      %c0_30 = arith.constant 0 : index
      %c0_31 = arith.constant 0 : index
      %89 = vector.load %arg7[%c0_29, %c0_30, %c0_31] : memref<3x16x16xf32, #tpu.memory_space<vmem>>, vector<3x16x16xf32>
      %90 = arith.minimumf %89, %76 : vector<3x16x16xf32>
      %c0_32 = arith.constant 0 : index
      %c0_33 = arith.constant 0 : index
      %c0_34 = arith.constant 0 : index
      %91 = vector.load %arg7[%c0_32, %c0_33, %c0_34] : memref<3x16x16xf32, #tpu.memory_space<vmem>>, vector<3x16x16xf32>
      tpu.vector_store %arg7[%c0_32, %c0_33, %c0_34], %90 {strides = array<i32>} : memref<3x16x16xf32, #tpu.memory_space<vmem>>, vector<3x16x16xf32>,
    } else {
    }
    %c2_i32 = arith.constant 2 : i32
    %83 = arith.cmpi slt, %arg1, %c2_i32 : i32
    %84 = arith.extui %83 : i1 to i32
    %c0_i32_27 = arith.constant 0 : i32
    %85 = arith.cmpi ne, %84, %c0_i32_27 : i32
    scf.if %85 {
      %89 = vector.extract_strided_slice %6 {offsets = [0, 0, 0], sizes = [3, 16, 14], strides = [1, 1, 1]} : vector<3x16x16xf32> to vector<3x16x14xf32>
      %90 = vector.extract_strided_slice %6 {offsets = [0, 0, 1], sizes = [3, 16, 14], strides = [1, 1, 1]} : vector<3x16x16xf32> to vector<3x16x14xf32>
      %91 = arith.addf %89, %90 : vector<3x16x14xf32>
      %92 = vector.extract_strided_slice %6 {offsets = [0, 0, 2], sizes = [3, 16, 14], strides = [1, 1, 1]} : vector<3x16x16xf32> to vector<3x16x14xf32>
      %93 = arith.addf %91, %92 : vector<3x16x14xf32>
      %94 = vector.extract_strided_slice %93 {offsets = [0, 0, 0], sizes = [3, 14, 14], strides = [1, 1, 1]} : vector<3x16x14xf32> to vector<3x14x14xf32>
      %95 = vector.extract_strided_slice %93 {offsets = [0, 1, 0], sizes = [3, 14, 14], strides = [1, 1, 1]} : vector<3x16x14xf32> to vector<3x14x14xf32>
      %96 = arith.addf %94, %95 : vector<3x14x14xf32>
      %97 = vector.extract_strided_slice %93 {offsets = [0, 2, 0], sizes = [3, 14, 14], strides = [1, 1, 1]} : vector<3x16x14xf32> to vector<3x14x14xf32>
      %98 = arith.addf %96, %97 : vector<3x14x14xf32>
      %cst_29 = arith.constant 0.111111112 : f32
      %99 = vector.broadcast %cst_29 : f32 to vector<3x14x14xf32>
      %100 = arith.mulf %98, %99 : vector<3x14x14xf32>
      %101 = vector.extract_strided_slice %7 {offsets = [0, 0, 0], sizes = [3, 16, 14], strides = [1, 1, 1]} : vector<3x16x16xf32> to vector<3x16x14xf32>
      %102 = vector.extract_strided_slice %7 {offsets = [0, 0, 1], sizes = [3, 16, 14], strides = [1, 1, 1]} : vector<3x16x16xf32> to vector<3x16x14xf32>
      %103 = arith.addf %101, %102 : vector<3x16x14xf32>
      %104 = vector.extract_strided_slice %7 {offsets = [0, 0, 2], sizes = [3, 16, 14], strides = [1, 1, 1]} : vector<3x16x16xf32> to vector<3x16x14xf32>
      %105 = arith.addf %103, %104 : vector<3x16x14xf32>
      %106 = vector.extract_strided_slice %105 {offsets = [0, 0, 0], sizes = [3, 14, 14], strides = [1, 1, 1]} : vector<3x16x14xf32> to vector<3x14x14xf32>
      %107 = vector.extract_strided_slice %105 {offsets = [0, 1, 0], sizes = [3, 14, 14], strides = [1, 1, 1]} : vector<3x16x14xf32> to vector<3x14x14xf32>
      %108 = arith.addf %106, %107 : vector<3x14x14xf32>
      %109 = vector.extract_strided_slice %105 {offsets = [0, 2, 0], sizes = [3, 14, 14], strides = [1, 1, 1]} : vector<3x16x14xf32> to vector<3x14x14xf32>
      %110 = arith.addf %108, %109 : vector<3x14x14xf32>
      %cst_30 = arith.constant 0.111111112 : f32
      %111 = vector.broadcast %cst_30 : f32 to vector<3x14x14xf32>
      %112 = arith.mulf %110, %111 : vector<3x14x14xf32>
      %113 = arith.mulf %6, %6 : vector<3x16x16xf32>
      %114 = vector.extract_strided_slice %113 {offsets = [0, 0, 0], sizes = [3, 16, 14], strides = [1, 1, 1]} : vector<3x16x16xf32> to vector<3x16x14xf32>
      %115 = vector.extract_strided_slice %113 {offsets = [0, 0, 1], sizes = [3, 16, 14], strides = [1, 1, 1]} : vector<3x16x16xf32> to vector<3x16x14xf32>
      %116 = arith.addf %114, %115 : vector<3x16x14xf32>
      %117 = vector.extract_strided_slice %113 {offsets = [0, 0, 2], sizes = [3, 16, 14], strides = [1, 1, 1]} : vector<3x16x16xf32> to vector<3x16x14xf32>
      %118 = arith.addf %116, %117 : vector<3x16x14xf32>
      %119 = vector.extract_strided_slice %118 {offsets = [0, 0, 0], sizes = [3, 14, 14], strides = [1, 1, 1]} : vector<3x16x14xf32> to vector<3x14x14xf32>
      %120 = vector.extract_strided_slice %118 {offsets = [0, 1, 0], sizes = [3, 14, 14], strides = [1, 1, 1]} : vector<3x16x14xf32> to vector<3x14x14xf32>
      %121 = arith.addf %119, %120 : vector<3x14x14xf32>
      %122 = vector.extract_strided_slice %118 {offsets = [0, 2, 0], sizes = [3, 14, 14], strides = [1, 1, 1]} : vector<3x16x14xf32> to vector<3x14x14xf32>
      %123 = arith.addf %121, %122 : vector<3x14x14xf32>
      %cst_31 = arith.constant 0.111111112 : f32
      %124 = vector.broadcast %cst_31 : f32 to vector<3x14x14xf32>
      %125 = arith.mulf %123, %124 : vector<3x14x14xf32>
      %126 = arith.mulf %7, %7 : vector<3x16x16xf32>
      %127 = vector.extract_strided_slice %126 {offsets = [0, 0, 0], sizes = [3, 16, 14], strides = [1, 1, 1]} : vector<3x16x16xf32> to vector<3x16x14xf32>
      %128 = vector.extract_strided_slice %126 {offsets = [0, 0, 1], sizes = [3, 16, 14], strides = [1, 1, 1]} : vector<3x16x16xf32> to vector<3x16x14xf32>
      %129 = arith.addf %127, %128 : vector<3x16x14xf32>
      %130 = vector.extract_strided_slice %126 {offsets = [0, 0, 2], sizes = [3, 16, 14], strides = [1, 1, 1]} : vector<3x16x16xf32> to vector<3x16x14xf32>
      %131 = arith.addf %129, %130 : vector<3x16x14xf32>
      %132 = vector.extract_strided_slice %131 {offsets = [0, 0, 0], sizes = [3, 14, 14], strides = [1, 1, 1]} : vector<3x16x14xf32> to vector<3x14x14xf32>
      %133 = vector.extract_strided_slice %131 {offsets = [0, 1, 0], sizes = [3, 14, 14], strides = [1, 1, 1]} : vector<3x16x14xf32> to vector<3x14x14xf32>
      %134 = arith.addf %132, %133 : vector<3x14x14xf32>
      %135 = vector.extract_strided_slice %131 {offsets = [0, 2, 0], sizes = [3, 14, 14], strides = [1, 1, 1]} : vector<3x16x14xf32> to vector<3x14x14xf32>
      %136 = arith.addf %134, %135 : vector<3x14x14xf32>
      %cst_32 = arith.constant 0.111111112 : f32
      %137 = vector.broadcast %cst_32 : f32 to vector<3x14x14xf32>
      %138 = arith.mulf %136, %137 : vector<3x14x14xf32>
      %139 = arith.mulf %6, %7 : vector<3x16x16xf32>
      %140 = vector.extract_strided_slice %139 {offsets = [0, 0, 0], sizes = [3, 16, 14], strides = [1, 1, 1]} : vector<3x16x16xf32> to vector<3x16x14xf32>
      %141 = vector.extract_strided_slice %139 {offsets = [0, 0, 1], sizes = [3, 16, 14], strides = [1, 1, 1]} : vector<3x16x16xf32> to vector<3x16x14xf32>
      %142 = arith.addf %140, %141 : vector<3x16x14xf32>
      %143 = vector.extract_strided_slice %139 {offsets = [0, 0, 2], sizes = [3, 16, 14], strides = [1, 1, 1]} : vector<3x16x16xf32> to vector<3x16x14xf32>
      %144 = arith.addf %142, %143 : vector<3x16x14xf32>
      %145 = vector.extract_strided_slice %144 {offsets = [0, 0, 0], sizes = [3, 14, 14], strides = [1, 1, 1]} : vector<3x16x14xf32> to vector<3x14x14xf32>
      %146 = vector.extract_strided_slice %144 {offsets = [0, 1, 0], sizes = [3, 14, 14], strides = [1, 1, 1]} : vector<3x16x14xf32> to vector<3x14x14xf32>
      %147 = arith.addf %145, %146 : vector<3x14x14xf32>
      %148 = vector.extract_strided_slice %144 {offsets = [0, 2, 0], sizes = [3, 14, 14], strides = [1, 1, 1]} : vector<3x16x14xf32> to vector<3x14x14xf32>
      %149 = arith.addf %147, %148 : vector<3x14x14xf32>
      %cst_33 = arith.constant 0.111111112 : f32
      %150 = vector.broadcast %cst_33 : f32 to vector<3x14x14xf32>
      %151 = arith.mulf %149, %150 : vector<3x14x14xf32>
      %152 = vector.extract_strided_slice %8 {offsets = [0, 0, 0], sizes = [1, 16, 14], strides = [1, 1, 1]} : vector<1x16x16xf32> to vector<1x16x14xf32>
      %153 = vector.extract_strided_slice %8 {offsets = [0, 0, 1], sizes = [1, 16, 14], strides = [1, 1, 1]} : vector<1x16x16xf32> to vector<1x16x14xf32>
      %154 = arith.addf %152, %153 : vector<1x16x14xf32>
      %155 = vector.extract_strided_slice %8 {offsets = [0, 0, 2], sizes = [1, 16, 14], strides = [1, 1, 1]} : vector<1x16x16xf32> to vector<1x16x14xf32>
      %156 = arith.addf %154, %155 : vector<1x16x14xf32>
      %157 = vector.extract_strided_slice %156 {offsets = [0, 0, 0], sizes = [1, 14, 14], strides = [1, 1, 1]} : vector<1x16x14xf32> to vector<1x14x14xf32>
      %158 = vector.extract_strided_slice %156 {offsets = [0, 1, 0], sizes = [1, 14, 14], strides = [1, 1, 1]} : vector<1x16x14xf32> to vector<1x14x14xf32>
      %159 = arith.addf %157, %158 : vector<1x14x14xf32>
      %160 = vector.extract_strided_slice %156 {offsets = [0, 2, 0], sizes = [1, 14, 14], strides = [1, 1, 1]} : vector<1x16x14xf32> to vector<1x14x14xf32>
      %161 = arith.addf %159, %160 : vector<1x14x14xf32>
      %cst_34 = arith.constant 0.111111112 : f32
      %162 = vector.broadcast %cst_34 : f32 to vector<1x14x14xf32>
      %163 = arith.mulf %161, %162 : vector<1x14x14xf32>
      %164 = arith.mulf %100, %100 : vector<3x14x14xf32>
      %165 = arith.subf %125, %164 : vector<3x14x14xf32>
      %166 = arith.mulf %112, %112 : vector<3x14x14xf32>
      %167 = arith.subf %138, %166 : vector<3x14x14xf32>
      %168 = arith.mulf %100, %112 : vector<3x14x14xf32>
      %169 = arith.subf %151, %168 : vector<3x14x14xf32>
      %cst_35 = arith.constant 2.000000e+00 : f32
      %170 = vector.broadcast %cst_35 : f32 to vector<3x14x14xf32>
      %171 = arith.mulf %170, %100 : vector<3x14x14xf32>
      %172 = arith.mulf %171, %112 : vector<3x14x14xf32>
      %cst_36 = arith.constant 9.99999974E-5 : f32
      %173 = vector.broadcast %cst_36 : f32 to vector<3x14x14xf32>
      %174 = arith.addf %172, %173 : vector<3x14x14xf32>
      %cst_37 = arith.constant 2.000000e+00 : f32
      %175 = vector.broadcast %cst_37 : f32 to vector<3x14x14xf32>
      %176 = arith.mulf %175, %169 : vector<3x14x14xf32>
      %cst_38 = arith.constant 8.99999984E-4 : f32
      %177 = vector.broadcast %cst_38 : f32 to vector<3x14x14xf32>
      %178 = arith.addf %176, %177 : vector<3x14x14xf32>
      %179 = arith.mulf %174, %178 : vector<3x14x14xf32>
      %180 = arith.mulf %100, %100 : vector<3x14x14xf32>
      %181 = arith.addf %180, %165 : vector<3x14x14xf32>
      %cst_39 = arith.constant 9.99999974E-5 : f32
      %182 = vector.broadcast %cst_39 : f32 to vector<3x14x14xf32>
      %183 = arith.addf %181, %182 : vector<3x14x14xf32>
      %184 = arith.mulf %112, %112 : vector<3x14x14xf32>
      %185 = arith.addf %184, %167 : vector<3x14x14xf32>
      %cst_40 = arith.constant 8.99999984E-4 : f32
      %186 = vector.broadcast %cst_40 : f32 to vector<3x14x14xf32>
      %187 = arith.addf %185, %186 : vector<3x14x14xf32>
      %188 = arith.mulf %183, %187 : vector<3x14x14xf32>
      %189 = tpu.reciprocal %188 {approx = true} : vector<3x14x14xf32> -> vector<3x14x14xf32>
      %190 = arith.mulf %179, %189 : vector<3x14x14xf32>
      %cst_41 = arith.constant 1.000000e+00 : f32
      %191 = vector.broadcast %cst_41 : f32 to vector<3x14x14xf32>
      %192 = arith.subf %191, %190 : vector<3x14x14xf32>
      %cst_42 = arith.constant 5.000000e-01 : f32
      %193 = vector.broadcast %cst_42 : f32 to vector<3x14x14xf32>
      %194 = arith.mulf %192, %193 : vector<3x14x14xf32>
      %cst_43 = arith.constant 0.000000e+00 : f32
      %cst_44 = arith.constant 1.000000e+00 : f32
      %195 = vector.broadcast %cst_43 : f32 to vector<3x14x14xf32>
      %196 = arith.maximumf %195, %194 : vector<3x14x14xf32>
      %197 = vector.broadcast %cst_44 : f32 to vector<3x14x14xf32>
      %198 = arith.minimumf %197, %196 : vector<3x14x14xf32>
      %199 = vector.broadcast %163 : vector<1x14x14xf32> to vector<3x14x14xf32>
      %200 = arith.mulf %199, %198 : vector<3x14x14xf32>
      %c0_45 = arith.constant 0 : index
      %201 = memref.load %arg8[%c0_45] : memref<3xf32, #tpu.memory_space<smem>>
      %202 = vector.shape_cast %200 : vector<3x14x14xf32> to vector<1x3x14x14xf32>
      %cst_46 = arith.constant dense<0.000000e+00> : vector<1xf32>
      %203 = vector.multi_reduction <add>, %202, %cst_46 [1, 2, 3] : vector<1x3x14x14xf32> to vector<1xf32>
      %204 = vector.shape_cast %203 : vector<1xf32> to vector<1x1x1x1xf32>
      %205 = vector.extract %204[0, 0, 0, 0] : f32 from vector<1x1x1x1xf32>
      %206 = arith.addf %201, %205 : f32
      %c0_47 = arith.constant 0 : index
      %207 = memref.load %arg8[%c0_47] : memref<3xf32, #tpu.memory_space<smem>>
      memref.store %206, %arg8[%c0_47] : memref<3xf32, #tpu.memory_space<smem>>
    } else {
    }
    %c1_i32 = arith.constant 1 : i32
    %86 = arith.cmpi eq, %arg1, %c1_i32 : i32
    %87 = arith.extui %86 : i1 to i32
    %c0_i32_28 = arith.constant 0 : i32
    %88 = arith.cmpi ne, %87, %c0_i32_28 : i32
    scf.if %88 {
      %c0_29 = arith.constant 0 : index
      %c0_30 = arith.constant 0 : index
      %c0_31 = arith.constant 0 : index
      %89 = vector.load %arg7[%c0_29, %c0_30, %c0_31] : memref<3x16x16xf32, #tpu.memory_space<vmem>>, vector<3x16x16xf32>
      %cst_32 = arith.constant 1.000000e+04 : f32
      %90 = vector.broadcast %cst_32 : f32 to vector<3x16x16xf32>
      %91 = arith.cmpf olt, %89, %90 : vector<3x16x16xf32>
      %cst_33 = arith.constant 0.000000e+00 : f32
      %92 = vector.broadcast %cst_33 : f32 to vector<3x16x16xf32>
      %93 = arith.select %91, %89, %92 : vector<3x16x16xi1>, vector<3x16x16xf32>
      %94 = vector.shape_cast %93 : vector<3x16x16xf32> to vector<1x3x16x16xf32>
      %cst_34 = arith.constant dense<0.000000e+00> : vector<1xf32>
      %95 = vector.multi_reduction <add>, %94, %cst_34 [1, 2, 3] : vector<1x3x16x16xf32> to vector<1xf32>
      %96 = vector.shape_cast %95 : vector<1xf32> to vector<1x1x1x1xf32>
      %97 = vector.extract %96[0, 0, 0, 0] : f32 from vector<1x1x1x1xf32>
      %98 = tpu.iota {dimensions = array<i32: 1>} : vector<8x128xi32>
      %99 = tpu.iota {dimensions = array<i32: 0>} : vector<8x128xi32>
      %c0_i32_35 = arith.constant 0 : i32
      %100 = vector.broadcast %c0_i32_35 : i32 to vector<8x128xi32>
      %101 = arith.cmpi eq, %99, %100 : vector<8x128xi32>
      %c0_i32_36 = arith.constant 0 : i32
      %102 = vector.broadcast %c0_i32_36 : i32 to vector<8x128xi32>
      %103 = arith.cmpi eq, %98, %102 : vector<8x128xi32>
      %104 = arith.andi %101, %103 : vector<8x128xi1>
      %cst_37 = arith.constant 0.000000e+00 : f32
      %105 = vector.broadcast %97 : f32 to vector<8x128xf32>
      %106 = vector.broadcast %cst_37 : f32 to vector<8x128xf32>
      %107 = arith.select %104, %105, %106 : vector<8x128xi1>, vector<8x128xf32>
      %c1_i32_38 = arith.constant 1 : i32
      %108 = vector.broadcast %c1_i32_38 : i32 to vector<8x128xi32>
      %109 = arith.cmpi eq, %98, %108 : vector<8x128xi32>
      %110 = arith.andi %101, %109 : vector<8x128xi1>
      %c0_39 = arith.constant 0 : index
      %111 = memref.load %arg8[%c0_39] : memref<3xf32, #tpu.memory_space<smem>>
      %112 = vector.broadcast %111 : f32 to vector<8x128xf32>
      %113 = arith.select %110, %112, %107 : vector<8x128xi1>, vector<8x128xf32>
      %c2_i32_40 = arith.constant 2 : i32
      %114 = vector.broadcast %c2_i32_40 : i32 to vector<8x128xi32>
      %115 = arith.cmpi eq, %98, %114 : vector<8x128xi32>
      %116 = arith.andi %101, %115 : vector<8x128xi1>
      %c1 = arith.constant 1 : index
      %117 = memref.load %arg8[%c1] : memref<3xf32, #tpu.memory_space<smem>>
      %118 = vector.broadcast %117 : f32 to vector<8x128xf32>
      %119 = arith.select %116, %118, %113 : vector<8x128xi1>, vector<8x128xf32>
      %c3_i32 = arith.constant 3 : i32
      %120 = vector.broadcast %c3_i32 : i32 to vector<8x128xi32>
      %121 = arith.cmpi eq, %98, %120 : vector<8x128xi32>
      %122 = arith.andi %101, %121 : vector<8x128xi1>
      %c2 = arith.constant 2 : index
      %123 = memref.load %arg8[%c2] : memref<3xf32, #tpu.memory_space<smem>>
      %124 = vector.broadcast %123 : f32 to vector<8x128xf32>
      %125 = arith.select %122, %124, %119 : vector<8x128xi1>, vector<8x128xf32>
      %c0_41 = arith.constant 0 : index
      %c0_42 = arith.constant 0 : index
      %c0_43 = arith.constant 0 : index
      %126 = vector.load %arg6[%c0_41, %c0_42, %c0_43] : memref<1x8x128xf32, #tpu.memory_space<vmem>>, vector<1x8x128xf32>
      %127 = vector.shape_cast %126 : vector<1x8x128xf32> to vector<8x128xf32>
      %128 = vector.shape_cast %125 : vector<8x128xf32> to vector<1x8x128xf32>
      tpu.vector_store %arg6[%c0_41, %c0_42, %c0_43], %128 {strides = array<i32>} : memref<1x8x128xf32, #tpu.memory_space<vmem>>, vector<1x8x128xf32>,
    } else {
    }
    return
  }
  func.func @transform_0(%arg0: i32, %arg1: i32) -> (i32, i32, i32, i32) {
    %c0_i32 = arith.constant 0 : i32
    %c0_i32_0 = arith.constant 0 : i32
    %c0_i32_1 = arith.constant 0 : i32
    %c0_i32_2 = arith.constant 0 : i32
    return %arg0, %c0_i32, %c0_i32_0, %c0_i32_1 : i32, i32, i32, i32
  }
  func.func @transform_1(%arg0: i32, %arg1: i32) -> (i32, i32, i32, i32) {
    %c2_i32 = arith.constant 2 : i32
    %0 = arith.muli %arg1, %c2_i32 : i32
    %1 = arith.addi %0, %arg0 : i32
    %c0_i32 = arith.constant 0 : i32
    %c0_i32_0 = arith.constant 0 : i32
    %c0_i32_1 = arith.constant 0 : i32
    %c0_i32_2 = arith.constant 0 : i32
    return %1, %c0_i32, %c0_i32_0, %c0_i32_1 : i32, i32, i32, i32
  }
  func.func @transform_2(%arg0: i32, %arg1: i32) -> (i32, i32, i32, i32) {
    %c2_i32 = arith.constant 2 : i32
    %0 = arith.muli %arg1, %c2_i32 : i32
    %1 = arith.addi %0, %arg0 : i32
    %c0_i32 = arith.constant 0 : i32
    %c0_i32_0 = arith.constant 0 : i32
    %c0_i32_1 = arith.constant 0 : i32
    %c0_i32_2 = arith.constant 0 : i32
    return %1, %c0_i32, %c0_i32_0, %c0_i32_1 : i32, i32, i32, i32
  }
  func.func @transform_3(%arg0: i32, %arg1: i32) -> (i32, i32, i32, i32) {
    %c0_i32 = arith.constant 0 : i32
    %c0_i32_0 = arith.constant 0 : i32
    %c0_i32_1 = arith.constant 0 : i32
    %c0_i32_2 = arith.constant 0 : i32
    return %arg0, %c0_i32, %c0_i32_0, %c0_i32_1 : i32, i32, i32, i32
  }
  func.func @transform_4(%arg0: i32, %arg1: i32) -> (i32, i32, i32) {
    %c0_i32 = arith.constant 0 : i32
    %c0_i32_0 = arith.constant 0 : i32
    %c0_i32_1 = arith.constant 0 : i32
    return %arg0, %c0_i32, %c0_i32_0 : i32, i32, i32
  }
}

</mosaic_0001>

<llo_original>
// kernel: custom-call.31
$region0: #{custom-call.31}
  %s0 = inlined_call_operand.vmem [shape: f32[2,3,3], index: 0, kind: input, shape index: {}]
  %s1 = inlined_call_operand.vmem [shape: f32[2,3,3], index: 1, kind: output, shape index: {0}]
  %s2 = inlined_call_operand.hbm [shape: s32[2,3], index: 2, kind: output, shape index: {1}]
  %s3 = inlined_call_operand.vmem [shape: s32[2,3], index: 3, kind: output, shape index: {2}]
  %4 = xla_tuple %s1, %s2, %s3
  $region1: #{custom-call.31} parent=0
    #allocation0 [shape = 'u8[4096]{0}', space=vmem, size = 0x1000, scoped, tag = 'operand span for operand 0']
    #allocation1 [shape = 'u8[4096]{0}', space=vmem, size = 0x1000, scoped, tag = 'packed  for operand 0']
    #allocation2 [shape = 'u8[4096]{0}', space=vmem, size = 0x1000, scoped, tag = 'operand span for operand 1']
    #allocation3 [shape = 'u8[4096]{0}', space=vmem, size = 0x1000, scoped, tag = 'packed  for operand 1']
    #allocation4 [shape = 'u8[4096]{0}', space=vmem, size = 0x1000, scoped, tag = 'operand span for operand 2']
    #allocation5 [shape = 'u8[2048]{0}', space=vmem, size = 0x800, scoped, tag = 'packed  for operand 2']
    #allocation6 [shape = 's32[2]{0}', space=sflag, size = 0x8, scoped, tag = 'scoped memory for custom-call.31']
    #allocation7 [shape = 'u8[4096]{0}', space=vmem, size = 0x1000, scoped, tag = 'operand span for operand 3']
    #allocation8 [shape = 'u8[2048]{0}', space=vmem, size = 0x800, scoped, tag = 'packed  for operand 3']
    %5 = vsyncpa [#allocation6], 0
    %s6 = scalar_lea.sflag [#allocation6], 1
    %7 = vsyncpa %s6, 0
    loop: start=0, step=1, limit=4
    $region2: #{custom-call.31} parent=1 // loop_pre_header
      _
    $region3: #{custom-call.31} parent=1 // loop_header
      %s9 = sphi 0, %s13
      %p10 = scmp.ge.s32.totalorder %s9, 4
      %s21 = sphi 0, %s23
      %s24 = sphi 0, %s21
      %s25 = sphi 0, %s24
      %s41 = sphi 0, %s25
      %s49 = sphi 0, %s51
      %s52 = sphi 0, %s49
      %s53 = sphi 0, %s52
      %s69 = sphi 0, %s53
    $region4: #{custom-call.31} parent=1 // loop_header_branch
      %12 = sbr.rel (%p10) target = $region8
    $region5: #{custom-call.31} parent=1 // loop_body
      %s14 = ssub.s32 %s9, 1
      %s15 = ssub.s32 %s9, 2
      %s16 = sadd.s32 %s9, 1
      %s17 = sshrl.u32 %s9, 3
      %s18 = sshrl.u32 %s16, 3
      %s19 = ssub.s32 %s17, %s18
      %p20 = scmp.eq.s32.totalorder %s19, 0
      %s22 = sadd.s32 %s21, 1
      %s23 = scalar_select %p20, %s21, %s22
      %p26 = pneg %p20
      %p27 = scmp.eq.s32.totalorder %s9, 1
      %p28 = por %p26, %p27
      %p29 = scmp.ne.s32.totalorder %s21, %s24
      %p30 = scmp.eq.s32.totalorder %s9, 0
      %p31 = por %p29, %p30
      %p32 = scmp.ne.s32.totalorder %s21, %s24
      %p33 = scmp.eq.s32.totalorder %s14, 1
      %p34 = por %p32, %p33
      %p35 = scmp.ne.s32.totalorder %s24, %s25
      %p36 = scmp.eq.s32.totalorder %s14, 0
      %p37 = por %p35, %p36
      %p38 = scmp.ne.s32.totalorder %s24, %s25
      %p39 = scmp.eq.s32.totalorder %s15, 1
      %p40 = por %p38, %p39
      %p42 = scmp.ne.s32.totalorder %s25, %s41
      %p43 = scmp.eq.s32.totalorder %s15, 0
      %p44 = por %p42, %p43
      %s45 = sshrl.u32 %s9, 3
      %s46 = sshrl.u32 %s16, 3
      %s47 = ssub.s32 %s45, %s46
      %p48 = scmp.eq.s32.totalorder %s47, 0
      %s50 = sadd.s32 %s49, 1
      %s51 = scalar_select %p48, %s49, %s50
      %p54 = pneg %p48
      %p55 = scmp.eq.s32.totalorder %s9, 1
      %p56 = por %p54, %p55
      %p57 = scmp.ne.s32.totalorder %s49, %s52
      %p58 = scmp.eq.s32.totalorder %s9, 0
      %p59 = por %p57, %p58
      %p60 = scmp.ne.s32.totalorder %s49, %s52
      %p61 = scmp.eq.s32.totalorder %s14, 1
      %p62 = por %p60, %p61
      %p63 = scmp.ne.s32.totalorder %s52, %s53
      %p64 = scmp.eq.s32.totalorder %s14, 0
      %p65 = por %p63, %p64
      %p66 = scmp.ne.s32.totalorder %s52, %s53
      %p67 = scmp.eq.s32.totalorder %s15, 1
      %p68 = por %p66, %p67
      %p70 = scmp.ne.s32.totalorder %s53, %s69
      %p71 = scmp.eq.s32.totalorder %s15, 0
      %p72 = por %p70, %p71
      %p73 = scmp.le.s32.totalorder 1, %s9
      %p74 = scmp.lt.s32.totalorder %s9, 3
      %p75 = pnand %p73, %p74
      %p76 = pneg %p75
      // Predicated region
      $region9: #{custom-call.31} parent=5 // pred_check
        _
      $region10: #{custom-call.31} parent=5 // pred_check_branch
        %78 = sbr.rel (%p75) target = $region12
      $region11: #{custom-call.31} parent=5 // pred_region
        %s79 = ssub.s32 %s9, 1
      $region12: #{custom-call.31} parent=5 // pred_fallthru
        _
      %p80 = scmp.lt.s32.totalorder %s9, 2
      // Predicated region
      $region13: #{custom-call.31} parent=5 // pred_check
        %p81 = pneg %p80
      $region14: #{custom-call.31} parent=5 // pred_check_branch
        %83 = sbr.rel (%p81) target = $region16
      $region15: #{custom-call.31} parent=5 // pred_region
        %s84 = sand.u32 %s9, 1
        %s85 = sand.u32 %s9, 1
        %s86 = smul.addr %s85, 4
        %s87 = scalar_lea.vmem [#allocation1], %s86
        %s88 = smul.addr %s9, 4
        %s89 = scalar_lea.vmem %s0, %s88
        // Predicated region
        $region17: #{custom-call.31} parent=15 // pred_check
          _
        $region18: #{custom-call.31} parent=15 // pred_check_branch
          %91 = sbr.rel (0) target = $region20
        $region19: #{custom-call.31} parent=15 // pred_region
          // Predicated region
          $region21: #{custom-call.31} parent=19 // pred_check
            _
          $region22: #{custom-call.31} parent=19 // pred_check_branch
            %93 = sbr.rel target = $region24
          $region23: #{custom-call.31} parent=19 // pred_region
            // Predicated region
            $region36: #{custom-call.31} parent=23 // pred_check
              _
            $region37: #{custom-call.31} parent=23 // pred_check_branch
              %108 = sbr.rel (0) target = $region39
            $region38: #{custom-call.31} parent=23 // pred_region
              loop: start=0, step=1, limit=1
              $region40: #{custom-call.31} parent=38 // loop_pre_header
                _
              $region41: #{custom-call.31} parent=38 // loop_header
                %s111 = sphi 0, %s115
                %p112 = scmp.ge.s32.totalorder %s111, 1
                %s116 = sphi %s89, %s89
                %s117 = sphi %s87, %s87
              $region42: #{custom-call.31} parent=38 // loop_header_branch
                %114 = sbr.rel (%p112) target = $region46
              $region43: #{custom-call.31} parent=38 // loop_body
                %v118 = vld [vmem:[%s116] sm:$0xf]
                %119 = vst [vmem:[%s117] sm:$0xf] %v118
              $region44: #{custom-call.31} parent=38 // loop_footer
                %s115 = sadd.s32 1, %s111
              $region45: #{custom-call.31} parent=38 // loop_footer_branch
                %110 = sbr.rel target = $region41
              $region46: #{custom-call.31} parent=38 // loop_exit
                _
            $region39: #{custom-call.31} parent=23 // pred_fallthru
              _
          $region24: #{custom-call.31} parent=19 // pred_fallthru
            _
          // Predicated region
          $region25: #{custom-call.31} parent=19 // pred_check
            _
          $region26: #{custom-call.31} parent=19 // pred_check_branch
            %95 = sbr.rel (0) target = $region28
          $region27: #{custom-call.31} parent=19 // pred_region
            loop: start=0, step=1, limit=1
            $region29: #{custom-call.31} parent=27 // loop_pre_header
              _
            $region30: #{custom-call.31} parent=27 // loop_header
              %s98 = sphi 0, %s102
              %p99 = scmp.ge.s32.totalorder %s98, 1
              %s103 = sphi %s89, %s89
              %s104 = sphi %s87, %s87
            $region31: #{custom-call.31} parent=27 // loop_header_branch
              %101 = sbr.rel (%p99) target = $region35
            $region32: #{custom-call.31} parent=27 // loop_body
              %v105 = vld [vmem:[%s103] sm:$0xf]
              %106 = vst [vmem:[%s104] sm:$0xf] %v105
            $region33: #{custom-call.31} parent=27 // loop_footer
              %s102 = sadd.s32 1, %s98
            $region34: #{custom-call.31} parent=27 // loop_footer_branch
              %97 = sbr.rel target = $region30
            $region35: #{custom-call.31} parent=27 // loop_exit
              _
          $region28: #{custom-call.31} parent=19 // pred_fallthru
            _
        $region20: #{custom-call.31} parent=15 // pred_fallthru
          _
        %120 = vnop
      $region16: #{custom-call.31} parent=5 // pred_fallthru
        _
      %p121 = scmp.le.s32.totalorder 1, %s9
      %p122 = scmp.lt.s32.totalorder %s9, 3
      %p123 = pnand %p121, %p122
      %p124 = pneg %p123
      // Predicated region
      $region47: #{custom-call.31} parent=5 // pred_check
        _
      $region48: #{custom-call.31} parent=5 // pred_check_branch
        %126 = sbr.rel (%p123) target = $region50
      $region49: #{custom-call.31} parent=5 // pred_region
        #allocation9 [shape = 's32[3,128]{1,0}', space=vmem, size = 0x1000, scoped, tag = 'scratch for permutations']
        %s127 = ssub.s32 %s9, 1
        %s128 = sand.u32 %s14, 1
        %s129 = sand.u32 %s14, 1
        %s130 = smul.addr %s129, 4
        %s131 = scalar_lea.vmem [#allocation1], %s130
        %s132 = sand.u32 %s14, 1
        %s133 = sand.u32 %s14, 1
        %s134 = smul.addr %s133, 4
        %s135 = scalar_lea.vmem [#allocation1], %s134
        %s136 = sand.u32 %s14, 1
        %s137 = sand.u32 %s14, 1
        %s138 = smul.addr %s137, 4
        %s139 = scalar_lea.vmem [#allocation3], %s138
        %p140 = pneg %p37
        %p141 = pneg %p34
        %s142 = sand.u32 %s24, 1
        %s143 = scalar_lea.sflag [#allocation6], %s142
        %s144 = sand.u32 %s24, 1
        %s145 = smul.addr %s144, 2
        %s146 = scalar_lea.vmem [#allocation5], %s145
        %p147 = pneg %p65
        %p148 = pneg %p62
        %s149 = sand.u32 %s52, 1
        %s150 = sand.u32 %s52, 1
        %s151 = smul.addr %s150, 2
        %s152 = scalar_lea.vmem [#allocation8], %s151
        %s154 = sshllo.u32 0, 4
        %v155 = vld [vmem:[%s135] sm:%s154]
        %156 = vst [vmem:[#allocation0] sm:%s154] %v155
        %s157 = sshrl.u32 %s14, 3
        %s158 = sshrl.u32 %s14, 3
        %v159 = vld [vmem:[#allocation0] sm:$0xff]
        %160 = vst [vmem:[#allocation2] sm:$0xff] %v159
        %s161 = sand.u32 %s14, 7
        %s162 = scalar_lea.vmem [#allocation4], %s161
        %s163 = sand.u32 %s14, 7
        %s164 = scalar_lea.vmem [#allocation7], %s163
        %165 = vst [vmem:[%s162] sm:$0x1] 0
        %v166 = vlaneseq
        %v167 = vshrl.u32 %v166, 7
        %v168 = vmov %v167
        %170 = vst [vmem:[#allocation9] sm:$0xff] %v168
        loop: start=0, step=1, limit=3
        $region52: #{custom-call.31} parent=49 // loop_pre_header
          _
        $region53: #{custom-call.31} parent=49 // loop_header
          %s172 = sphi 0, %s176
          %p173 = scmp.ge.s32.totalorder %s172, 3
        $region54: #{custom-call.31} parent=49 // loop_header_branch
          %175 = sbr.rel (%p173) target = $region58
        $region55: #{custom-call.31} parent=49 // loop_body
          %v177 = vstv %s172
          %v178 = vlaneseq
          %v179 = vshrl.u32 %v178, 7
          %v180 = vmov %v179
          %v181 = vld [vmem:[#allocation2] sm:$0xff]
          %v182 = vand.u32 2147483647, %v181
          %v184 = vstv %s172
          %vm185 = vcmp.ge.s32.totalorder %v180, %v184
          %vm186 = vcmp.lt.s32.totalorder %v180, 3
          %vm187 = vmand %vm185, %vm186
          %vm188 = vcmp.lt.f32.partialorder -inf, %v182
          %vm189 = vmand %vm187, %vm188
          %v190 = vsel %vm189, %v180, %v177
          %v191 = vsel %vm189, %v182, -inf
          %v192 = vrot.slane %v191, 1
          %v193 = vrot.slane %v190, 1
          %vm194 = vcmp.ge.f32.partialorder %v192, %v191
          %v195 = vsel %vm194, %v192, %v191
          %v196 = vsel %vm194, %v193, %v190
          %v197 = vrot.slane %v192, 1
          %v198 = vrot.slane %v193, 1
          %vm199 = vcmp.ge.f32.partialorder %v197, %v195
          %v200 = vsel %vm199, %v197, %v195
          %v201 = vsel %vm199, %v198, %v196
          %v202 = vrot.slane %v197, 1
          %v203 = vrot.slane %v198, 1
          %vm204 = vcmp.ge.f32.partialorder %v202, %v200
          %v205 = vsel %vm204, %v202, %v200
          %v206 = vsel %vm204, %v203, %v201
          %v207 = vrot.slane %v202, 1
          %v208 = vrot.slane %v203, 1
          %vm209 = vcmp.ge.f32.partialorder %v207, %v205
          %v210 = vsel %vm209, %v207, %v205
          %v211 = vsel %vm209, %v208, %v206
          %v212 = vrot.slane %v207, 1
          %v213 = vrot.slane %v208, 1
          %vm214 = vcmp.ge.f32.partialorder %v212, %v210
          %v215 = vsel %vm214, %v212, %v210
          %v216 = vsel %vm214, %v213, %v211
          %v217 = vrot.slane %v212, 1
          %v218 = vrot.slane %v213, 1
          %vm219 = vcmp.ge.f32.partialorder %v217, %v215
          %v220 = vsel %vm219, %v217, %v215
          %v221 = vsel %vm219, %v218, %v216
          %v222 = vrot.slane %v217, 1
          %v223 = vrot.slane %v218, 1
          %vm224 = vcmp.ge.f32.partialorder %v222, %v220
          %v225 = vsel %vm224, %v222, %v220
          %v226 = vsel %vm224, %v223, %v221
          %s227 = ssub.s32 128, %s172
          %228 = vrot.lane.b32.xlu0 %v226, %s227
          %v229 = vpop.permute.xlu0 %228
          %s230 = vtos %v229
          %v231 = vstv %s172
          %v232 = vlaneseq
          %v233 = vand.u32 %v232, 127
          %vm234 = vcmp.eq.s32.totalorder %v233, %v231
          %v235 = vstv %s230
          %v236 = vld [vmem:[%s162] ss:$0 sm:$0xff]
          %v237 = vsel %vm234, %v235, %v236
          %238 = vst [vmem:[%s162] sm:$0x1] %v237
          %s239 = scalar_lea.vmem [#allocation2], %s172
          %s240 = scalar_lea.vmem [#allocation2], %s230
          %v241 = vld [vmem:[%s239] ss:$0 sm:$0xff]
          %v242 = vld [vmem:[%s240] ss:$0 sm:$0xff]
          %243 = vst [vmem:[%s240] sm:$0x1] %v241
          %244 = vst [vmem:[%s239] sm:$0x1] %v242
          %s245 = scalar_lea.vmem [#allocation9], %s172
          %s246 = scalar_lea.vmem [#allocation9], %s230
          %v247 = vld [vmem:[%s245] ss:$0 sm:$0xff]
          %v248 = vld [vmem:[%s246] ss:$0 sm:$0xff]
          %249 = vst [vmem:[%s246] sm:$0x1] %v247
          %250 = vst [vmem:[%s245] sm:$0x1] %v248
          %vm251 = vcmp.ne.f32.partialorder %v242, 0.0
          %vm252 = vmand %vm234, %vm251
          %v253 = vsel %vm252, %v242, 1.0
          %v254 = vlaneseq
          %v255 = vand.u32 %v254, 127
          %v256 = vstv %s172
          %vm257 = vcmp.gt.s32.totalorder %v255, %v256
          %v258 = vsel %vm257, %v242, 0.0
          %v259 = vlaneseq
          %v260 = vshrl.u32 %v259, 7
          %v261 = vmov %v260
          %v262 = vld [vmem:[#allocation2] sm:$0xff]
          %v264 = vstv %s172
          %vm265 = vcmp.gt.s32.totalorder %v261, %v264
          %v266 = vsel %vm265, %v253, 1.0
          %v267 = vrcp.pop %v266
          %v268 = vmul.f32 %v262, %v267
          %vm269 = vmand %vm265, %vm234
          %v270 = vsel %vm269, %v268, 0.0
          %271 = vadd.xlane.f32.xlu0 %v270
          %v272 = vpop.xlane.xlu0 %271
          %v273 = vmul.f32 %v272, %v258
          %v274 = vsub.f32 %v268, %v273
          %275 = vst [vmem:[#allocation2] sm:$0xff] %v274
        $region56: #{custom-call.31} parent=49 // loop_footer
          %s176 = sadd.s32 1, %s172
        $region57: #{custom-call.31} parent=49 // loop_footer_branch
          %171 = sbr.rel target = $region53
        $region58: #{custom-call.31} parent=49 // loop_exit
          _
        %v276 = vld [vmem:[#allocation9] sm:$0xff]
        %s277 = scalar_lea.vmem [#allocation9], 8
        %s278 = scalar_lea.vmem [#allocation9], 16
        %s279 = scalar_lea.vmem [#allocation9], 24
        %s280 = scalar_lea.vmem [#allocation9], 32
        %s281 = scalar_lea.vmem [#allocation9], 40
        %s282 = scalar_lea.vmem [#allocation9], 48
        %s283 = scalar_lea.vmem [#allocation9], 56
        %s284 = scalar_lea.vmem [#allocation9], 64
        %s285 = scalar_lea.vmem [#allocation9], 72
        %s286 = scalar_lea.vmem [#allocation9], 80
        %s287 = scalar_lea.vmem [#allocation9], 88
        %s288 = scalar_lea.vmem [#allocation9], 96
        %s289 = scalar_lea.vmem [#allocation9], 104
        %s290 = scalar_lea.vmem [#allocation9], 112
        %s291 = scalar_lea.vmem [#allocation9], 120
        %292 = vxpose.xlu0.b32.start [1/16] %v276, 128
        %293 = vxpose.xlu0.b32.cont [2/16] 0, 128
        %294 = vxpose.xlu0.b32.cont [3/16] 0, 128
        %295 = vxpose.xlu0.b32.cont [4/16] 0, 128
        %296 = vxpose.xlu0.b32.cont [5/16] 0, 128
        %297 = vxpose.xlu0.b32.cont [6/16] 0, 128
        %298 = vxpose.xlu0.b32.cont [7/16] 0, 128
        %299 = vxpose.xlu0.b32.cont [8/16] 0, 128
        %300 = vxpose.xlu0.b32.cont [9/16] 0, 128
        %301 = vxpose.xlu0.b32.cont [10/16] 0, 128
        %302 = vxpose.xlu0.b32.cont [11/16] 0, 128
        %303 = vxpose.xlu0.b32.cont [12/16] 0, 128
        %304 = vxpose.xlu0.b32.cont [13/16] 0, 128
        %305 = vxpose.xlu0.b32.cont [14/16] 0, 128
        %306 = vxpose.xlu0.b32.cont [15/16] 0, 128
        %307 = vxpose.xlu0.b32.end [16/16] 0, 128
        %v308 = vpop.trf.xlu0
        %v309 = vpop.trf.xlu0
        %v310 = vpop.trf.xlu0
        %v311 = vpop.trf.xlu0
        %v312 = vpop.trf.xlu0
        %v313 = vpop.trf.xlu0
        %v314 = vpop.trf.xlu0
        %v315 = vpop.trf.xlu0
        %v316 = vpop.trf.xlu0
        %v317 = vpop.trf.xlu0
        %v318 = vpop.trf.xlu0
        %v319 = vpop.trf.xlu0
        %v320 = vpop.trf.xlu0
        %v321 = vpop.trf.xlu0
        %v322 = vpop.trf.xlu0
        %v323 = vpop.trf.xlu0
        %324 = vst [vmem:[%s164] sm:$0x1] %v308
        %s326 = sshllo.u32 0, 4
        %v328 = vld [vmem:[#allocation2] sm:%s326]
        %s329 = sshllo.u32 0, 4
        %330 = vst [vmem:[%s139] sm:%s329] %v328
        %s332 = sshllo.u32 0, 2
        %v334 = vld [vmem:[#allocation4] sm:%s332]
        %s335 = sshllo.u32 0, 2
        %336 = vst [vmem:[%s146] sm:%s335] %v334
        %s338 = sshllo.u32 0, 2
        %v340 = vld [vmem:[#allocation7] sm:%s338]
        %s341 = sshllo.u32 0, 2
        %342 = vst [vmem:[%s152] sm:%s341] %v340
        %s343 = sand.u32 %s14, 1
        %s344 = sand.u32 %s14, 1
        %s345 = smul.addr %s344, 4
        %s346 = scalar_lea.vmem [#allocation3], %s345
        %s347 = sand.u32 %s24, 1
        %s348 = scalar_lea.sflag [#allocation6], %s347
        %s349 = sand.u32 %s24, 1
        %s350 = smul.addr %s349, 2
        %s351 = scalar_lea.vmem [#allocation5], %s350
        %s352 = sand.u32 %s52, 1
        %s353 = sand.u32 %s52, 1
        %s354 = smul.addr %s353, 2
        %s355 = scalar_lea.vmem [#allocation8], %s354
        %s356 = smul.addr %s14, 4
        %s357 = scalar_lea.vmem %s1, %s356
        // Predicated region
        $region59: #{custom-call.31} parent=49 // pred_check
          _
        $region60: #{custom-call.31} parent=49 // pred_check_branch
          %359 = sbr.rel (0) target = $region62
        $region61: #{custom-call.31} parent=49 // pred_region
          // Predicated region
          $region63: #{custom-call.31} parent=61 // pred_check
            _
          $region64: #{custom-call.31} parent=61 // pred_check_branch
            %361 = sbr.rel target = $region66
          $region65: #{custom-call.31} parent=61 // pred_region
            // Predicated region
            $region78: #{custom-call.31} parent=65 // pred_check
              _
            $region79: #{custom-call.31} parent=65 // pred_check_branch
              %376 = sbr.rel (0) target = $region81
            $region80: #{custom-call.31} parent=65 // pred_region
              loop: start=0, step=1, limit=1
              $region82: #{custom-call.31} parent=80 // loop_pre_header
                _
              $region83: #{custom-call.31} parent=80 // loop_header
                %s379 = sphi 0, %s383
                %p380 = scmp.ge.s32.totalorder %s379, 1
                %s384 = sphi %s346, %s346
                %s385 = sphi %s357, %s357
              $region84: #{custom-call.31} parent=80 // loop_header_branch
                %382 = sbr.rel (%p380) target = $region88
              $region85: #{custom-call.31} parent=80 // loop_body
                %v386 = vld [vmem:[%s384] sm:$0xf]
                %387 = vst [vmem:[%s385] sm:$0xf] %v386
              $region86: #{custom-call.31} parent=80 // loop_footer
                %s383 = sadd.s32 1, %s379
              $region87: #{custom-call.31} parent=80 // loop_footer_branch
                %378 = sbr.rel target = $region83
              $region88: #{custom-call.31} parent=80 // loop_exit
                _
            $region81: #{custom-call.31} parent=65 // pred_fallthru
              _
          $region66: #{custom-call.31} parent=61 // pred_fallthru
            _
          // Predicated region
          $region67: #{custom-call.31} parent=61 // pred_check
            _
          $region68: #{custom-call.31} parent=61 // pred_check_branch
            %363 = sbr.rel (0) target = $region70
          $region69: #{custom-call.31} parent=61 // pred_region
            loop: start=0, step=1, limit=1
            $region71: #{custom-call.31} parent=69 // loop_pre_header
              _
            $region72: #{custom-call.31} parent=69 // loop_header
              %s366 = sphi 0, %s370
              %p367 = scmp.ge.s32.totalorder %s366, 1
              %s371 = sphi %s346, %s346
              %s372 = sphi %s357, %s357
            $region73: #{custom-call.31} parent=69 // loop_header_branch
              %369 = sbr.rel (%p367) target = $region77
            $region74: #{custom-call.31} parent=69 // loop_body
              %v373 = vld [vmem:[%s371] sm:$0xf]
              %374 = vst [vmem:[%s372] sm:$0xf] %v373
            $region75: #{custom-call.31} parent=69 // loop_footer
              %s370 = sadd.s32 1, %s366
            $region76: #{custom-call.31} parent=69 // loop_footer_branch
              %365 = sbr.rel target = $region72
            $region77: #{custom-call.31} parent=69 // loop_exit
              _
          $region70: #{custom-call.31} parent=61 // pred_fallthru
            _
        $region62: #{custom-call.31} parent=49 // pred_fallthru
          _
        %388 = vnop
        // Predicated region
        $region89: #{custom-call.31} parent=49 // pred_check
          %p389 = pneg %p34
        $region90: #{custom-call.31} parent=49 // pred_check_branch
          %391 = sbr.rel (%p389) target = $region92
        $region91: #{custom-call.31} parent=49 // pred_region
          %s392 = sshrl.u32 %s14, 3
          %s394 = ssub.s32 32, 32
          %395 = vsyncadd %s348, %s394
          %s396 = smul.addr %s392, 32
          %s397 = scalar_lea.hbm %s2, %s396
          %s399 = sshll.u32 %s351, 4
          %s400 = int_to_ptr.vmem [resolvable:$true] %s399
          %402 = dma.vmem_to_hbm [thread:$0]  %s400, 32, %s397, %s348
        $region92: #{custom-call.31} parent=49 // pred_fallthru
          _
        // Predicated region
        $region93: #{custom-call.31} parent=49 // pred_check
          %p403 = pneg %p62
        $region94: #{custom-call.31} parent=49 // pred_check_branch
          %405 = sbr.rel (%p403) target = $region96
        $region95: #{custom-call.31} parent=49 // pred_region
          %s406 = sshrl.u32 %s14, 3
          %s407 = smul.addr %s406, 2
          %s408 = scalar_lea.vmem %s3, %s407
          // Predicated region
          $region97: #{custom-call.31} parent=95 // pred_check
            _
          $region98: #{custom-call.31} parent=95 // pred_check_branch
            %410 = sbr.rel (0) target = $region100
          $region99: #{custom-call.31} parent=95 // pred_region
            // Predicated region
            $region101: #{custom-call.31} parent=99 // pred_check
              _
            $region102: #{custom-call.31} parent=99 // pred_check_branch
              %412 = sbr.rel target = $region104
            $region103: #{custom-call.31} parent=99 // pred_region
              // Predicated region
              $region116: #{custom-call.31} parent=103 // pred_check
                _
              $region117: #{custom-call.31} parent=103 // pred_check_branch
                %427 = sbr.rel (0) target = $region119
              $region118: #{custom-call.31} parent=103 // pred_region
                loop: start=0, step=1, limit=1
                $region120: #{custom-call.31} parent=118 // loop_pre_header
                  _
                $region121: #{custom-call.31} parent=118 // loop_header
                  %s430 = sphi 0, %s434
                  %p431 = scmp.ge.s32.totalorder %s430, 1
                  %s435 = sphi %s355, %s355
                  %s436 = sphi %s408, %s408
                $region122: #{custom-call.31} parent=118 // loop_header_branch
                  %433 = sbr.rel (%p431) target = $region126
                $region123: #{custom-call.31} parent=118 // loop_body
                  %v437 = vld [vmem:[%s435] sm:$0x3]
                  %438 = vst [vmem:[%s436] sm:$0x3] %v437
                $region124: #{custom-call.31} parent=118 // loop_footer
                  %s434 = sadd.s32 1, %s430
                $region125: #{custom-call.31} parent=118 // loop_footer_branch
                  %429 = sbr.rel target = $region121
                $region126: #{custom-call.31} parent=118 // loop_exit
                  _
              $region119: #{custom-call.31} parent=103 // pred_fallthru
                _
            $region104: #{custom-call.31} parent=99 // pred_fallthru
              _
            // Predicated region
            $region105: #{custom-call.31} parent=99 // pred_check
              _
            $region106: #{custom-call.31} parent=99 // pred_check_branch
              %414 = sbr.rel (0) target = $region108
            $region107: #{custom-call.31} parent=99 // pred_region
              loop: start=0, step=1, limit=1
              $region109: #{custom-call.31} parent=107 // loop_pre_header
                _
              $region110: #{custom-call.31} parent=107 // loop_header
                %s417 = sphi 0, %s421
                %p418 = scmp.ge.s32.totalorder %s417, 1
                %s422 = sphi %s355, %s355
                %s423 = sphi %s408, %s408
              $region111: #{custom-call.31} parent=107 // loop_header_branch
                %420 = sbr.rel (%p418) target = $region115
              $region112: #{custom-call.31} parent=107 // loop_body
                %v424 = vld [vmem:[%s422] sm:$0x3]
                %425 = vst [vmem:[%s423] sm:$0x3] %v424
              $region113: #{custom-call.31} parent=107 // loop_footer
                %s421 = sadd.s32 1, %s417
              $region114: #{custom-call.31} parent=107 // loop_footer_branch
                %416 = sbr.rel target = $region110
              $region115: #{custom-call.31} parent=107 // loop_exit
                _
            $region108: #{custom-call.31} parent=99 // pred_fallthru
              _
          $region100: #{custom-call.31} parent=95 // pred_fallthru
            _
          %439 = vnop
        $region96: #{custom-call.31} parent=49 // pred_fallthru
          _
      $region50: #{custom-call.31} parent=5 // pred_fallthru
        _
      %p440 = scmp.le.s32.totalorder 2, %s9
      // Predicated region
      $region127: #{custom-call.31} parent=5 // pred_check
        %p441 = pneg %p440
      $region128: #{custom-call.31} parent=5 // pred_check_branch
        %443 = sbr.rel (%p441) target = $region130
      $region129: #{custom-call.31} parent=5 // pred_region
        %s444 = ssub.s32 %s9, 2
        %s445 = sand.u32 %s15, 1
        %s446 = sand.u32 %s15, 1
        %s447 = smul.addr %s446, 4
        %s448 = scalar_lea.vmem [#allocation3], %s447
        // Predicated region
        $region131: #{custom-call.31} parent=129 // pred_check
          %p449 = pneg %p40
        $region132: #{custom-call.31} parent=129 // pred_check_branch
          %451 = sbr.rel (%p449) target = $region134
        $region133: #{custom-call.31} parent=129 // pred_region
          %s452 = sand.u32 %s25, 1
          %s453 = scalar_lea.sflag [#allocation6], %s452
          %s454 = sand.u32 %s25, 1
          %s455 = smul.addr %s454, 2
          %s456 = scalar_lea.vmem [#allocation5], %s455
          %457 = dma.done %s453, 32
        $region134: #{custom-call.31} parent=129 // pred_fallthru
          _
        // Predicated region
        $region135: #{custom-call.31} parent=129 // pred_check
          %p458 = pneg %p68
        $region136: #{custom-call.31} parent=129 // pred_check_branch
          %460 = sbr.rel (%p458) target = $region138
        $region137: #{custom-call.31} parent=129 // pred_region
          %s461 = sand.u32 %s53, 1
          %s462 = sand.u32 %s53, 1
          %s463 = smul.addr %s462, 2
          %s464 = scalar_lea.vmem [#allocation8], %s463
        $region138: #{custom-call.31} parent=129 // pred_fallthru
          _
      $region130: #{custom-call.31} parent=5 // pred_fallthru
        _
    $region6: #{custom-call.31} parent=1 // loop_footer
      %s13 = sadd.s32 1, %s9
    $region7: #{custom-call.31} parent=1 // loop_footer_branch
      %8 = sbr.rel target = $region3
    $region8: #{custom-call.31} parent=1 // loop_exit
      _
    %465 = vsyncpa [#allocation6], 1
    %s466 = scalar_lea.sflag [#allocation6], 1
    %467 = vsyncpa %s466, 1

// kernel: custom-call.33
$region0: #{custom-call.33}
  %s0 = inlined_call_operand.vmem [shape: f32[2,1,3,3], index: 0, kind: input, shape index: {}]
  %s1 = inlined_call_operand.vmem [shape: f32[2,1,3,3], index: 1, kind: output, shape index: {}]
  $region1: #{custom-call.33} parent=0
    #allocation0 [shape = 'u8[4096]{0}', space=vmem, size = 0x1000, scoped, tag = 'operand span for operand 0']
    #allocation1 [shape = 'u8[4096]{0}', space=vmem, size = 0x1000, scoped, tag = 'packed  for operand 0']
    #allocation2 [shape = 'u8[4096]{0}', space=vmem, size = 0x1000, scoped, tag = 'operand span for operand 1']
    #allocation3 [shape = 'u8[4096]{0}', space=vmem, size = 0x1000, scoped, tag = 'packed  for operand 1']
    loop: start=0, step=1, limit=4
    $region2: #{custom-call.33} parent=1 // loop_pre_header
      _
    $region3: #{custom-call.33} parent=1 // loop_header
      %s3 = sphi 0, %s7
      %p4 = scmp.ge.s32.totalorder %s3, 4
      %s10 = sphi 0, %s36
      %s11 = sphi 0, %s32
      %s12 = sphi 0, %s28
      %s13 = sphi 0, %s24
      %s14 = sphi 0, %s10
      %s15 = sphi 0, %s11
      %s16 = sphi 0, %s12
      %s17 = sphi 0, %s13
      %s18 = sphi 0, %s14
      %s19 = sphi 0, %s15
      %s20 = sphi 0, %s16
      %s21 = sphi 0, %s17
    $region4: #{custom-call.33} parent=1 // loop_header_branch
      %6 = sbr.rel (%p4) target = $region8
    $region5: #{custom-call.33} parent=1 // loop_body
      %s8 = ssub.s32 %s3, 1
      %s9 = ssub.s32 %s3, 2
      %s22 = sadd.s32 1, %s13
      %p23 = scmp.ge.s32.totalorder %s22, 1
      %s24 = scalar_select %p23, 0, %s22
      %s25 = sadd.s32 1, %s12
      %s26 = scalar_select %p23, %s25, %s12
      %p27 = scmp.ge.s32.totalorder %s26, 1
      %s28 = scalar_select %p27, 0, %s26
      %s29 = sadd.s32 1, %s11
      %s30 = scalar_select %p27, %s29, %s11
      %p31 = scmp.ge.s32.totalorder %s30, 1
      %s32 = scalar_select %p31, 0, %s30
      %s33 = sadd.s32 1, %s10
      %s34 = scalar_select %p31, %s33, %s10
      %p35 = scmp.ge.s32.totalorder %s34, 2
      %s36 = scalar_select %p35, 0, %s34
      %p37 = scmp.le.s32.totalorder 1, %s3
      %p38 = scmp.lt.s32.totalorder %s3, 3
      %p39 = pnand %p37, %p38
      %p40 = pneg %p39
      // Predicated region
      $region9: #{custom-call.33} parent=5 // pred_check
        _
      $region10: #{custom-call.33} parent=5 // pred_check_branch
        %42 = sbr.rel (%p39) target = $region12
      $region11: #{custom-call.33} parent=5 // pred_region
        %s43 = ssub.s32 %s3, 1
      $region12: #{custom-call.33} parent=5 // pred_fallthru
        _
      %p44 = scmp.lt.s32.totalorder %s3, 2
      // Predicated region
      $region13: #{custom-call.33} parent=5 // pred_check
        %p45 = pneg %p44
      $region14: #{custom-call.33} parent=5 // pred_check_branch
        %47 = sbr.rel (%p45) target = $region16
      $region15: #{custom-call.33} parent=5 // pred_region
        %s48 = sand.u32 %s3, 1
        %s49 = sand.u32 %s3, 1
        %s50 = smul.addr %s49, 4
        %s51 = scalar_lea.vmem [#allocation1], %s50
        %s52 = sadd.s32 %s13, %s12
        %s53 = sadd.s32 %s52, %s11
        %s54 = sadd.s32 %s53, %s10
        %s55 = smul.addr %s54, 4
        %s56 = scalar_lea.vmem %s0, %s55
        // Predicated region
        $region17: #{custom-call.33} parent=15 // pred_check
          _
        $region18: #{custom-call.33} parent=15 // pred_check_branch
          %58 = sbr.rel (0) target = $region20
        $region19: #{custom-call.33} parent=15 // pred_region
          // Predicated region
          $region21: #{custom-call.33} parent=19 // pred_check
            _
          $region22: #{custom-call.33} parent=19 // pred_check_branch
            %60 = sbr.rel target = $region24
          $region23: #{custom-call.33} parent=19 // pred_region
            // Predicated region
            $region36: #{custom-call.33} parent=23 // pred_check
              _
            $region37: #{custom-call.33} parent=23 // pred_check_branch
              %75 = sbr.rel (0) target = $region39
            $region38: #{custom-call.33} parent=23 // pred_region
              loop: start=0, step=1, limit=1
              $region40: #{custom-call.33} parent=38 // loop_pre_header
                _
              $region41: #{custom-call.33} parent=38 // loop_header
                %s78 = sphi 0, %s82
                %p79 = scmp.ge.s32.totalorder %s78, 1
                %s83 = sphi %s56, %s56
                %s84 = sphi %s51, %s51
              $region42: #{custom-call.33} parent=38 // loop_header_branch
                %81 = sbr.rel (%p79) target = $region46
              $region43: #{custom-call.33} parent=38 // loop_body
                %v85 = vld [vmem:[%s83] sm:$0xf]
                %86 = vst [vmem:[%s84] sm:$0xf] %v85
              $region44: #{custom-call.33} parent=38 // loop_footer
                %s82 = sadd.s32 1, %s78
              $region45: #{custom-call.33} parent=38 // loop_footer_branch
                %77 = sbr.rel target = $region41
              $region46: #{custom-call.33} parent=38 // loop_exit
                _
            $region39: #{custom-call.33} parent=23 // pred_fallthru
              _
          $region24: #{custom-call.33} parent=19 // pred_fallthru
            _
          // Predicated region
          $region25: #{custom-call.33} parent=19 // pred_check
            _
          $region26: #{custom-call.33} parent=19 // pred_check_branch
            %62 = sbr.rel (0) target = $region28
          $region27: #{custom-call.33} parent=19 // pred_region
            loop: start=0, step=1, limit=1
            $region29: #{custom-call.33} parent=27 // loop_pre_header
              _
            $region30: #{custom-call.33} parent=27 // loop_header
              %s65 = sphi 0, %s69
              %p66 = scmp.ge.s32.totalorder %s65, 1
              %s70 = sphi %s56, %s56
              %s71 = sphi %s51, %s51
            $region31: #{custom-call.33} parent=27 // loop_header_branch
              %68 = sbr.rel (%p66) target = $region35
            $region32: #{custom-call.33} parent=27 // loop_body
              %v72 = vld [vmem:[%s70] sm:$0xf]
              %73 = vst [vmem:[%s71] sm:$0xf] %v72
            $region33: #{custom-call.33} parent=27 // loop_footer
              %s69 = sadd.s32 1, %s65
            $region34: #{custom-call.33} parent=27 // loop_footer_branch
              %64 = sbr.rel target = $region30
            $region35: #{custom-call.33} parent=27 // loop_exit
              _
          $region28: #{custom-call.33} parent=19 // pred_fallthru
            _
        $region20: #{custom-call.33} parent=15 // pred_fallthru
          _
        %87 = vnop
      $region16: #{custom-call.33} parent=5 // pred_fallthru
        _
      %p88 = scmp.le.s32.totalorder 1, %s3
      %p89 = scmp.lt.s32.totalorder %s3, 3
      %p90 = pnand %p88, %p89
      %p91 = pneg %p90
      // Predicated region
      $region47: #{custom-call.33} parent=5 // pred_check
        _
      $region48: #{custom-call.33} parent=5 // pred_check_branch
        %93 = sbr.rel (%p90) target = $region50
      $region49: #{custom-call.33} parent=5 // pred_region
        #allocation4 [shape = 'f32[3,3]{1,0}', space=vmem, size = 0x1000, scoped, tag = 'rescaled input a']
        %s94 = ssub.s32 %s3, 1
        %s95 = sand.u32 %s8, 1
        %s96 = sand.u32 %s8, 1
        %s97 = smul.addr %s96, 4
        %s98 = scalar_lea.vmem [#allocation1], %s97
        %s99 = sand.u32 %s8, 1
        %s100 = sand.u32 %s8, 1
        %s101 = smul.addr %s100, 4
        %s102 = scalar_lea.vmem [#allocation1], %s101
        %s103 = sand.u32 %s8, 1
        %s104 = sand.u32 %s8, 1
        %s105 = smul.addr %s104, 4
        %s106 = scalar_lea.vmem [#allocation3], %s105
        %s108 = sshllo.u32 0, 4
        %v109 = vld [vmem:[%s102] sm:%s108]
        %110 = vst [vmem:[#allocation0] sm:%s108] %v109
        %v111 = vlaneseq
        %v112 = vand.u32 %v111, 127
        %vm113 = vcmp.lt.s32.totalorder %v112, 3
        %v114 = vlaneseq
        %v115 = vshrl.u32 %v114, 7
        %vm117 = vcmp.eq.s32.totalorder %v115, %v112
        %v118 = vld [vmem:[#allocation0] sm:$0xff]
        %v119 = vsel %vm117, %v118, 0.0
        %120 = vadd.xlane.f32.xlu0 %v119
        %v121 = vpop.xlane.xlu0 %120
        %vm122 = vcmp.ge.s32.totalorder %v115, %v112
        %vm123 = vmand %vm122, %vm113
        %v124 = vsel %vm123, %v118, 0.0
        %v125 = vrcp.pop %v121
        %v126 = vmul.f32 %v124, %v125
        %127 = vst [vmem:[#allocation4] sm:$0xff] %v126
        %v128 = vlaneseq
        %v129 = vand.u32 %v128, 127
        %v130 = vlaneseq
        %v131 = vshrl.u32 %v130, 7
        %vm133 = vcmp.eq.s32.totalorder %v129, %v131
        %v134 = vlaneseq
        %v135 = vand.u32 %v134, 127
        %vm136 = vcmp.eq.s32.totalorder %v135, 0
        %v137 = vsel %vm136, 1.0, -1.0
        %v138 = vsel %vm133, %v137, 0.0
        %s139 = scalar_lea.vmem [#allocation4], 1
        %v140 = vld [vmem:[%s139] ss:$0 sm:$0xff]
        %v141 = vxor.u32 %v140, 2147483648
        %v142 = vlaneseq
        %v143 = vand.u32 %v142, 127
        %vm144 = vcmp.eq.s32.totalorder %v143, 1
        %v145 = vmul.f32 %v141, %v138
        %146 = vadd.xlane.f32.xlu0 %v145
        %v147 = vpop.xlane.xlu0 %146
        %v148 = vsel %vm144, %v147, %v138
        %s149 = scalar_lea.vmem [#allocation4], 2
        %v150 = vld [vmem:[%s149] ss:$0 sm:$0xff]
        %v151 = vxor.u32 %v150, 2147483648
        %v152 = vlaneseq
        %v153 = vand.u32 %v152, 127
        %vm154 = vcmp.eq.s32.totalorder %v153, 2
        %v155 = vmul.f32 %v151, %v148
        %156 = vadd.xlane.f32.xlu0 %v155
        %v157 = vpop.xlane.xlu0 %156
        %v158 = vsel %vm154, %v157, %v148
        %v159 = vrcp.pop %v121
        %v160 = vmul.f32 %v158, %v159
        %vm161 = vweird.f32 %v121
        %v162 = vsel %vm161, %v158, %v160
        %163 = vst [vmem:[#allocation2] sm:$0xff] %v162
        %s165 = sshllo.u32 0, 4
        %v167 = vld [vmem:[#allocation2] sm:%s165]
        %s168 = sshllo.u32 0, 4
        %169 = vst [vmem:[%s106] sm:%s168] %v167
        %s170 = sand.u32 %s8, 1
        %s171 = sand.u32 %s8, 1
        %s172 = smul.addr %s171, 4
        %s173 = scalar_lea.vmem [#allocation3], %s172
        %s174 = sadd.s32 %s17, %s16
        %s175 = sadd.s32 %s174, %s15
        %s176 = sadd.s32 %s175, %s14
        %s177 = smul.addr %s176, 4
        %s178 = scalar_lea.vmem %s1, %s177
        // Predicated region
        $region51: #{custom-call.33} parent=49 // pred_check
          _
        $region52: #{custom-call.33} parent=49 // pred_check_branch
          %180 = sbr.rel (0) target = $region54
        $region53: #{custom-call.33} parent=49 // pred_region
          // Predicated region
          $region55: #{custom-call.33} parent=53 // pred_check
            _
          $region56: #{custom-call.33} parent=53 // pred_check_branch
            %182 = sbr.rel target = $region58
          $region57: #{custom-call.33} parent=53 // pred_region
            // Predicated region
            $region70: #{custom-call.33} parent=57 // pred_check
              _
            $region71: #{custom-call.33} parent=57 // pred_check_branch
              %197 = sbr.rel (0) target = $region73
            $region72: #{custom-call.33} parent=57 // pred_region
              loop: start=0, step=1, limit=1
              $region74: #{custom-call.33} parent=72 // loop_pre_header
                _
              $region75: #{custom-call.33} parent=72 // loop_header
                %s200 = sphi 0, %s204
                %p201 = scmp.ge.s32.totalorder %s200, 1
                %s205 = sphi %s173, %s173
                %s206 = sphi %s178, %s178
              $region76: #{custom-call.33} parent=72 // loop_header_branch
                %203 = sbr.rel (%p201) target = $region80
              $region77: #{custom-call.33} parent=72 // loop_body
                %v207 = vld [vmem:[%s205] sm:$0xf]
                %208 = vst [vmem:[%s206] sm:$0xf] %v207
              $region78: #{custom-call.33} parent=72 // loop_footer
                %s204 = sadd.s32 1, %s200
              $region79: #{custom-call.33} parent=72 // loop_footer_branch
                %199 = sbr.rel target = $region75
              $region80: #{custom-call.33} parent=72 // loop_exit
                _
            $region73: #{custom-call.33} parent=57 // pred_fallthru
              _
          $region58: #{custom-call.33} parent=53 // pred_fallthru
            _
          // Predicated region
          $region59: #{custom-call.33} parent=53 // pred_check
            _
          $region60: #{custom-call.33} parent=53 // pred_check_branch
            %184 = sbr.rel (0) target = $region62
          $region61: #{custom-call.33} parent=53 // pred_region
            loop: start=0, step=1, limit=1
            $region63: #{custom-call.33} parent=61 // loop_pre_header
              _
            $region64: #{custom-call.33} parent=61 // loop_header
              %s187 = sphi 0, %s191
              %p188 = scmp.ge.s32.totalorder %s187, 1
              %s192 = sphi %s173, %s173
              %s193 = sphi %s178, %s178
            $region65: #{custom-call.33} parent=61 // loop_header_branch
              %190 = sbr.rel (%p188) target = $region69
            $region66: #{custom-call.33} parent=61 // loop_body
              %v194 = vld [vmem:[%s192] sm:$0xf]
              %195 = vst [vmem:[%s193] sm:$0xf] %v194
            $region67: #{custom-call.33} parent=61 // loop_footer
              %s191 = sadd.s32 1, %s187
            $region68: #{custom-call.33} parent=61 // loop_footer_branch
              %186 = sbr.rel target = $region64
            $region69: #{custom-call.33} parent=61 // loop_exit
              _
          $region62: #{custom-call.33} parent=53 // pred_fallthru
            _
        $region54: #{custom-call.33} parent=49 // pred_fallthru
          _
        %209 = vnop
      $region50: #{custom-call.33} parent=5 // pred_fallthru
        _
      %p210 = scmp.le.s32.totalorder 2, %s3
      // Predicated region
      $region81: #{custom-call.33} parent=5 // pred_check
        %p211 = pneg %p210
      $region82: #{custom-call.33} parent=5 // pred_check_branch
        %213 = sbr.rel (%p211) target = $region84
      $region83: #{custom-call.33} parent=5 // pred_region
        %s214 = ssub.s32 %s3, 2
        %s215 = sand.u32 %s9, 1
        %s216 = sand.u32 %s9, 1
        %s217 = smul.addr %s216, 4
        %s218 = scalar_lea.vmem [#allocation3], %s217
      $region84: #{custom-call.33} parent=5 // pred_fallthru
        _
    $region6: #{custom-call.33} parent=1 // loop_footer
      %s7 = sadd.s32 1, %s3
    $region7: #{custom-call.33} parent=1 // loop_footer_branch
      %2 = sbr.rel target = $region3
    $region8: #{custom-call.33} parent=1 // loop_exit
      _

// kernel: custom-call.32
$region0: #{custom-call.32}
  %s0 = inlined_call_operand.vmem [shape: f32[2,1,3,3], index: 0, kind: input, shape index: {}]
  %s1 = inlined_call_operand.vmem [shape: f32[2,1,3,3], index: 1, kind: output, shape index: {}]
  $region1: #{custom-call.32} parent=0
    #allocation0 [shape = 'u8[4096]{0}', space=vmem, size = 0x1000, scoped, tag = 'operand span for operand 0']
    #allocation1 [shape = 'u8[4096]{0}', space=vmem, size = 0x1000, scoped, tag = 'packed  for operand 0']
    #allocation2 [shape = 'u8[4096]{0}', space=vmem, size = 0x1000, scoped, tag = 'operand span for operand 1']
    #allocation3 [shape = 'u8[4096]{0}', space=vmem, size = 0x1000, scoped, tag = 'packed  for operand 1']
    loop: start=0, step=1, limit=4
    $region2: #{custom-call.32} parent=1 // loop_pre_header
      _
    $region3: #{custom-call.32} parent=1 // loop_header
      %s3 = sphi 0, %s7
      %p4 = scmp.ge.s32.totalorder %s3, 4
      %s10 = sphi 0, %s36
      %s11 = sphi 0, %s32
      %s12 = sphi 0, %s28
      %s13 = sphi 0, %s24
      %s14 = sphi 0, %s10
      %s15 = sphi 0, %s11
      %s16 = sphi 0, %s12
      %s17 = sphi 0, %s13
      %s18 = sphi 0, %s14
      %s19 = sphi 0, %s15
      %s20 = sphi 0, %s16
      %s21 = sphi 0, %s17
    $region4: #{custom-call.32} parent=1 // loop_header_branch
      %6 = sbr.rel (%p4) target = $region8
    $region5: #{custom-call.32} parent=1 // loop_body
      %s8 = ssub.s32 %s3, 1
      %s9 = ssub.s32 %s3, 2
      %s22 = sadd.s32 1, %s13
      %p23 = scmp.ge.s32.totalorder %s22, 1
      %s24 = scalar_select %p23, 0, %s22
      %s25 = sadd.s32 1, %s12
      %s26 = scalar_select %p23, %s25, %s12
      %p27 = scmp.ge.s32.totalorder %s26, 1
      %s28 = scalar_select %p27, 0, %s26
      %s29 = sadd.s32 1, %s11
      %s30 = scalar_select %p27, %s29, %s11
      %p31 = scmp.ge.s32.totalorder %s30, 1
      %s32 = scalar_select %p31, 0, %s30
      %s33 = sadd.s32 1, %s10
      %s34 = scalar_select %p31, %s33, %s10
      %p35 = scmp.ge.s32.totalorder %s34, 2
      %s36 = scalar_select %p35, 0, %s34
      %p37 = scmp.le.s32.totalorder 1, %s3
      %p38 = scmp.lt.s32.totalorder %s3, 3
      %p39 = pnand %p37, %p38
      %p40 = pneg %p39
      // Predicated region
      $region9: #{custom-call.32} parent=5 // pred_check
        _
      $region10: #{custom-call.32} parent=5 // pred_check_branch
        %42 = sbr.rel (%p39) target = $region12
      $region11: #{custom-call.32} parent=5 // pred_region
        %s43 = ssub.s32 %s3, 1
      $region12: #{custom-call.32} parent=5 // pred_fallthru
        _
      %p44 = scmp.lt.s32.totalorder %s3, 2
      // Predicated region
      $region13: #{custom-call.32} parent=5 // pred_check
        %p45 = pneg %p44
      $region14: #{custom-call.32} parent=5 // pred_check_branch
        %47 = sbr.rel (%p45) target = $region16
      $region15: #{custom-call.32} parent=5 // pred_region
        %s48 = sand.u32 %s3, 1
        %s49 = sand.u32 %s3, 1
        %s50 = smul.addr %s49, 4
        %s51 = scalar_lea.vmem [#allocation1], %s50
        %s52 = sadd.s32 %s13, %s12
        %s53 = sadd.s32 %s52, %s11
        %s54 = sadd.s32 %s53, %s10
        %s55 = smul.addr %s54, 4
        %s56 = scalar_lea.vmem %s0, %s55
        // Predicated region
        $region17: #{custom-call.32} parent=15 // pred_check
          _
        $region18: #{custom-call.32} parent=15 // pred_check_branch
          %58 = sbr.rel (0) target = $region20
        $region19: #{custom-call.32} parent=15 // pred_region
          // Predicated region
          $region21: #{custom-call.32} parent=19 // pred_check
            _
          $region22: #{custom-call.32} parent=19 // pred_check_branch
            %60 = sbr.rel target = $region24
          $region23: #{custom-call.32} parent=19 // pred_region
            // Predicated region
            $region36: #{custom-call.32} parent=23 // pred_check
              _
            $region37: #{custom-call.32} parent=23 // pred_check_branch
              %75 = sbr.rel (0) target = $region39
            $region38: #{custom-call.32} parent=23 // pred_region
              loop: start=0, step=1, limit=1
              $region40: #{custom-call.32} parent=38 // loop_pre_header
                _
              $region41: #{custom-call.32} parent=38 // loop_header
                %s78 = sphi 0, %s82
                %p79 = scmp.ge.s32.totalorder %s78, 1
                %s83 = sphi %s56, %s56
                %s84 = sphi %s51, %s51
              $region42: #{custom-call.32} parent=38 // loop_header_branch
                %81 = sbr.rel (%p79) target = $region46
              $region43: #{custom-call.32} parent=38 // loop_body
                %v85 = vld [vmem:[%s83] sm:$0xf]
                %86 = vst [vmem:[%s84] sm:$0xf] %v85
              $region44: #{custom-call.32} parent=38 // loop_footer
                %s82 = sadd.s32 1, %s78
              $region45: #{custom-call.32} parent=38 // loop_footer_branch
                %77 = sbr.rel target = $region41
              $region46: #{custom-call.32} parent=38 // loop_exit
                _
            $region39: #{custom-call.32} parent=23 // pred_fallthru
              _
          $region24: #{custom-call.32} parent=19 // pred_fallthru
            _
          // Predicated region
          $region25: #{custom-call.32} parent=19 // pred_check
            _
          $region26: #{custom-call.32} parent=19 // pred_check_branch
            %62 = sbr.rel (0) target = $region28
          $region27: #{custom-call.32} parent=19 // pred_region
            loop: start=0, step=1, limit=1
            $region29: #{custom-call.32} parent=27 // loop_pre_header
              _
            $region30: #{custom-call.32} parent=27 // loop_header
              %s65 = sphi 0, %s69
              %p66 = scmp.ge.s32.totalorder %s65, 1
              %s70 = sphi %s56, %s56
              %s71 = sphi %s51, %s51
            $region31: #{custom-call.32} parent=27 // loop_header_branch
              %68 = sbr.rel (%p66) target = $region35
            $region32: #{custom-call.32} parent=27 // loop_body
              %v72 = vld [vmem:[%s70] sm:$0xf]
              %73 = vst [vmem:[%s71] sm:$0xf] %v72
            $region33: #{custom-call.32} parent=27 // loop_footer
              %s69 = sadd.s32 1, %s65
            $region34: #{custom-call.32} parent=27 // loop_footer_branch
              %64 = sbr.rel target = $region30
            $region35: #{custom-call.32} parent=27 // loop_exit
              _
          $region28: #{custom-call.32} parent=19 // pred_fallthru
            _
        $region20: #{custom-call.32} parent=15 // pred_fallthru
          _
        %87 = vnop
      $region16: #{custom-call.32} parent=5 // pred_fallthru
        _
      %p88 = scmp.le.s32.totalorder 1, %s3
      %p89 = scmp.lt.s32.totalorder %s3, 3
      %p90 = pnand %p88, %p89
      %p91 = pneg %p90
      // Predicated region
      $region47: #{custom-call.32} parent=5 // pred_check
        _
      $region48: #{custom-call.32} parent=5 // pred_check_branch
        %93 = sbr.rel (%p90) target = $region50
      $region49: #{custom-call.32} parent=5 // pred_region
        #allocation4 [shape = 'f32[3,3]{1,0}', space=vmem, size = 0x1000, scoped, tag = 'rescaled input a']
        %s94 = ssub.s32 %s3, 1
        %s95 = sand.u32 %s8, 1
        %s96 = sand.u32 %s8, 1
        %s97 = smul.addr %s96, 4
        %s98 = scalar_lea.vmem [#allocation1], %s97
        %s99 = sand.u32 %s8, 1
        %s100 = sand.u32 %s8, 1
        %s101 = smul.addr %s100, 4
        %s102 = scalar_lea.vmem [#allocation1], %s101
        %s103 = sand.u32 %s8, 1
        %s104 = sand.u32 %s8, 1
        %s105 = smul.addr %s104, 4
        %s106 = scalar_lea.vmem [#allocation3], %s105
        %s108 = sshllo.u32 0, 4
        %v109 = vld [vmem:[%s102] sm:%s108]
        %110 = vst [vmem:[#allocation0] sm:%s108] %v109
        %v111 = vlaneseq
        %v112 = vand.u32 %v111, 127
        %vm113 = vcmp.lt.s32.totalorder %v112, 3
        %v114 = vlaneseq
        %v115 = vshrl.u32 %v114, 7
        %vm117 = vcmp.eq.s32.totalorder %v115, %v112
        %v118 = vld [vmem:[#allocation0] sm:$0xff]
        %v119 = vsel %vm117, %v118, 0.0
        %120 = vadd.xlane.f32.xlu0 %v119
        %v121 = vpop.xlane.xlu0 %120
        %vm122 = vcmp.le.s32.totalorder %v115, %v112
        %vm123 = vmand %vm122, %vm113
        %v124 = vsel %vm123, %v118, 0.0
        %v125 = vrcp.pop %v121
        %v126 = vmul.f32 %v124, %v125
        %127 = vst [vmem:[#allocation4] sm:$0xff] %v126
        %v128 = vlaneseq
        %v129 = vand.u32 %v128, 127
        %v130 = vlaneseq
        %v131 = vshrl.u32 %v130, 7
        %vm133 = vcmp.eq.s32.totalorder %v129, %v131
        %v134 = vlaneseq
        %v135 = vand.u32 %v134, 127
        %vm136 = vcmp.eq.s32.totalorder %v135, 2
        %v137 = vsel %vm136, 1.0, -1.0
        %v138 = vsel %vm133, %v137, 0.0
        %s139 = scalar_lea.vmem [#allocation4], 1
        %v140 = vld [vmem:[%s139] ss:$0 sm:$0xff]
        %v141 = vxor.u32 %v140, 2147483648
        %v142 = vlaneseq
        %v143 = vand.u32 %v142, 127
        %vm144 = vcmp.eq.s32.totalorder %v143, 1
        %v145 = vmul.f32 %v141, %v138
        %146 = vadd.xlane.f32.xlu0 %v145
        %v147 = vpop.xlane.xlu0 %146
        %v148 = vsel %vm144, %v147, %v138
        %v149 = vld [vmem:[#allocation4] ss:$0 sm:$0xff]
        %v150 = vxor.u32 %v149, 2147483648
        %v151 = vlaneseq
        %v152 = vand.u32 %v151, 127
        %vm153 = vcmp.eq.s32.totalorder %v152, 0
        %v154 = vmul.f32 %v150, %v148
        %155 = vadd.xlane.f32.xlu0 %v154
        %v156 = vpop.xlane.xlu0 %155
        %v157 = vsel %vm153, %v156, %v148
        %v158 = vrcp.pop %v121
        %v159 = vmul.f32 %v157, %v158
        %vm160 = vweird.f32 %v121
        %v161 = vsel %vm160, %v157, %v159
        %162 = vst [vmem:[#allocation2] sm:$0xff] %v161
        %s164 = sshllo.u32 0, 4
        %v166 = vld [vmem:[#allocation2] sm:%s164]
        %s167 = sshllo.u32 0, 4
        %168 = vst [vmem:[%s106] sm:%s167] %v166
        %s169 = sand.u32 %s8, 1
        %s170 = sand.u32 %s8, 1
        %s171 = smul.addr %s170, 4
        %s172 = scalar_lea.vmem [#allocation3], %s171
        %s173 = sadd.s32 %s17, %s16
        %s174 = sadd.s32 %s173, %s15
        %s175 = sadd.s32 %s174, %s14
        %s176 = smul.addr %s175, 4
        %s177 = scalar_lea.vmem %s1, %s176
        // Predicated region
        $region51: #{custom-call.32} parent=49 // pred_check
          _
        $region52: #{custom-call.32} parent=49 // pred_check_branch
          %179 = sbr.rel (0) target = $region54
        $region53: #{custom-call.32} parent=49 // pred_region
          // Predicated region
          $region55: #{custom-call.32} parent=53 // pred_check
            _
          $region56: #{custom-call.32} parent=53 // pred_check_branch
            %181 = sbr.rel target = $region58
          $region57: #{custom-call.32} parent=53 // pred_region
            // Predicated region
            $region70: #{custom-call.32} parent=57 // pred_check
              _
            $region71: #{custom-call.32} parent=57 // pred_check_branch
              %196 = sbr.rel (0) target = $region73
            $region72: #{custom-call.32} parent=57 // pred_region
              loop: start=0, step=1, limit=1
              $region74: #{custom-call.32} parent=72 // loop_pre_header
                _
              $region75: #{custom-call.32} parent=72 // loop_header
                %s199 = sphi 0, %s203
                %p200 = scmp.ge.s32.totalorder %s199, 1
                %s204 = sphi %s172, %s172
                %s205 = sphi %s177, %s177
              $region76: #{custom-call.32} parent=72 // loop_header_branch
                %202 = sbr.rel (%p200) target = $region80
              $region77: #{custom-call.32} parent=72 // loop_body
                %v206 = vld [vmem:[%s204] sm:$0xf]
                %207 = vst [vmem:[%s205] sm:$0xf] %v206
              $region78: #{custom-call.32} parent=72 // loop_footer
                %s203 = sadd.s32 1, %s199
              $region79: #{custom-call.32} parent=72 // loop_footer_branch
                %198 = sbr.rel target = $region75
              $region80: #{custom-call.32} parent=72 // loop_exit
                _
            $region73: #{custom-call.32} parent=57 // pred_fallthru
              _
          $region58: #{custom-call.32} parent=53 // pred_fallthru
            _
          // Predicated region
          $region59: #{custom-call.32} parent=53 // pred_check
            _
          $region60: #{custom-call.32} parent=53 // pred_check_branch
            %183 = sbr.rel (0) target = $region62
          $region61: #{custom-call.32} parent=53 // pred_region
            loop: start=0, step=1, limit=1
            $region63: #{custom-call.32} parent=61 // loop_pre_header
              _
            $region64: #{custom-call.32} parent=61 // loop_header
              %s186 = sphi 0, %s190
              %p187 = scmp.ge.s32.totalorder %s186, 1
              %s191 = sphi %s172, %s172
              %s192 = sphi %s177, %s177
            $region65: #{custom-call.32} parent=61 // loop_header_branch
              %189 = sbr.rel (%p187) target = $region69
            $region66: #{custom-call.32} parent=61 // loop_body
              %v193 = vld [vmem:[%s191] sm:$0xf]
              %194 = vst [vmem:[%s192] sm:$0xf] %v193
            $region67: #{custom-call.32} parent=61 // loop_footer
              %s190 = sadd.s32 1, %s186
            $region68: #{custom-call.32} parent=61 // loop_footer_branch
              %185 = sbr.rel target = $region64
            $region69: #{custom-call.32} parent=61 // loop_exit
              _
          $region62: #{custom-call.32} parent=53 // pred_fallthru
            _
        $region54: #{custom-call.32} parent=49 // pred_fallthru
          _
        %208 = vnop
      $region50: #{custom-call.32} parent=5 // pred_fallthru
        _
      %p209 = scmp.le.s32.totalorder 2, %s3
      // Predicated region
      $region81: #{custom-call.32} parent=5 // pred_check
        %p210 = pneg %p209
      $region82: #{custom-call.32} parent=5 // pred_check_branch
        %212 = sbr.rel (%p210) target = $region84
      $region83: #{custom-call.32} parent=5 // pred_region
        %s213 = ssub.s32 %s3, 2
        %s214 = sand.u32 %s9, 1
        %s215 = sand.u32 %s9, 1
        %s216 = smul.addr %s215, 4
        %s217 = scalar_lea.vmem [#allocation3], %s216
      $region84: #{custom-call.32} parent=5 // pred_fallthru
        _
    $region6: #{custom-call.32} parent=1 // loop_footer
      %s7 = sadd.s32 1, %s3
    $region7: #{custom-call.32} parent=1 // loop_footer_branch
      %2 = sbr.rel target = $region3
    $region8: #{custom-call.32} parent=1 // loop_exit
      _

// kernel: mul.68
$region0: #{mul.68}
  %s0 = inlined_call_operand.vmem [shape: f32[2,16,16], index: 0, kind: input, shape index: {}]
  %s1 = inlined_call_operand.vmem [shape: f32[2,256], index: 1, kind: output, shape index: {}]
  $region1: #{mul.68} parent=0
    #allocation0 [shape = 'u8[8192]{0}', space=vmem, size = 0x2000, scoped, tag = 'scoped mem for output reshape']
    %v2 = vld [vmem:[%s0] ss:$8 sm:$0xf]
    %vm3 = vcmask 130048
    %4 = vst.msk [vmem:[#allocation0] ss:$8 sm:$0x3] %vm3, %v2
    %s5 = scalar_lea.vmem [#allocation0], 4294967281
    %6 = vst.msk [vmem:[%s5] ss:$8 sm:$0xc] %vm3, %v2
    %s7 = scalar_lea.vmem %s0, 7
    %s8 = smov 3
    %v9 = vld [vmem:[%s7] ss:$16 sm:%s8]
    %s10 = scalar_lea.vmem %s0, 4294967279
    %s11 = smov 12
    %v12 = vld [vmem:[%s10] ss:$16 sm:%s11]
    %vm13 = vcmask 1043458
    %v14 = vsel %vm13, %v12, %v9
    %15 = vrot.lane.b32.xlu0 %v14, 112
    %v16 = vpop.permute.xlu0 %15
    %vm17 = vcmask 1048448
    %18 = vst.msk [vmem:[#allocation0] sm:$0x3] %vm17, %v16
    %s19 = scalar_lea.vmem [#allocation0], 6
    %20 = vst.msk [vmem:[%s19] sm:$0xc] %vm17, %v16
    %s21 = scalar_lea.vmem %s0, 6
    %s22 = smov 3
    %v23 = vld [vmem:[%s21] ss:$16 sm:%s22]
    %s24 = scalar_lea.vmem %s0, 4294967278
    %s25 = smov 12
    %v26 = vld [vmem:[%s24] ss:$16 sm:%s25]
    %vm27 = vcmask 1043458
    %v28 = vsel %vm27, %v26, %v23
    %29 = vrot.lane.b32.xlu0 %v28, 96
    %v30 = vpop.permute.xlu0 %29
    %vm31 = vcmask 917248
    %32 = vst.msk [vmem:[#allocation0] sm:$0x3] %vm31, %v30
    %s33 = scalar_lea.vmem [#allocation0], 6
    %34 = vst.msk [vmem:[%s33] sm:$0xc] %vm31, %v30
    %s35 = scalar_lea.vmem %s0, 5
    %s36 = smov 3
    %v37 = vld [vmem:[%s35] ss:$16 sm:%s36]
    %s38 = scalar_lea.vmem %s0, 4294967277
    %s39 = smov 12
    %v40 = vld [vmem:[%s38] ss:$16 sm:%s39]
    %vm41 = vcmask 1043458
    %v42 = vsel %vm41, %v40, %v37
    %43 = vrot.lane.b32.xlu0 %v42, 80
    %v44 = vpop.permute.xlu0 %43
    %vm45 = vcmask 786048
    %46 = vst.msk [vmem:[#allocation0] sm:$0x3] %vm45, %v44
    %s47 = scalar_lea.vmem [#allocation0], 6
    %48 = vst.msk [vmem:[%s47] sm:$0xc] %vm45, %v44
    %s49 = scalar_lea.vmem %s0, 4
    %s50 = smov 3
    %v51 = vld [vmem:[%s49] ss:$16 sm:%s50]
    %s52 = scalar_lea.vmem %s0, 4294967276
    %s53 = smov 12
    %v54 = vld [vmem:[%s52] ss:$16 sm:%s53]
    %vm55 = vcmask 1043458
    %v56 = vsel %vm55, %v54, %v51
    %57 = vrot.lane.b32.xlu0 %v56, 64
    %v58 = vpop.permute.xlu0 %57
    %vm59 = vcmask 654848
    %60 = vst.msk [vmem:[#allocation0] sm:$0x3] %vm59, %v58
    %s61 = scalar_lea.vmem [#allocation0], 6
    %62 = vst.msk [vmem:[%s61] sm:$0xc] %vm59, %v58
    %s63 = scalar_lea.vmem %s0, 3
    %s64 = smov 3
    %v65 = vld [vmem:[%s63] ss:$16 sm:%s64]
    %s66 = scalar_lea.vmem %s0, 4294967275
    %s67 = smov 12
    %v68 = vld [vmem:[%s66] ss:$16 sm:%s67]
    %vm69 = vcmask 1043458
    %v70 = vsel %vm69, %v68, %v65
    %71 = vrot.lane.b32.xlu0 %v70, 48
    %v72 = vpop.permute.xlu0 %71
    %vm73 = vcmask 523648
    %74 = vst.msk [vmem:[#allocation0] sm:$0x3] %vm73, %v72
    %s75 = scalar_lea.vmem [#allocation0], 6
    %76 = vst.msk [vmem:[%s75] sm:$0xc] %vm73, %v72
    %s77 = scalar_lea.vmem %s0, 2
    %s78 = smov 3
    %v79 = vld [vmem:[%s77] ss:$16 sm:%s78]
    %s80 = scalar_lea.vmem %s0, 4294967274
    %s81 = smov 12
    %v82 = vld [vmem:[%s80] ss:$16 sm:%s81]
    %vm83 = vcmask 1043458
    %v84 = vsel %vm83, %v82, %v79
    %85 = vrot.lane.b32.xlu0 %v84, 32
    %v86 = vpop.permute.xlu0 %85
    %vm87 = vcmask 392448
    %88 = vst.msk [vmem:[#allocation0] sm:$0x3] %vm87, %v86
    %s89 = scalar_lea.vmem [#allocation0], 6
    %90 = vst.msk [vmem:[%s89] sm:$0xc] %vm87, %v86
    %s91 = scalar_lea.vmem %s0, 1
    %s92 = smov 3
    %v93 = vld [vmem:[%s91] ss:$16 sm:%s92]
    %s94 = scalar_lea.vmem %s0, 4294967273
    %s95 = smov 12
    %v96 = vld [vmem:[%s94] ss:$16 sm:%s95]
    %vm97 = vcmask 1043458
    %v98 = vsel %vm97, %v96, %v93
    %99 = vrot.lane.b32.xlu0 %v98, 16
    %v100 = vpop.permute.xlu0 %99
    %vm101 = vcmask 261248
    %102 = vst.msk [vmem:[#allocation0] sm:$0x3] %vm101, %v100
    %s103 = scalar_lea.vmem [#allocation0], 6
    %104 = vst.msk [vmem:[%s103] sm:$0xc] %vm101, %v100
    %s106 = sshllo.u32 0, 2
    %v108 = vld [vmem:[#allocation0] sm:%s106]
    %s109 = sshllo.u32 0, 2
    %110 = vst [vmem:[%s1] sm:%s109] %v108
    %s111 = scalar_lea.vmem [#allocation0], 8
    %v112 = vld [vmem:[%s111] sm:%s106]
    %s113 = sshllo.u32 0, 2
    %s114 = scalar_lea.vmem %s1, 2
    %115 = vst [vmem:[%s114] sm:%s113] %v112

// kernel: unsup_loss_07.1
$region0: #{unsup_loss_07.1}
  #allocation0 [shape = 'u32[]', space=smem, size = 0x4, offset = 0x4, fixed_abs, tag = 'smem constant byte address 0x4 - core index']
  #allocation1 [shape = 'u32[144,128]{1,0:T(1,128)}', space=vmem, size = 0x12000, scoped, tag = 'internal scratch']
  #allocation2 [shape = 'f32[3,16,16]{2,1,0:T(8,128)}', space=vmem, size = 0x6000, scoped, tag = 'scratch operand']
  #allocation3 [shape = 'f32[3]{0:T(128)}', space=smem, size = 0x200, scoped, tag = 'scratch operand']
  %s0 = inlined_call_operand.vmem [shape: f32[2,3,17,17], index: 0, kind: input, shape index: {}]
  %s1 = inlined_call_operand.vmem [shape: f32[4,3,17,17], index: 1, kind: input, shape index: {}]
  %s2 = inlined_call_operand.vmem [shape: f32[4,1,17,17], index: 2, kind: input, shape index: {}]
  %s3 = inlined_call_operand.vmem [shape: f32[2,1,17,17], index: 3, kind: input, shape index: {}]
  %s4 = inlined_call_operand.vmem [shape: f32[2,8,128], index: 4, kind: output, shape index: {}]
  %s5 = sld [smem:[#allocation0]]
  $region65: #{unsup_loss_07.1} parent=0
    _
  %s7 = ssub.s32 1, %s5
  %s8 = scalar_select 0, %s7, %s5
  loop: start=0, step=1, limit=6
  $region2: #{unsup_loss_07.1} parent=0 // loop_pre_header
    _
  $region3: #{unsup_loss_07.1} parent=0 // loop_header
    %s10 = sphi 0, %s14
    %p11 = scmp.ge.s32.totalorder %s10, 6
    %s17 = sphi 0, %s29
    %s18 = sphi 0, %s25
    %s19 = sphi 0, %s17
    %s20 = sphi 0, %s18
    %s21 = sphi 0, %s19
    %s22 = sphi 0, %s20
    %s32 = sphi 0, %s34
    %s35 = sphi 0, %s32
    %s36 = sphi 0, %s35
    %s52 = sphi 0, %s36
    %s62 = sphi 0, %s64
    %s65 = sphi 0, %s62
    %s66 = sphi 0, %s65
    %s82 = sphi 0, %s66
    %s92 = sphi 0, %s94
    %s95 = sphi 0, %s92
    %s96 = sphi 0, %s95
    %s112 = sphi 0, %s96
    %s118 = sphi 0, %s120
    %s121 = sphi 0, %s118
    %s122 = sphi 0, %s121
    %s138 = sphi 0, %s122
    %s144 = sphi 0, %s146
    %s147 = sphi 0, %s144
    %s148 = sphi 0, %s147
    %s164 = sphi 0, %s148
  $region4: #{unsup_loss_07.1} parent=0 // loop_header_branch
    %13 = sbr.rel (%p11) target = $region8
  $region5: #{unsup_loss_07.1} parent=0 // loop_body
    %s15 = ssub.s32 %s10, 1
    %s16 = ssub.s32 %s10, 2
    %s23 = sadd.s32 1, %s18
    %p24 = scmp.ge.s32.totalorder %s23, 2
    %s25 = scalar_select %p24, 0, %s23
    %s26 = sadd.s32 1, %s17
    %s27 = scalar_select %p24, %s26, %s17
    %p28 = scmp.ge.s32.totalorder %s27, 2
    %s29 = scalar_select %p28, 0, %s27
    %s30 = ssub.s32 %s17, %s29
    %p31 = scmp.eq.s32.totalorder %s30, 0
    %s33 = sadd.s32 %s32, 1
    %s34 = scalar_select %p31, %s32, %s33
    %p37 = pneg %p31
    %p38 = scmp.eq.s32.totalorder %s10, 3
    %p39 = por %p37, %p38
    %p40 = scmp.ne.s32.totalorder %s32, %s35
    %p41 = scmp.eq.s32.totalorder %s10, 0
    %p42 = por %p40, %p41
    %p43 = scmp.ne.s32.totalorder %s32, %s35
    %p44 = scmp.eq.s32.totalorder %s15, 3
    %p45 = por %p43, %p44
    %p46 = scmp.ne.s32.totalorder %s35, %s36
    %p47 = scmp.eq.s32.totalorder %s15, 0
    %p48 = por %p46, %p47
    %p49 = scmp.ne.s32.totalorder %s35, %s36
    %p50 = scmp.eq.s32.totalorder %s16, 3
    %p51 = por %p49, %p50
    %p53 = scmp.ne.s32.totalorder %s36, %s52
    %p54 = scmp.eq.s32.totalorder %s16, 0
    %p55 = por %p53, %p54
    %s56 = smul.u32 %s18, 2
    %s57 = sadd.s32 %s56, %s17
    %s58 = smul.u32 %s25, 2
    %s59 = sadd.s32 %s58, %s29
    %s60 = ssub.s32 %s57, %s59
    %p61 = scmp.eq.s32.totalorder %s60, 0
    %s63 = sadd.s32 %s62, 1
    %s64 = scalar_select %p61, %s62, %s63
    %p67 = pneg %p61
    %p68 = scmp.eq.s32.totalorder %s10, 3
    %p69 = por %p67, %p68
    %p70 = scmp.ne.s32.totalorder %s62, %s65
    %p71 = scmp.eq.s32.totalorder %s10, 0
    %p72 = por %p70, %p71
    %p73 = scmp.ne.s32.totalorder %s62, %s65
    %p74 = scmp.eq.s32.totalorder %s15, 3
    %p75 = por %p73, %p74
    %p76 = scmp.ne.s32.totalorder %s65, %s66
    %p77 = scmp.eq.s32.totalorder %s15, 0
    %p78 = por %p76, %p77
    %p79 = scmp.ne.s32.totalorder %s65, %s66
    %p80 = scmp.eq.s32.totalorder %s16, 3
    %p81 = por %p79, %p80
    %p83 = scmp.ne.s32.totalorder %s66, %s82
    %p84 = scmp.eq.s32.totalorder %s16, 0
    %p85 = por %p83, %p84
    %s86 = smul.u32 %s18, 2
    %s87 = sadd.s32 %s86, %s17
    %s88 = smul.u32 %s25, 2
    %s89 = sadd.s32 %s88, %s29
    %s90 = ssub.s32 %s87, %s89
    %p91 = scmp.eq.s32.totalorder %s90, 0
    %s93 = sadd.s32 %s92, 1
    %s94 = scalar_select %p91, %s92, %s93
    %p97 = pneg %p91
    %p98 = scmp.eq.s32.totalorder %s10, 3
    %p99 = por %p97, %p98
    %p100 = scmp.ne.s32.totalorder %s92, %s95
    %p101 = scmp.eq.s32.totalorder %s10, 0
    %p102 = por %p100, %p101
    %p103 = scmp.ne.s32.totalorder %s92, %s95
    %p104 = scmp.eq.s32.totalorder %s15, 3
    %p105 = por %p103, %p104
    %p106 = scmp.ne.s32.totalorder %s95, %s96
    %p107 = scmp.eq.s32.totalorder %s15, 0
    %p108 = por %p106, %p107
    %p109 = scmp.ne.s32.totalorder %s95, %s96
    %p110 = scmp.eq.s32.totalorder %s16, 3
    %p111 = por %p109, %p110
    %p113 = scmp.ne.s32.totalorder %s96, %s112
    %p114 = scmp.eq.s32.totalorder %s16, 0
    %p115 = por %p113, %p114
    %s116 = ssub.s32 %s17, %s29
    %p117 = scmp.eq.s32.totalorder %s116, 0
    %s119 = sadd.s32 %s118, 1
    %s120 = scalar_select %p117, %s118, %s119
    %p123 = pneg %p117
    %p124 = scmp.eq.s32.totalorder %s10, 3
    %p125 = por %p123, %p124
    %p126 = scmp.ne.s32.totalorder %s118, %s121
    %p127 = scmp.eq.s32.totalorder %s10, 0
    %p128 = por %p126, %p127
    %p129 = scmp.ne.s32.totalorder %s118, %s121
    %p130 = scmp.eq.s32.totalorder %s15, 3
    %p131 = por %p129, %p130
    %p132 = scmp.ne.s32.totalorder %s121, %s122
    %p133 = scmp.eq.s32.totalorder %s15, 0
    %p134 = por %p132, %p133
    %p135 = scmp.ne.s32.totalorder %s121, %s122
    %p136 = scmp.eq.s32.totalorder %s16, 3
    %p137 = por %p135, %p136
    %p139 = scmp.ne.s32.totalorder %s122, %s138
    %p140 = scmp.eq.s32.totalorder %s16, 0
    %p141 = por %p139, %p140
    %s142 = ssub.s32 %s17, %s29
    %p143 = scmp.eq.s32.totalorder %s142, 0
    %s145 = sadd.s32 %s144, 1
    %s146 = scalar_select %p143, %s144, %s145
    %p149 = pneg %p143
    %p150 = scmp.eq.s32.totalorder %s10, 3
    %p151 = por %p149, %p150
    %p152 = scmp.ne.s32.totalorder %s144, %s147
    %p153 = scmp.eq.s32.totalorder %s10, 0
    %p154 = por %p152, %p153
    %p155 = scmp.ne.s32.totalorder %s144, %s147
    %p156 = scmp.eq.s32.totalorder %s15, 3
    %p157 = por %p155, %p156
    %p158 = scmp.ne.s32.totalorder %s147, %s148
    %p159 = scmp.eq.s32.totalorder %s15, 0
    %p160 = por %p158, %p159
    %p161 = scmp.ne.s32.totalorder %s147, %s148
    %p162 = scmp.eq.s32.totalorder %s16, 3
    %p163 = por %p161, %p162
    %p165 = scmp.ne.s32.totalorder %s148, %s164
    %p166 = scmp.eq.s32.totalorder %s16, 0
    %p167 = por %p165, %p166
    %p168 = scmp.le.s32.totalorder 1, %s10
    %p169 = scmp.lt.s32.totalorder %s10, 5
    %p170 = pnand %p168, %p169
    %p171 = pneg %p170
    // Predicated region
    $region9: #{unsup_loss_07.1} parent=5 // pred_check
      _
    $region10: #{unsup_loss_07.1} parent=5 // pred_check_branch
      %173 = sbr.rel (%p170) target = $region12
    $region11: #{unsup_loss_07.1} parent=5 // pred_region
      %s174 = ssub.s32 %s10, 1
    $region12: #{unsup_loss_07.1} parent=5 // pred_fallthru
      _
    %p175 = scmp.lt.s32.totalorder %s10, 4
    // Predicated region
    $region13: #{unsup_loss_07.1} parent=5 // pred_check
      %p176 = pneg %p175
    $region14: #{unsup_loss_07.1} parent=5 // pred_check_branch
      %178 = sbr.rel (%p176) target = $region16
    $region15: #{unsup_loss_07.1} parent=5 // pred_region
      // Predicated region
      $region17: #{unsup_loss_07.1} parent=15 // pred_check
        %p179 = pneg %p42
      $region18: #{unsup_loss_07.1} parent=15 // pred_check_branch
        %181 = sbr.rel (%p179) target = $region20
      $region19: #{unsup_loss_07.1} parent=15 // pred_region
        %p182 = scmp.lt.s32.totalorder %s17, 1
        %s183 = scalar_select %p182, %s17, 1
        %s184 = smul.addr %s183, 9
        %s185 = smul.addr %s184, 8
        %s186 = scalar_lea.vmem %s0, %s185
      $region20: #{unsup_loss_07.1} parent=15 // pred_fallthru
        _
      // Predicated region
      $region21: #{unsup_loss_07.1} parent=15 // pred_check
        %p187 = pneg %p72
      $region22: #{unsup_loss_07.1} parent=15 // pred_check_branch
        %189 = sbr.rel (%p187) target = $region24
      $region23: #{unsup_loss_07.1} parent=15 // pred_region
        %s190 = smul.u32 %s18, 2
        %s191 = sadd.s32 %s190, %s17
        %p192 = scmp.lt.s32.totalorder %s191, 3
        %s193 = scalar_select %p192, %s191, 3
        %s194 = smul.addr %s193, 9
        %s195 = smul.addr %s194, 8
        %s196 = scalar_lea.vmem %s1, %s195
        %s197 = smul.u32 %s18, 2
        %s198 = sadd.s32 %s197, %s17
      $region24: #{unsup_loss_07.1} parent=15 // pred_fallthru
        _
      // Predicated region
      $region25: #{unsup_loss_07.1} parent=15 // pred_check
        %p199 = pneg %p102
      $region26: #{unsup_loss_07.1} parent=15 // pred_check_branch
        %201 = sbr.rel (%p199) target = $region28
      $region27: #{unsup_loss_07.1} parent=15 // pred_region
        %s202 = smul.u32 %s18, 2
        %s203 = sadd.s32 %s202, %s17
        %p204 = scmp.lt.s32.totalorder %s203, 3
        %s205 = scalar_select %p204, %s203, 3
        %s206 = smul.addr %s205, 3
        %s207 = smul.addr %s206, 8
        %s208 = scalar_lea.vmem %s2, %s207
        %s209 = smul.u32 %s18, 2
        %s210 = sadd.s32 %s209, %s17
      $region28: #{unsup_loss_07.1} parent=15 // pred_fallthru
        _
      // Predicated region
      $region29: #{unsup_loss_07.1} parent=15 // pred_check
        %p211 = pneg %p128
      $region30: #{unsup_loss_07.1} parent=15 // pred_check_branch
        %213 = sbr.rel (%p211) target = $region32
      $region31: #{unsup_loss_07.1} parent=15 // pred_region
        %p214 = scmp.lt.s32.totalorder %s17, 1
        %s215 = scalar_select %p214, %s17, 1
        %s216 = smul.addr %s215, 3
        %s217 = smul.addr %s216, 8
        %s218 = scalar_lea.vmem %s3, %s217
      $region32: #{unsup_loss_07.1} parent=15 // pred_fallthru
        _
    $region16: #{unsup_loss_07.1} parent=5 // pred_fallthru
      _
    %p219 = scmp.le.s32.totalorder 1, %s10
    %p220 = scmp.lt.s32.totalorder %s10, 5
    %p221 = pnand %p219, %p220
    %p222 = pneg %p221
    // Predicated region
    $region33: #{unsup_loss_07.1} parent=5 // pred_check
      _
    $region34: #{unsup_loss_07.1} parent=5 // pred_check_branch
      %224 = sbr.rel (%p221) target = $region36
    $region35: #{unsup_loss_07.1} parent=5 // pred_region
      %s225 = ssub.s32 %s10, 1
      %p226 = scmp.lt.s32.totalorder %s19, 1
      %s227 = scalar_select %p226, %s19, 1
      %s228 = smul.addr %s227, 9
      %s229 = smul.addr %s228, 8
      %s230 = scalar_lea.vmem %s0, %s229
      %p231 = pneg %p48
      %p232 = pneg %p45
      %s233 = smul.u32 %s20, 2
      %s234 = sadd.s32 %s233, %s19
      %p235 = scmp.lt.s32.totalorder %s234, 3
      %s236 = scalar_select %p235, %s234, 3
      %s237 = smul.addr %s236, 9
      %s238 = smul.addr %s237, 8
      %s239 = scalar_lea.vmem %s1, %s238
      %p240 = pneg %p78
      %p241 = pneg %p75
      %s242 = smul.u32 %s20, 2
      %s243 = sadd.s32 %s242, %s19
      %p244 = scmp.lt.s32.totalorder %s243, 3
      %s245 = scalar_select %p244, %s243, 3
      %s246 = smul.addr %s245, 3
      %s247 = smul.addr %s246, 8
      %s248 = scalar_lea.vmem %s2, %s247
      %p249 = pneg %p108
      %p250 = pneg %p105
      %p251 = scmp.lt.s32.totalorder %s19, 1
      %s252 = scalar_select %p251, %s19, 1
      %s253 = smul.addr %s252, 3
      %s254 = smul.addr %s253, 8
      %s255 = scalar_lea.vmem %s3, %s254
      %p256 = pneg %p134
      %p257 = pneg %p131
      %p258 = pneg %p160
      %p259 = pneg %p157
      %p260 = scmp.lt.s32.totalorder %s19, 1
      %s261 = scalar_select %p260, %s19, 1
      %s262 = smul.addr %s261, 8
      %s263 = scalar_lea.vmem %s4, %s262
      %p264 = scmp.lt.s32.totalorder %s19, 1
      %s265 = scalar_select %p264, %s19, 1
      %s266 = smul.addr %s265, 9
      %s267 = smul.addr %s266, 8
      %s268 = scalar_lea.vmem %s0, %s267
      %s269 = smul.u32 %s20, 2
      %s270 = sadd.s32 %s269, %s19
      %p271 = scmp.lt.s32.totalorder %s270, 3
      %s272 = scalar_select %p271, %s270, 3
      %s273 = smul.addr %s272, 9
      %s274 = smul.addr %s273, 8
      %s275 = scalar_lea.vmem %s1, %s274
      %s276 = smul.u32 %s20, 2
      %s277 = sadd.s32 %s276, %s19
      %s278 = smul.u32 %s20, 2
      %s279 = sadd.s32 %s278, %s19
      %p280 = scmp.lt.s32.totalorder %s279, 3
      %s281 = scalar_select %p280, %s279, 3
      %s282 = smul.addr %s281, 3
      %s283 = smul.addr %s282, 8
      %s284 = scalar_lea.vmem %s2, %s283
      %s285 = smul.u32 %s20, 2
      %s286 = sadd.s32 %s285, %s19
      %p287 = scmp.lt.s32.totalorder %s19, 1
      %s288 = scalar_select %p287, %s19, 1
      %s289 = smul.addr %s288, 3
      %s290 = smul.addr %s289, 8
      %s291 = scalar_lea.vmem %s3, %s290
      %p292 = scmp.lt.s32.totalorder %s19, 1
      %s293 = scalar_select %p292, %s19, 1
      %s294 = smul.addr %s293, 8
      %s295 = scalar_lea.vmem %s4, %s294
      %v296 = vld [vmem:[%s268] sm:$0xff]
      %v297 = vld [vmem:[%s268 + $0x8] sm:$0xff]
      %v298 = vld [vmem:[%s268 + $0x10] sm:$0x1]
      %v299 = vld [vmem:[%s268 + $0x18] sm:$0xff]
      %v300 = vld [vmem:[%s268 + $0x20] sm:$0xff]
      %v301 = vld [vmem:[%s268 + $0x28] sm:$0x1]
      %v302 = vld [vmem:[%s268 + $0x30] sm:$0xff]
      %v303 = vld [vmem:[%s268 + $0x38] sm:$0xff]
      %v304 = vld [vmem:[%s268 + $0x40] sm:$0x1]
      %v305 = vld [vmem:[%s275] sm:$0xff]
      %v306 = vld [vmem:[%s275 + $0x8] sm:$0xff]
      %v307 = vld [vmem:[%s275 + $0x10] sm:$0x1]
      %v308 = vld [vmem:[%s275 + $0x18] sm:$0xff]
      %v309 = vld [vmem:[%s275 + $0x20] sm:$0xff]
      %v310 = vld [vmem:[%s275 + $0x28] sm:$0x1]
      %v311 = vld [vmem:[%s275 + $0x30] sm:$0xff]
      %v312 = vld [vmem:[%s275 + $0x38] sm:$0xff]
      %v313 = vld [vmem:[%s275 + $0x40] sm:$0x1]
      %v314 = vld [vmem:[%s284] sm:$0xff]
      %v315 = vld [vmem:[%s284 + $0x8] sm:$0xff]
      %v316 = vld [vmem:[%s284 + $0x10] sm:$0x1]
      %v317 = vmul.f32 %v296, %v314
      %v318 = vmul.f32 %v297, %v315
      %v319 = vmul.f32 %v298, %v316
      %v320 = vmul.f32 %v299, %v314
      %v321 = vmul.f32 %v300, %v315
      %v322 = vmul.f32 %v301, %v316
      %v323 = vmul.f32 %v302, %v314
      %v324 = vmul.f32 %v303, %v315
      %v325 = vmul.f32 %v304, %v316
      %v326 = vmul.f32 %v305, %v314
      %v327 = vmul.f32 %v306, %v315
      %v328 = vmul.f32 %v307, %v316
      %v329 = vmul.f32 %v308, %v314
      %v330 = vmul.f32 %v309, %v315
      %v331 = vmul.f32 %v310, %v316
      %v332 = vmul.f32 %v311, %v314
      %v333 = vmul.f32 %v312, %v315
      %v334 = vmul.f32 %v313, %v316
      %v335 = vsub.f32 %v326, %v317
      %v336 = vsub.f32 %v327, %v318
      %v337 = vsub.f32 %v329, %v320
      %v338 = vsub.f32 %v330, %v321
      %v339 = vsub.f32 %v332, %v323
      %v340 = vsub.f32 %v333, %v324
      %v341 = vand.u32 2147483647, %v335
      %v342 = vand.u32 2147483647, %v336
      %v343 = vand.u32 2147483647, %v337
      %v344 = vand.u32 2147483647, %v338
      %v345 = vand.u32 2147483647, %v339
      %v346 = vand.u32 2147483647, %v340
      %vm347 = vcmp.lt.f32.partialorder %v341, 1.0
      %vm348 = vcmp.lt.f32.partialorder %v342, 1.0
      %vm349 = vcmp.lt.f32.partialorder %v343, 1.0
      %vm350 = vcmp.lt.f32.partialorder %v344, 1.0
      %vm351 = vcmp.lt.f32.partialorder %v345, 1.0
      %vm352 = vcmp.lt.f32.partialorder %v346, 1.0
      %v353 = vmul.f32 %v335, 0.5
      %v354 = vmul.f32 %v336, 0.5
      %v355 = vmul.f32 %v337, 0.5
      %v356 = vmul.f32 %v338, 0.5
      %v357 = vmul.f32 %v339, 0.5
      %v358 = vmul.f32 %v340, 0.5
      %v359 = vmul.f32 %v353, %v335
      %v360 = vmul.f32 %v354, %v336
      %v361 = vmul.f32 %v355, %v337
      %v362 = vmul.f32 %v356, %v338
      %v363 = vmul.f32 %v357, %v339
      %v364 = vmul.f32 %v358, %v340
      %v365 = vsub.f32 %v341, 0.5
      %v366 = vsub.f32 %v342, 0.5
      %v367 = vsub.f32 %v343, 0.5
      %v368 = vsub.f32 %v344, 0.5
      %v369 = vsub.f32 %v345, 0.5
      %v370 = vsub.f32 %v346, 0.5
      %v371 = vsel %vm347, %v359, %v365
      %v372 = vsel %vm348, %v360, %v366
      %v373 = vsel %vm349, %v361, %v367
      %v374 = vsel %vm350, %v362, %v368
      %v375 = vsel %vm351, %v363, %v369
      %v376 = vsel %vm352, %v364, %v370
      %383 = vrot.lane.b32.xlu0 %v326, 127
      %v384 = vpop.permute.xlu0 %383
      %385 = vrot.lane.b32.xlu0 %v327, 127
      %v386 = vpop.permute.xlu0 %385
      %387 = vrot.lane.b32.xlu0 %v329, 127
      %v388 = vpop.permute.xlu0 %387
      %389 = vrot.lane.b32.xlu0 %v330, 127
      %v390 = vpop.permute.xlu0 %389
      %391 = vrot.lane.b32.xlu0 %v332, 127
      %v392 = vpop.permute.xlu0 %391
      %393 = vrot.lane.b32.xlu0 %v333, 127
      %v394 = vpop.permute.xlu0 %393
      %v401 = vsub.f32 %v326, %v384
      %v402 = vsub.f32 %v327, %v386
      %v403 = vsub.f32 %v329, %v388
      %v404 = vsub.f32 %v330, %v390
      %v405 = vsub.f32 %v332, %v392
      %v406 = vsub.f32 %v333, %v394
      %413 = vrot.lane.b32.xlu0 %v317, 127
      %v414 = vpop.permute.xlu0 %413
      %415 = vrot.lane.b32.xlu0 %v318, 127
      %v416 = vpop.permute.xlu0 %415
      %417 = vrot.lane.b32.xlu0 %v320, 127
      %v418 = vpop.permute.xlu0 %417
      %419 = vrot.lane.b32.xlu0 %v321, 127
      %v420 = vpop.permute.xlu0 %419
      %421 = vrot.lane.b32.xlu0 %v323, 127
      %v422 = vpop.permute.xlu0 %421
      %423 = vrot.lane.b32.xlu0 %v324, 127
      %v424 = vpop.permute.xlu0 %423
      %v431 = vsub.f32 %v317, %v414
      %v432 = vsub.f32 %v318, %v416
      %v433 = vsub.f32 %v320, %v418
      %v434 = vsub.f32 %v321, %v420
      %v435 = vsub.f32 %v323, %v422
      %v436 = vsub.f32 %v324, %v424
      %vm440 = vcmask 1046528
      %v441 = vrot.slane %v326, 1
      %v442 = vrot.slane %v327, 1
      %v443 = vsel %vm440, %v441, %v442
      %v444 = vrot.slane %v328, 1
      %v445 = vsel %vm440, %v442, %v444
      %v446 = vrot.slane %v329, 1
      %v447 = vrot.slane %v330, 1
      %v448 = vsel %vm440, %v446, %v447
      %v449 = vrot.slane %v331, 1
      %v450 = vsel %vm440, %v447, %v449
      %v451 = vrot.slane %v332, 1
      %v452 = vrot.slane %v333, 1
      %v453 = vsel %vm440, %v451, %v452
      %v454 = vrot.slane %v334, 1
      %v455 = vsel %vm440, %v452, %v454
      %v462 = vsub.f32 %v326, %v443
      %v463 = vsub.f32 %v327, %v445
      %v464 = vsub.f32 %v329, %v448
      %v465 = vsub.f32 %v330, %v450
      %v466 = vsub.f32 %v332, %v453
      %v467 = vsub.f32 %v333, %v455
      %v471 = vrot.slane %v317, 1
      %v472 = vrot.slane %v318, 1
      %v473 = vsel %vm440, %v471, %v472
      %v474 = vrot.slane %v319, 1
      %v475 = vsel %vm440, %v472, %v474
      %v476 = vrot.slane %v320, 1
      %v477 = vrot.slane %v321, 1
      %v478 = vsel %vm440, %v476, %v477
      %v479 = vrot.slane %v322, 1
      %v480 = vsel %vm440, %v477, %v479
      %v481 = vrot.slane %v323, 1
      %v482 = vrot.slane %v324, 1
      %v483 = vsel %vm440, %v481, %v482
      %v484 = vrot.slane %v325, 1
      %v485 = vsel %vm440, %v482, %v484
      %v492 = vsub.f32 %v317, %v473
      %v493 = vsub.f32 %v318, %v475
      %v494 = vsub.f32 %v320, %v478
      %v495 = vsub.f32 %v321, %v480
      %v496 = vsub.f32 %v323, %v483
      %v497 = vsub.f32 %v324, %v485
      %v498 = vlaneseq
      %v499 = vand.u32 %v498, 127
      %v500 = vlaneseq
      %v501 = vshrl.u32 %v500, 7
      %v502 = vadd.s32 %v501, 8
      %vm503 = vcmp.lt.s32.totalorder %v499, 15
      %v504 = vsel %vm503, 1, 0
      %v505 = vcvt.s32.f32 %v504
      %vm506 = vcmp.lt.s32.totalorder %v501, 15
      %vm507 = vcmp.lt.s32.totalorder %v502, 15
      %v508 = vsel %vm506, 1, 0
      %v509 = vsel %vm507, 1, 0
      %v510 = vcvt.s32.f32 %v508
      %v511 = vcvt.s32.f32 %v509
      %v512 = vmul.f32 %v371, 0.5
      %v513 = vmul.f32 %v372, 0.5
      %v514 = vmul.f32 %v373, 0.5
      %v515 = vmul.f32 %v374, 0.5
      %v516 = vmul.f32 %v375, 0.5
      %v517 = vmul.f32 %v376, 0.5
      %v518 = vsub.f32 %v401, %v431
      %v519 = vsub.f32 %v402, %v432
      %v520 = vsub.f32 %v403, %v433
      %v521 = vsub.f32 %v404, %v434
      %v522 = vsub.f32 %v405, %v435
      %v523 = vsub.f32 %v406, %v436
      %v524 = vand.u32 2147483647, %v518
      %v525 = vand.u32 2147483647, %v519
      %v526 = vand.u32 2147483647, %v520
      %v527 = vand.u32 2147483647, %v521
      %v528 = vand.u32 2147483647, %v522
      %v529 = vand.u32 2147483647, %v523
      %vm530 = vcmp.lt.f32.partialorder %v524, 1.0
      %vm531 = vcmp.lt.f32.partialorder %v525, 1.0
      %vm532 = vcmp.lt.f32.partialorder %v526, 1.0
      %vm533 = vcmp.lt.f32.partialorder %v527, 1.0
      %vm534 = vcmp.lt.f32.partialorder %v528, 1.0
      %vm535 = vcmp.lt.f32.partialorder %v529, 1.0
      %v536 = vmul.f32 %v518, 0.5
      %v537 = vmul.f32 %v519, 0.5
      %v538 = vmul.f32 %v520, 0.5
      %v539 = vmul.f32 %v521, 0.5
      %v540 = vmul.f32 %v522, 0.5
      %v541 = vmul.f32 %v523, 0.5
      %v542 = vmul.f32 %v536, %v518
      %v543 = vmul.f32 %v537, %v519
      %v544 = vmul.f32 %v538, %v520
      %v545 = vmul.f32 %v539, %v521
      %v546 = vmul.f32 %v540, %v522
      %v547 = vmul.f32 %v541, %v523
      %v548 = vsub.f32 %v524, 0.5
      %v549 = vsub.f32 %v525, 0.5
      %v550 = vsub.f32 %v526, 0.5
      %v551 = vsub.f32 %v527, 0.5
      %v552 = vsub.f32 %v528, 0.5
      %v553 = vsub.f32 %v529, 0.5
      %v554 = vsel %vm530, %v542, %v548
      %v555 = vsel %vm531, %v543, %v549
      %v556 = vsel %vm532, %v544, %v550
      %v557 = vsel %vm533, %v545, %v551
      %v558 = vsel %vm534, %v546, %v552
      %v559 = vsel %vm535, %v547, %v553
      %v560 = vmul.f32 %v554, %v505
      %v561 = vmul.f32 %v555, %v505
      %v562 = vmul.f32 %v556, %v505
      %v563 = vmul.f32 %v557, %v505
      %v564 = vmul.f32 %v558, %v505
      %v565 = vmul.f32 %v559, %v505
      %v566 = vsub.f32 %v462, %v492
      %v567 = vsub.f32 %v463, %v493
      %v568 = vsub.f32 %v464, %v494
      %v569 = vsub.f32 %v465, %v495
      %v570 = vsub.f32 %v466, %v496
      %v571 = vsub.f32 %v467, %v497
      %v572 = vand.u32 2147483647, %v566
      %v573 = vand.u32 2147483647, %v567
      %v574 = vand.u32 2147483647, %v568
      %v575 = vand.u32 2147483647, %v569
      %v576 = vand.u32 2147483647, %v570
      %v577 = vand.u32 2147483647, %v571
      %vm578 = vcmp.lt.f32.partialorder %v572, 1.0
      %vm579 = vcmp.lt.f32.partialorder %v573, 1.0
      %vm580 = vcmp.lt.f32.partialorder %v574, 1.0
      %vm581 = vcmp.lt.f32.partialorder %v575, 1.0
      %vm582 = vcmp.lt.f32.partialorder %v576, 1.0
      %vm583 = vcmp.lt.f32.partialorder %v577, 1.0
      %v584 = vmul.f32 %v566, 0.5
      %v585 = vmul.f32 %v567, 0.5
      %v586 = vmul.f32 %v568, 0.5
      %v587 = vmul.f32 %v569, 0.5
      %v588 = vmul.f32 %v570, 0.5
      %v589 = vmul.f32 %v571, 0.5
      %v590 = vmul.f32 %v584, %v566
      %v591 = vmul.f32 %v585, %v567
      %v592 = vmul.f32 %v586, %v568
      %v593 = vmul.f32 %v587, %v569
      %v594 = vmul.f32 %v588, %v570
      %v595 = vmul.f32 %v589, %v571
      %v596 = vsub.f32 %v572, 0.5
      %v597 = vsub.f32 %v573, 0.5
      %v598 = vsub.f32 %v574, 0.5
      %v599 = vsub.f32 %v575, 0.5
      %v600 = vsub.f32 %v576, 0.5
      %v601 = vsub.f32 %v577, 0.5
      %v602 = vsel %vm578, %v590, %v596
      %v603 = vsel %vm579, %v591, %v597
      %v604 = vsel %vm580, %v592, %v598
      %v605 = vsel %vm581, %v593, %v599
      %v606 = vsel %vm582, %v594, %v600
      %v607 = vsel %vm583, %v595, %v601
      %v608 = vmul.f32 %v602, %v510
      %v609 = vmul.f32 %v603, %v511
      %v610 = vmul.f32 %v604, %v510
      %v611 = vmul.f32 %v605, %v511
      %v612 = vmul.f32 %v606, %v510
      %v613 = vmul.f32 %v607, %v511
      %v614 = vadd.f32 %v560, %v608
      %v615 = vadd.f32 %v561, %v609
      %v616 = vadd.f32 %v562, %v610
      %v617 = vadd.f32 %v563, %v611
      %v618 = vadd.f32 %v564, %v612
      %v619 = vadd.f32 %v565, %v613
      %v620 = vmul.f32 %v614, 0.5
      %v621 = vmul.f32 %v615, 0.5
      %v622 = vmul.f32 %v616, 0.5
      %v623 = vmul.f32 %v617, 0.5
      %v624 = vmul.f32 %v618, 0.5
      %v625 = vmul.f32 %v619, 0.5
      %v626 = vadd.f32 %v512, %v620
      %v627 = vadd.f32 %v513, %v621
      %v628 = vadd.f32 %v514, %v622
      %v629 = vadd.f32 %v515, %v623
      %v630 = vadd.f32 %v516, %v624
      %v631 = vadd.f32 %v517, %v625
      %v632 = vsub.f32 1.0, %v314
      %v633 = vsub.f32 1.0, %v315
      %v634 = vmul.f32 %v632, 10000.0
      %v635 = vmul.f32 %v633, 10000.0
      %v636 = vadd.f32 %v626, %v634
      %v637 = vadd.f32 %v627, %v635
      %v638 = vadd.f32 %v628, %v634
      %v639 = vadd.f32 %v629, %v635
      %v640 = vadd.f32 %v630, %v634
      %v641 = vadd.f32 %v631, %v635
      %p642 = scmp.eq.s32.totalorder %s20, 0
      // Predicated region
      $region37: #{unsup_loss_07.1} parent=35 // pred_check
        %p643 = pneg %p642
      $region38: #{unsup_loss_07.1} parent=35 // pred_check_branch
        %645 = sbr.rel (%p643) target = $region40
      $region39: #{unsup_loss_07.1} parent=35 // pred_region
        %vm646 = vcmask 130048
        %647 = vst.msk [vmem:[#allocation2] sm:$0xff] %vm646, %v636
        %648 = vst.msk [vmem:[#allocation2 + $0x8] sm:$0xff] %vm646, %v637
        %649 = vst.msk [vmem:[#allocation2 + $0x10] sm:$0xff] %vm646, %v638
        %650 = vst.msk [vmem:[#allocation2 + $0x18] sm:$0xff] %vm646, %v639
        %651 = vst.msk [vmem:[#allocation2 + $0x20] sm:$0xff] %vm646, %v640
        %652 = vst.msk [vmem:[#allocation2 + $0x28] sm:$0xff] %vm646, %v641
        %v653 = vld [vmem:[%s291] sm:$0xff]
        %v654 = vld [vmem:[%s291 + $0x8] sm:$0xff]
        %661 = vrot.lane.b32.xlu0 %v296, 127
        %v662 = vpop.permute.xlu0 %661
        %663 = vrot.lane.b32.xlu0 %v297, 127
        %v664 = vpop.permute.xlu0 %663
        %665 = vrot.lane.b32.xlu0 %v299, 127
        %v666 = vpop.permute.xlu0 %665
        %667 = vrot.lane.b32.xlu0 %v300, 127
        %v668 = vpop.permute.xlu0 %667
        %669 = vrot.lane.b32.xlu0 %v302, 127
        %v670 = vpop.permute.xlu0 %669
        %671 = vrot.lane.b32.xlu0 %v303, 127
        %v672 = vpop.permute.xlu0 %671
        %v679 = vsub.f32 %v296, %v662
        %v680 = vsub.f32 %v297, %v664
        %v681 = vsub.f32 %v299, %v666
        %v682 = vsub.f32 %v300, %v668
        %v683 = vsub.f32 %v302, %v670
        %v684 = vsub.f32 %v303, %v672
        %v685 = vrot.slane %v296, 1
        %v686 = vrot.slane %v297, 1
        %v687 = vsel %vm440, %v685, %v686
        %v688 = vrot.slane %v299, 1
        %v689 = vrot.slane %v300, 1
        %v690 = vsel %vm440, %v688, %v689
        %v691 = vrot.slane %v302, 1
        %v692 = vrot.slane %v303, 1
        %v693 = vsel %vm440, %v691, %v692
        %v700 = vsub.f32 %v296, %v687
        %v701 = vsub.f32 %v297, %v686
        %v702 = vsub.f32 %v299, %v690
        %v703 = vsub.f32 %v300, %v689
        %v704 = vsub.f32 %v302, %v693
        %v705 = vsub.f32 %v303, %v692
        %708 = vrot.lane.b32.xlu0 %v653, 127
        %v709 = vpop.permute.xlu0 %708
        %710 = vrot.lane.b32.xlu0 %v654, 127
        %v711 = vpop.permute.xlu0 %710
        %v714 = vsub.f32 %v653, %v709
        %v715 = vsub.f32 %v654, %v711
        %v716 = vrot.slane %v653, 1
        %v717 = vrot.slane %v654, 1
        %v718 = vsel %vm440, %v716, %v717
        %v721 = vsub.f32 %v653, %v718
        %v722 = vsub.f32 %v654, %v717
        %v723 = vand.u32 2147483647, %v679
        %v724 = vand.u32 2147483647, %v680
        %v725 = vand.u32 2147483647, %v681
        %v726 = vand.u32 2147483647, %v682
        %v727 = vand.u32 2147483647, %v683
        %v728 = vand.u32 2147483647, %v684
        %vm729 = vcmask 121856
        %v730 = vsel %vm729, %v723, 0.0
        %v731 = vsel %vm729, %v725, 0.0
        %v732 = vadd.f32 %v730, %v731
        %v733 = vsel %vm729, %v727, 0.0
        %v734 = vadd.f32 %v732, %v733
        %v735 = vsel %vm729, %v724, 0.0
        %v736 = vsel %vm729, %v726, 0.0
        %v737 = vadd.f32 %v735, %v736
        %v738 = vsel %vm729, %v728, 0.0
        %v739 = vadd.f32 %v737, %v738
        %v740 = vrcp.pop 3.0
        %v741 = vmul.f32 %v734, %v740
        %v742 = vmul.f32 %v739, %v740
        %v743 = vsub.f32 0.0, %v741
        %v744 = vsub.f32 0.0, %v742
        %v745 = vmul.f32 %v743, 1.442695
        %v746 = vpow.pop %v745
        %v747 = vmul.f32 %v744, 1.442695
        %v748 = vpow.pop %v747
        %v749 = vand.u32 2147483647, %v700
        %v750 = vand.u32 2147483647, %v701
        %v751 = vand.u32 2147483647, %v702
        %v752 = vand.u32 2147483647, %v703
        %v753 = vand.u32 2147483647, %v704
        %v754 = vand.u32 2147483647, %v705
        %v755 = vsel %vm646, %v749, 0.0
        %v756 = vsel %vm646, %v751, 0.0
        %v757 = vadd.f32 %v755, %v756
        %v758 = vsel %vm646, %v753, 0.0
        %v759 = vadd.f32 %v757, %v758
        %vm760 = vcmask 129024
        %v761 = vsel %vm760, %v750, 0.0
        %v762 = vsel %vm760, %v752, 0.0
        %v763 = vadd.f32 %v761, %v762
        %v764 = vsel %vm760, %v754, 0.0
        %v765 = vadd.f32 %v763, %v764
        %v766 = vmul.f32 %v759, %v740
        %v767 = vmul.f32 %v765, %v740
        %v768 = vsub.f32 0.0, %v766
        %v769 = vsub.f32 0.0, %v767
        %v770 = vmul.f32 %v768, 1.442695
        %v771 = vpow.pop %v770
        %v772 = vmul.f32 %v769, 1.442695
        %v773 = vpow.pop %v772
        %s774 = scalar_lea.smem [#allocation3], 0
        %775 = sst [smem:[%s774]] 0.0
        %v776 = vmul.f32 %v714, %v746
        %v777 = vmul.f32 %v715, %v748
        %v778 = vand.u32 2147483647, %v776
        %v779 = vand.u32 2147483647, %v777
        %v780 = vsel %vm729, %v778, 0.0
        %v781 = vsel %vm729, %v779, 0.0
        %v782 = vadd.f32 %v780, %v781
        %783 = vadd.xlane.f32.xlu0 %v782
        %v784 = vpop.xlane.xlu0 %783
        %v785 = vrot.slane %v784, 4
        %v786 = vadd.f32 %v784, %v785
        %v787 = vrot.slane %v786, 2
        %v788 = vadd.f32 %v786, %v787
        %v789 = vrot.slane %v788, 1
        %v790 = vadd.f32 %v788, %v789
        %s791 = vtos %v790
        %s792 = scalar_lea.smem [#allocation3], 1
        %793 = sst [smem:[%s792]] %s791
        %v794 = vmul.f32 %v721, %v771
        %v795 = vmul.f32 %v722, %v773
        %v796 = vand.u32 2147483647, %v794
        %v797 = vand.u32 2147483647, %v795
        %v798 = vsel %vm646, %v796, 0.0
        %v799 = vsel %vm760, %v797, 0.0
        %v800 = vadd.f32 %v798, %v799
        %801 = vadd.xlane.f32.xlu0 %v800
        %v802 = vpop.xlane.xlu0 %801
        %v803 = vrot.slane %v802, 4
        %v804 = vadd.f32 %v802, %v803
        %v805 = vrot.slane %v804, 2
        %v806 = vadd.f32 %v804, %v805
        %v807 = vrot.slane %v806, 1
        %v808 = vadd.f32 %v806, %v807
        %s809 = vtos %v808
        %s810 = scalar_lea.smem [#allocation3], 2
        %811 = sst [smem:[%s810]] %s809
      $region40: #{unsup_loss_07.1} parent=35 // pred_fallthru
        _
      %p812 = scmp.gt.s32.totalorder %s20, 0
      // Predicated region
      $region41: #{unsup_loss_07.1} parent=35 // pred_check
        %p813 = pneg %p812
      $region42: #{unsup_loss_07.1} parent=35 // pred_check_branch
        %815 = sbr.rel (%p813) target = $region44
      $region43: #{unsup_loss_07.1} parent=35 // pred_region
        %v816 = vld [vmem:[#allocation2] sm:$0xff]
        %v817 = vld [vmem:[#allocation2 + $0x8] sm:$0xff]
        %v818 = vld [vmem:[#allocation2 + $0x10] sm:$0xff]
        %v819 = vld [vmem:[#allocation2 + $0x18] sm:$0xff]
        %v820 = vld [vmem:[#allocation2 + $0x20] sm:$0xff]
        %v821 = vld [vmem:[#allocation2 + $0x28] sm:$0xff]
        %v822 = vmin.f32 %v816, %v636
        %v823 = vmin.f32 %v817, %v637
        %v824 = vmin.f32 %v818, %v638
        %v825 = vmin.f32 %v819, %v639
        %v826 = vmin.f32 %v820, %v640
        %v827 = vmin.f32 %v821, %v641
        %vm828 = vcmask 130048
        %829 = vst.msk [vmem:[#allocation2] sm:$0xff] %vm828, %v822
        %830 = vst.msk [vmem:[#allocation2 + $0x8] sm:$0xff] %vm828, %v823
        %831 = vst.msk [vmem:[#allocation2 + $0x10] sm:$0xff] %vm828, %v824
        %832 = vst.msk [vmem:[#allocation2 + $0x18] sm:$0xff] %vm828, %v825
        %833 = vst.msk [vmem:[#allocation2 + $0x20] sm:$0xff] %vm828, %v826
        %834 = vst.msk [vmem:[#allocation2 + $0x28] sm:$0xff] %vm828, %v827
      $region44: #{unsup_loss_07.1} parent=35 // pred_fallthru
        _
      %p835 = scmp.lt.s32.totalorder %s20, 2
      // Predicated region
      $region45: #{unsup_loss_07.1} parent=35 // pred_check
        %p836 = pneg %p835
      $region46: #{unsup_loss_07.1} parent=35 // pred_check_branch
        %838 = sbr.rel (%p836) target = $region48
      $region47: #{unsup_loss_07.1} parent=35 // pred_region
        %845 = vrot.lane.b32.xlu0 %v296, 127
        %v846 = vpop.permute.xlu0 %845
        %847 = vrot.lane.b32.xlu0 %v297, 127
        %v848 = vpop.permute.xlu0 %847
        %849 = vrot.lane.b32.xlu0 %v299, 127
        %v850 = vpop.permute.xlu0 %849
        %851 = vrot.lane.b32.xlu0 %v300, 127
        %v852 = vpop.permute.xlu0 %851
        %853 = vrot.lane.b32.xlu0 %v302, 127
        %v854 = vpop.permute.xlu0 %853
        %855 = vrot.lane.b32.xlu0 %v303, 127
        %v856 = vpop.permute.xlu0 %855
        %v863 = vadd.f32 %v296, %v846
        %v864 = vadd.f32 %v297, %v848
        %v865 = vadd.f32 %v299, %v850
        %v866 = vadd.f32 %v300, %v852
        %v867 = vadd.f32 %v302, %v854
        %v868 = vadd.f32 %v303, %v856
        %869 = vrot.lane.b32.xlu0 %v296, 126
        %v870 = vpop.permute.xlu0 %869
        %871 = vrot.lane.b32.xlu0 %v297, 126
        %v872 = vpop.permute.xlu0 %871
        %873 = vrot.lane.b32.xlu0 %v299, 126
        %v874 = vpop.permute.xlu0 %873
        %875 = vrot.lane.b32.xlu0 %v300, 126
        %v876 = vpop.permute.xlu0 %875
        %877 = vrot.lane.b32.xlu0 %v302, 126
        %v878 = vpop.permute.xlu0 %877
        %879 = vrot.lane.b32.xlu0 %v303, 126
        %v880 = vpop.permute.xlu0 %879
        %v887 = vadd.f32 %v863, %v870
        %v888 = vadd.f32 %v864, %v872
        %v889 = vadd.f32 %v865, %v874
        %v890 = vadd.f32 %v866, %v876
        %v891 = vadd.f32 %v867, %v878
        %v892 = vadd.f32 %v868, %v880
        %v899 = vrot.slane %v887, 1
        %v900 = vrot.slane %v888, 1
        %v901 = vsel %vm440, %v899, %v900
        %v902 = vrot.slane %v889, 1
        %v903 = vrot.slane %v890, 1
        %v904 = vsel %vm440, %v902, %v903
        %v905 = vrot.slane %v891, 1
        %v906 = vrot.slane %v892, 1
        %v907 = vsel %vm440, %v905, %v906
        %v914 = vadd.f32 %v887, %v901
        %v915 = vadd.f32 %v888, %v900
        %v916 = vadd.f32 %v889, %v904
        %v917 = vadd.f32 %v890, %v903
        %v918 = vadd.f32 %v891, %v907
        %v919 = vadd.f32 %v892, %v906
        %vm920 = vcmask 1045504
        %v921 = vrot.slane %v887, 2
        %v922 = vrot.slane %v888, 2
        %v923 = vsel %vm920, %v921, %v922
        %v924 = vrot.slane %v889, 2
        %v925 = vrot.slane %v890, 2
        %v926 = vsel %vm920, %v924, %v925
        %v927 = vrot.slane %v891, 2
        %v928 = vrot.slane %v892, 2
        %v929 = vsel %vm920, %v927, %v928
        %v936 = vadd.f32 %v914, %v923
        %v937 = vadd.f32 %v915, %v922
        %v938 = vadd.f32 %v916, %v926
        %v939 = vadd.f32 %v917, %v925
        %v940 = vadd.f32 %v918, %v929
        %v941 = vadd.f32 %v919, %v928
        %v942 = vmul.f32 %v936, 0.11111111
        %v943 = vmul.f32 %v937, 0.11111111
        %v944 = vmul.f32 %v938, 0.11111111
        %v945 = vmul.f32 %v939, 0.11111111
        %v946 = vmul.f32 %v940, 0.11111111
        %v947 = vmul.f32 %v941, 0.11111111
        %954 = vrot.lane.b32.xlu0 %v305, 127
        %v955 = vpop.permute.xlu0 %954
        %956 = vrot.lane.b32.xlu0 %v306, 127
        %v957 = vpop.permute.xlu0 %956
        %958 = vrot.lane.b32.xlu0 %v308, 127
        %v959 = vpop.permute.xlu0 %958
        %960 = vrot.lane.b32.xlu0 %v309, 127
        %v961 = vpop.permute.xlu0 %960
        %962 = vrot.lane.b32.xlu0 %v311, 127
        %v963 = vpop.permute.xlu0 %962
        %964 = vrot.lane.b32.xlu0 %v312, 127
        %v965 = vpop.permute.xlu0 %964
        %v972 = vadd.f32 %v305, %v955
        %v973 = vadd.f32 %v306, %v957
        %v974 = vadd.f32 %v308, %v959
        %v975 = vadd.f32 %v309, %v961
        %v976 = vadd.f32 %v311, %v963
        %v977 = vadd.f32 %v312, %v965
        %978 = vrot.lane.b32.xlu0 %v305, 126
        %v979 = vpop.permute.xlu0 %978
        %980 = vrot.lane.b32.xlu0 %v306, 126
        %v981 = vpop.permute.xlu0 %980
        %982 = vrot.lane.b32.xlu0 %v308, 126
        %v983 = vpop.permute.xlu0 %982
        %984 = vrot.lane.b32.xlu0 %v309, 126
        %v985 = vpop.permute.xlu0 %984
        %986 = vrot.lane.b32.xlu0 %v311, 126
        %v987 = vpop.permute.xlu0 %986
        %988 = vrot.lane.b32.xlu0 %v312, 126
        %v989 = vpop.permute.xlu0 %988
        %v996 = vadd.f32 %v972, %v979
        %v997 = vadd.f32 %v973, %v981
        %v998 = vadd.f32 %v974, %v983
        %v999 = vadd.f32 %v975, %v985
        %v1000 = vadd.f32 %v976, %v987
        %v1001 = vadd.f32 %v977, %v989
        %v1008 = vrot.slane %v996, 1
        %v1009 = vrot.slane %v997, 1
        %v1010 = vsel %vm440, %v1008, %v1009
        %v1011 = vrot.slane %v998, 1
        %v1012 = vrot.slane %v999, 1
        %v1013 = vsel %vm440, %v1011, %v1012
        %v1014 = vrot.slane %v1000, 1
        %v1015 = vrot.slane %v1001, 1
        %v1016 = vsel %vm440, %v1014, %v1015
        %v1023 = vadd.f32 %v996, %v1010
        %v1024 = vadd.f32 %v997, %v1009
        %v1025 = vadd.f32 %v998, %v1013
        %v1026 = vadd.f32 %v999, %v1012
        %v1027 = vadd.f32 %v1000, %v1016
        %v1028 = vadd.f32 %v1001, %v1015
        %v1029 = vrot.slane %v996, 2
        %v1030 = vrot.slane %v997, 2
        %v1031 = vsel %vm920, %v1029, %v1030
        %v1032 = vrot.slane %v998, 2
        %v1033 = vrot.slane %v999, 2
        %v1034 = vsel %vm920, %v1032, %v1033
        %v1035 = vrot.slane %v1000, 2
        %v1036 = vrot.slane %v1001, 2
        %v1037 = vsel %vm920, %v1035, %v1036
        %v1044 = vadd.f32 %v1023, %v1031
        %v1045 = vadd.f32 %v1024, %v1030
        %v1046 = vadd.f32 %v1025, %v1034
        %v1047 = vadd.f32 %v1026, %v1033
        %v1048 = vadd.f32 %v1027, %v1037
        %v1049 = vadd.f32 %v1028, %v1036
        %v1050 = vmul.f32 %v1044, 0.11111111
        %v1051 = vmul.f32 %v1045, 0.11111111
        %v1052 = vmul.f32 %v1046, 0.11111111
        %v1053 = vmul.f32 %v1047, 0.11111111
        %v1054 = vmul.f32 %v1048, 0.11111111
        %v1055 = vmul.f32 %v1049, 0.11111111
        %v1056 = vmul.f32 %v296, %v296
        %v1057 = vmul.f32 %v297, %v297
        %v1058 = vmul.f32 %v299, %v299
        %v1059 = vmul.f32 %v300, %v300
        %v1060 = vmul.f32 %v302, %v302
        %v1061 = vmul.f32 %v303, %v303
        %1068 = vrot.lane.b32.xlu0 %v1056, 127
        %v1069 = vpop.permute.xlu0 %1068
        %1070 = vrot.lane.b32.xlu0 %v1057, 127
        %v1071 = vpop.permute.xlu0 %1070
        %1072 = vrot.lane.b32.xlu0 %v1058, 127
        %v1073 = vpop.permute.xlu0 %1072
        %1074 = vrot.lane.b32.xlu0 %v1059, 127
        %v1075 = vpop.permute.xlu0 %1074
        %1076 = vrot.lane.b32.xlu0 %v1060, 127
        %v1077 = vpop.permute.xlu0 %1076
        %1078 = vrot.lane.b32.xlu0 %v1061, 127
        %v1079 = vpop.permute.xlu0 %1078
        %v1086 = vadd.f32 %v1056, %v1069
        %v1087 = vadd.f32 %v1057, %v1071
        %v1088 = vadd.f32 %v1058, %v1073
        %v1089 = vadd.f32 %v1059, %v1075
        %v1090 = vadd.f32 %v1060, %v1077
        %v1091 = vadd.f32 %v1061, %v1079
        %1092 = vrot.lane.b32.xlu0 %v1056, 126
        %v1093 = vpop.permute.xlu0 %1092
        %1094 = vrot.lane.b32.xlu0 %v1057, 126
        %v1095 = vpop.permute.xlu0 %1094
        %1096 = vrot.lane.b32.xlu0 %v1058, 126
        %v1097 = vpop.permute.xlu0 %1096
        %1098 = vrot.lane.b32.xlu0 %v1059, 126
        %v1099 = vpop.permute.xlu0 %1098
        %1100 = vrot.lane.b32.xlu0 %v1060, 126
        %v1101 = vpop.permute.xlu0 %1100
        %1102 = vrot.lane.b32.xlu0 %v1061, 126
        %v1103 = vpop.permute.xlu0 %1102
        %v1110 = vadd.f32 %v1086, %v1093
        %v1111 = vadd.f32 %v1087, %v1095
        %v1112 = vadd.f32 %v1088, %v1097
        %v1113 = vadd.f32 %v1089, %v1099
        %v1114 = vadd.f32 %v1090, %v1101
        %v1115 = vadd.f32 %v1091, %v1103
        %v1122 = vrot.slane %v1110, 1
        %v1123 = vrot.slane %v1111, 1
        %v1124 = vsel %vm440, %v1122, %v1123
        %v1125 = vrot.slane %v1112, 1
        %v1126 = vrot.slane %v1113, 1
        %v1127 = vsel %vm440, %v1125, %v1126
        %v1128 = vrot.slane %v1114, 1
        %v1129 = vrot.slane %v1115, 1
        %v1130 = vsel %vm440, %v1128, %v1129
        %v1137 = vadd.f32 %v1110, %v1124
        %v1138 = vadd.f32 %v1111, %v1123
        %v1139 = vadd.f32 %v1112, %v1127
        %v1140 = vadd.f32 %v1113, %v1126
        %v1141 = vadd.f32 %v1114, %v1130
        %v1142 = vadd.f32 %v1115, %v1129
        %v1143 = vrot.slane %v1110, 2
        %v1144 = vrot.slane %v1111, 2
        %v1145 = vsel %vm920, %v1143, %v1144
        %v1146 = vrot.slane %v1112, 2
        %v1147 = vrot.slane %v1113, 2
        %v1148 = vsel %vm920, %v1146, %v1147
        %v1149 = vrot.slane %v1114, 2
        %v1150 = vrot.slane %v1115, 2
        %v1151 = vsel %vm920, %v1149, %v1150
        %v1158 = vadd.f32 %v1137, %v1145
        %v1159 = vadd.f32 %v1138, %v1144
        %v1160 = vadd.f32 %v1139, %v1148
        %v1161 = vadd.f32 %v1140, %v1147
        %v1162 = vadd.f32 %v1141, %v1151
        %v1163 = vadd.f32 %v1142, %v1150
        %v1164 = vmul.f32 %v1158, 0.11111111
        %v1165 = vmul.f32 %v1159, 0.11111111
        %v1166 = vmul.f32 %v1160, 0.11111111
        %v1167 = vmul.f32 %v1161, 0.11111111
        %v1168 = vmul.f32 %v1162, 0.11111111
        %v1169 = vmul.f32 %v1163, 0.11111111
        %v1170 = vmul.f32 %v305, %v305
        %v1171 = vmul.f32 %v306, %v306
        %v1172 = vmul.f32 %v308, %v308
        %v1173 = vmul.f32 %v309, %v309
        %v1174 = vmul.f32 %v311, %v311
        %v1175 = vmul.f32 %v312, %v312
        %1182 = vrot.lane.b32.xlu0 %v1170, 127
        %v1183 = vpop.permute.xlu0 %1182
        %1184 = vrot.lane.b32.xlu0 %v1171, 127
        %v1185 = vpop.permute.xlu0 %1184
        %1186 = vrot.lane.b32.xlu0 %v1172, 127
        %v1187 = vpop.permute.xlu0 %1186
        %1188 = vrot.lane.b32.xlu0 %v1173, 127
        %v1189 = vpop.permute.xlu0 %1188
        %1190 = vrot.lane.b32.xlu0 %v1174, 127
        %v1191 = vpop.permute.xlu0 %1190
        %1192 = vrot.lane.b32.xlu0 %v1175, 127
        %v1193 = vpop.permute.xlu0 %1192
        %v1200 = vadd.f32 %v1170, %v1183
        %v1201 = vadd.f32 %v1171, %v1185
        %v1202 = vadd.f32 %v1172, %v1187
        %v1203 = vadd.f32 %v1173, %v1189
        %v1204 = vadd.f32 %v1174, %v1191
        %v1205 = vadd.f32 %v1175, %v1193
        %1206 = vrot.lane.b32.xlu0 %v1170, 126
        %v1207 = vpop.permute.xlu0 %1206
        %1208 = vrot.lane.b32.xlu0 %v1171, 126
        %v1209 = vpop.permute.xlu0 %1208
        %1210 = vrot.lane.b32.xlu0 %v1172, 126
        %v1211 = vpop.permute.xlu0 %1210
        %1212 = vrot.lane.b32.xlu0 %v1173, 126
        %v1213 = vpop.permute.xlu0 %1212
        %1214 = vrot.lane.b32.xlu0 %v1174, 126
        %v1215 = vpop.permute.xlu0 %1214
        %1216 = vrot.lane.b32.xlu0 %v1175, 126
        %v1217 = vpop.permute.xlu0 %1216
        %v1224 = vadd.f32 %v1200, %v1207
        %v1225 = vadd.f32 %v1201, %v1209
        %v1226 = vadd.f32 %v1202, %v1211
        %v1227 = vadd.f32 %v1203, %v1213
        %v1228 = vadd.f32 %v1204, %v1215
        %v1229 = vadd.f32 %v1205, %v1217
        %v1236 = vrot.slane %v1224, 1
        %v1237 = vrot.slane %v1225, 1
        %v1238 = vsel %vm440, %v1236, %v1237
        %v1239 = vrot.slane %v1226, 1
        %v1240 = vrot.slane %v1227, 1
        %v1241 = vsel %vm440, %v1239, %v1240
        %v1242 = vrot.slane %v1228, 1
        %v1243 = vrot.slane %v1229, 1
        %v1244 = vsel %vm440, %v1242, %v1243
        %v1251 = vadd.f32 %v1224, %v1238
        %v1252 = vadd.f32 %v1225, %v1237
        %v1253 = vadd.f32 %v1226, %v1241
        %v1254 = vadd.f32 %v1227, %v1240
        %v1255 = vadd.f32 %v1228, %v1244
        %v1256 = vadd.f32 %v1229, %v1243
        %v1257 = vrot.slane %v1224, 2
        %v1258 = vrot.slane %v1225, 2
        %v1259 = vsel %vm920, %v1257, %v1258
        %v1260 = vrot.slane %v1226, 2
        %v1261 = vrot.slane %v1227, 2
        %v1262 = vsel %vm920, %v1260, %v1261
        %v1263 = vrot.slane %v1228, 2
        %v1264 = vrot.slane %v1229, 2
        %v1265 = vsel %vm920, %v1263, %v1264
        %v1272 = vadd.f32 %v1251, %v1259
        %v1273 = vadd.f32 %v1252, %v1258
        %v1274 = vadd.f32 %v1253, %v1262
        %v1275 = vadd.f32 %v1254, %v1261
        %v1276 = vadd.f32 %v1255, %v1265
        %v1277 = vadd.f32 %v1256, %v1264
        %v1278 = vmul.f32 %v1272, 0.11111111
        %v1279 = vmul.f32 %v1273, 0.11111111
        %v1280 = vmul.f32 %v1274, 0.11111111
        %v1281 = vmul.f32 %v1275, 0.11111111
        %v1282 = vmul.f32 %v1276, 0.11111111
        %v1283 = vmul.f32 %v1277, 0.11111111
        %v1284 = vmul.f32 %v296, %v305
        %v1285 = vmul.f32 %v297, %v306
        %v1286 = vmul.f32 %v299, %v308
        %v1287 = vmul.f32 %v300, %v309
        %v1288 = vmul.f32 %v302, %v311
        %v1289 = vmul.f32 %v303, %v312
        %1296 = vrot.lane.b32.xlu0 %v1284, 127
        %v1297 = vpop.permute.xlu0 %1296
        %1298 = vrot.lane.b32.xlu0 %v1285, 127
        %v1299 = vpop.permute.xlu0 %1298
        %1300 = vrot.lane.b32.xlu0 %v1286, 127
        %v1301 = vpop.permute.xlu0 %1300
        %1302 = vrot.lane.b32.xlu0 %v1287, 127
        %v1303 = vpop.permute.xlu0 %1302
        %1304 = vrot.lane.b32.xlu0 %v1288, 127
        %v1305 = vpop.permute.xlu0 %1304
        %1306 = vrot.lane.b32.xlu0 %v1289, 127
        %v1307 = vpop.permute.xlu0 %1306
        %v1314 = vadd.f32 %v1284, %v1297
        %v1315 = vadd.f32 %v1285, %v1299
        %v1316 = vadd.f32 %v1286, %v1301
        %v1317 = vadd.f32 %v1287, %v1303
        %v1318 = vadd.f32 %v1288, %v1305
        %v1319 = vadd.f32 %v1289, %v1307
        %1320 = vrot.lane.b32.xlu0 %v1284, 126
        %v1321 = vpop.permute.xlu0 %1320
        %1322 = vrot.lane.b32.xlu0 %v1285, 126
        %v1323 = vpop.permute.xlu0 %1322
        %1324 = vrot.lane.b32.xlu0 %v1286, 126
        %v1325 = vpop.permute.xlu0 %1324
        %1326 = vrot.lane.b32.xlu0 %v1287, 126
        %v1327 = vpop.permute.xlu0 %1326
        %1328 = vrot.lane.b32.xlu0 %v1288, 126
        %v1329 = vpop.permute.xlu0 %1328
        %1330 = vrot.lane.b32.xlu0 %v1289, 126
        %v1331 = vpop.permute.xlu0 %1330
        %v1338 = vadd.f32 %v1314, %v1321
        %v1339 = vadd.f32 %v1315, %v1323
        %v1340 = vadd.f32 %v1316, %v1325
        %v1341 = vadd.f32 %v1317, %v1327
        %v1342 = vadd.f32 %v1318, %v1329
        %v1343 = vadd.f32 %v1319, %v1331
        %v1350 = vrot.slane %v1338, 1
        %v1351 = vrot.slane %v1339, 1
        %v1352 = vsel %vm440, %v1350, %v1351
        %v1353 = vrot.slane %v1340, 1
        %v1354 = vrot.slane %v1341, 1
        %v1355 = vsel %vm440, %v1353, %v1354
        %v1356 = vrot.slane %v1342, 1
        %v1357 = vrot.slane %v1343, 1
        %v1358 = vsel %vm440, %v1356, %v1357
        %v1365 = vadd.f32 %v1338, %v1352
        %v1366 = vadd.f32 %v1339, %v1351
        %v1367 = vadd.f32 %v1340, %v1355
        %v1368 = vadd.f32 %v1341, %v1354
        %v1369 = vadd.f32 %v1342, %v1358
        %v1370 = vadd.f32 %v1343, %v1357
        %v1371 = vrot.slane %v1338, 2
        %v1372 = vrot.slane %v1339, 2
        %v1373 = vsel %vm920, %v1371, %v1372
        %v1374 = vrot.slane %v1340, 2
        %v1375 = vrot.slane %v1341, 2
        %v1376 = vsel %vm920, %v1374, %v1375
        %v1377 = vrot.slane %v1342, 2
        %v1378 = vrot.slane %v1343, 2
        %v1379 = vsel %vm920, %v1377, %v1378
        %v1386 = vadd.f32 %v1365, %v1373
        %v1387 = vadd.f32 %v1366, %v1372
        %v1388 = vadd.f32 %v1367, %v1376
        %v1389 = vadd.f32 %v1368, %v1375
        %v1390 = vadd.f32 %v1369, %v1379
        %v1391 = vadd.f32 %v1370, %v1378
        %v1392 = vmul.f32 %v1386, 0.11111111
        %v1393 = vmul.f32 %v1387, 0.11111111
        %v1394 = vmul.f32 %v1388, 0.11111111
        %v1395 = vmul.f32 %v1389, 0.11111111
        %v1396 = vmul.f32 %v1390, 0.11111111
        %v1397 = vmul.f32 %v1391, 0.11111111
        %1400 = vrot.lane.b32.xlu0 %v314, 127
        %v1401 = vpop.permute.xlu0 %1400
        %1402 = vrot.lane.b32.xlu0 %v315, 127
        %v1403 = vpop.permute.xlu0 %1402
        %v1406 = vadd.f32 %v314, %v1401
        %v1407 = vadd.f32 %v315, %v1403
        %1408 = vrot.lane.b32.xlu0 %v314, 126
        %v1409 = vpop.permute.xlu0 %1408
        %1410 = vrot.lane.b32.xlu0 %v315, 126
        %v1411 = vpop.permute.xlu0 %1410
        %v1414 = vadd.f32 %v1406, %v1409
        %v1415 = vadd.f32 %v1407, %v1411
        %v1418 = vrot.slane %v1414, 1
        %v1419 = vrot.slane %v1415, 1
        %v1420 = vsel %vm440, %v1418, %v1419
        %v1423 = vadd.f32 %v1414, %v1420
        %v1424 = vadd.f32 %v1415, %v1419
        %v1425 = vrot.slane %v1414, 2
        %v1426 = vrot.slane %v1415, 2
        %v1427 = vsel %vm920, %v1425, %v1426
        %v1430 = vadd.f32 %v1423, %v1427
        %v1431 = vadd.f32 %v1424, %v1426
        %v1432 = vmul.f32 %v1430, 0.11111111
        %v1433 = vmul.f32 %v1431, 0.11111111
        %v1434 = vmul.f32 %v942, %v942
        %v1435 = vmul.f32 %v943, %v943
        %v1436 = vmul.f32 %v944, %v944
        %v1437 = vmul.f32 %v945, %v945
        %v1438 = vmul.f32 %v946, %v946
        %v1439 = vmul.f32 %v947, %v947
        %v1440 = vsub.f32 %v1164, %v1434
        %v1441 = vsub.f32 %v1165, %v1435
        %v1442 = vsub.f32 %v1166, %v1436
        %v1443 = vsub.f32 %v1167, %v1437
        %v1444 = vsub.f32 %v1168, %v1438
        %v1445 = vsub.f32 %v1169, %v1439
        %v1446 = vmul.f32 %v1050, %v1050
        %v1447 = vmul.f32 %v1051, %v1051
        %v1448 = vmul.f32 %v1052, %v1052
        %v1449 = vmul.f32 %v1053, %v1053
        %v1450 = vmul.f32 %v1054, %v1054
        %v1451 = vmul.f32 %v1055, %v1055
        %v1452 = vsub.f32 %v1278, %v1446
        %v1453 = vsub.f32 %v1279, %v1447
        %v1454 = vsub.f32 %v1280, %v1448
        %v1455 = vsub.f32 %v1281, %v1449
        %v1456 = vsub.f32 %v1282, %v1450
        %v1457 = vsub.f32 %v1283, %v1451
        %v1458 = vmul.f32 %v942, %v1050
        %v1459 = vmul.f32 %v943, %v1051
        %v1460 = vmul.f32 %v944, %v1052
        %v1461 = vmul.f32 %v945, %v1053
        %v1462 = vmul.f32 %v946, %v1054
        %v1463 = vmul.f32 %v947, %v1055
        %v1464 = vsub.f32 %v1392, %v1458
        %v1465 = vsub.f32 %v1393, %v1459
        %v1466 = vsub.f32 %v1394, %v1460
        %v1467 = vsub.f32 %v1395, %v1461
        %v1468 = vsub.f32 %v1396, %v1462
        %v1469 = vsub.f32 %v1397, %v1463
        %v1470 = vmul.f32 %v942, 2.0
        %v1471 = vmul.f32 %v943, 2.0
        %v1472 = vmul.f32 %v944, 2.0
        %v1473 = vmul.f32 %v945, 2.0
        %v1474 = vmul.f32 %v946, 2.0
        %v1475 = vmul.f32 %v947, 2.0
        %v1476 = vmul.f32 %v1470, %v1050
        %v1477 = vmul.f32 %v1471, %v1051
        %v1478 = vmul.f32 %v1472, %v1052
        %v1479 = vmul.f32 %v1473, %v1053
        %v1480 = vmul.f32 %v1474, %v1054
        %v1481 = vmul.f32 %v1475, %v1055
        %v1482 = vadd.f32 %v1476, 0.0001
        %v1483 = vadd.f32 %v1477, 0.0001
        %v1484 = vadd.f32 %v1478, 0.0001
        %v1485 = vadd.f32 %v1479, 0.0001
        %v1486 = vadd.f32 %v1480, 0.0001
        %v1487 = vadd.f32 %v1481, 0.0001
        %v1488 = vmul.f32 %v1464, 2.0
        %v1489 = vmul.f32 %v1465, 2.0
        %v1490 = vmul.f32 %v1466, 2.0
        %v1491 = vmul.f32 %v1467, 2.0
        %v1492 = vmul.f32 %v1468, 2.0
        %v1493 = vmul.f32 %v1469, 2.0
        %v1494 = vadd.f32 %v1488, 0.0009
        %v1495 = vadd.f32 %v1489, 0.0009
        %v1496 = vadd.f32 %v1490, 0.0009
        %v1497 = vadd.f32 %v1491, 0.0009
        %v1498 = vadd.f32 %v1492, 0.0009
        %v1499 = vadd.f32 %v1493, 0.0009
        %v1500 = vmul.f32 %v1482, %v1494
        %v1501 = vmul.f32 %v1483, %v1495
        %v1502 = vmul.f32 %v1484, %v1496
        %v1503 = vmul.f32 %v1485, %v1497
        %v1504 = vmul.f32 %v1486, %v1498
        %v1505 = vmul.f32 %v1487, %v1499
        %v1506 = vadd.f32 %v1434, %v1440
        %v1507 = vadd.f32 %v1435, %v1441
        %v1508 = vadd.f32 %v1436, %v1442
        %v1509 = vadd.f32 %v1437, %v1443
        %v1510 = vadd.f32 %v1438, %v1444
        %v1511 = vadd.f32 %v1439, %v1445
        %v1512 = vadd.f32 %v1506, 0.0001
        %v1513 = vadd.f32 %v1507, 0.0001
        %v1514 = vadd.f32 %v1508, 0.0001
        %v1515 = vadd.f32 %v1509, 0.0001
        %v1516 = vadd.f32 %v1510, 0.0001
        %v1517 = vadd.f32 %v1511, 0.0001
        %v1518 = vadd.f32 %v1446, %v1452
        %v1519 = vadd.f32 %v1447, %v1453
        %v1520 = vadd.f32 %v1448, %v1454
        %v1521 = vadd.f32 %v1449, %v1455
        %v1522 = vadd.f32 %v1450, %v1456
        %v1523 = vadd.f32 %v1451, %v1457
        %v1524 = vadd.f32 %v1518, 0.0009
        %v1525 = vadd.f32 %v1519, 0.0009
        %v1526 = vadd.f32 %v1520, 0.0009
        %v1527 = vadd.f32 %v1521, 0.0009
        %v1528 = vadd.f32 %v1522, 0.0009
        %v1529 = vadd.f32 %v1523, 0.0009
        %v1530 = vmul.f32 %v1512, %v1524
        %v1531 = vmul.f32 %v1513, %v1525
        %v1532 = vmul.f32 %v1514, %v1526
        %v1533 = vmul.f32 %v1515, %v1527
        %v1534 = vmul.f32 %v1516, %v1528
        %v1535 = vmul.f32 %v1517, %v1529
        %v1536 = vrcp.pop %v1530
        %v1537 = vrcp.pop %v1531
        %v1538 = vrcp.pop %v1532
        %v1539 = vrcp.pop %v1533
        %v1540 = vrcp.pop %v1534
        %v1541 = vrcp.pop %v1535
        %v1542 = vmul.f32 %v1500, %v1536
        %v1543 = vmul.f32 %v1501, %v1537
        %v1544 = vmul.f32 %v1502, %v1538
        %v1545 = vmul.f32 %v1503, %v1539
        %v1546 = vmul.f32 %v1504, %v1540
        %v1547 = vmul.f32 %v1505, %v1541
        %v1548 = vsub.f32 1.0, %v1542
        %v1549 = vsub.f32 1.0, %v1543
        %v1550 = vsub.f32 1.0, %v1544
        %v1551 = vsub.f32 1.0, %v1545
        %v1552 = vsub.f32 1.0, %v1546
        %v1553 = vsub.f32 1.0, %v1547
        %v1554 = vmul.f32 %v1548, 0.5
        %v1555 = vmul.f32 %v1549, 0.5
        %v1556 = vmul.f32 %v1550, 0.5
        %v1557 = vmul.f32 %v1551, 0.5
        %v1558 = vmul.f32 %v1552, 0.5
        %v1559 = vmul.f32 %v1553, 0.5
        %v1560 = vmax.f32 %v1554, 0.0
        %v1561 = vmax.f32 %v1555, 0.0
        %v1562 = vmax.f32 %v1556, 0.0
        %v1563 = vmax.f32 %v1557, 0.0
        %v1564 = vmax.f32 %v1558, 0.0
        %v1565 = vmax.f32 %v1559, 0.0
        %v1566 = vmin.f32 %v1560, 1.0
        %v1567 = vmin.f32 %v1561, 1.0
        %v1568 = vmin.f32 %v1562, 1.0
        %v1569 = vmin.f32 %v1563, 1.0
        %v1570 = vmin.f32 %v1564, 1.0
        %v1571 = vmin.f32 %v1565, 1.0
        %v1572 = vmul.f32 %v1432, %v1566
        %v1573 = vmul.f32 %v1433, %v1567
        %v1574 = vmul.f32 %v1432, %v1568
        %v1575 = vmul.f32 %v1433, %v1569
        %v1576 = vmul.f32 %v1432, %v1570
        %v1577 = vmul.f32 %v1433, %v1571
        %s1578 = sld [smem:[#allocation3]]
        %vm1579 = vcmask 113664
        %v1580 = vsel %vm1579, %v1572, 0.0
        %vm1581 = vcmask 111616
        %v1582 = vsel %vm1581, %v1573, 0.0
        %v1583 = vadd.f32 %v1580, %v1582
        %v1584 = vsel %vm1579, %v1574, 0.0
        %v1585 = vadd.f32 %v1583, %v1584
        %v1586 = vsel %vm1581, %v1575, 0.0
        %v1587 = vadd.f32 %v1585, %v1586
        %v1588 = vsel %vm1579, %v1576, 0.0
        %v1589 = vadd.f32 %v1587, %v1588
        %v1590 = vsel %vm1581, %v1577, 0.0
        %v1591 = vadd.f32 %v1589, %v1590
        %1592 = vadd.xlane.f32.xlu0 %v1591
        %v1593 = vpop.xlane.xlu0 %1592
        %v1594 = vrot.slane %v1593, 4
        %v1595 = vadd.f32 %v1593, %v1594
        %v1596 = vrot.slane %v1595, 2
        %v1597 = vadd.f32 %v1595, %v1596
        %v1598 = vrot.slane %v1597, 1
        %v1599 = vadd.f32 %v1597, %v1598
        %s1600 = vtos %v1599
        %s1601 = sadd.f32 %s1578, %s1600
        %s1602 = scalar_lea.smem [#allocation3], 0
        %1603 = sst [smem:[%s1602]] %s1601
      $region48: #{unsup_loss_07.1} parent=35 // pred_fallthru
        _
      %p1604 = scmp.eq.s32.totalorder %s20, 1
      // Predicated region
      $region49: #{unsup_loss_07.1} parent=35 // pred_check
        %p1605 = pneg %p1604
      $region50: #{unsup_loss_07.1} parent=35 // pred_check_branch
        %1607 = sbr.rel (%p1605) target = $region52
      $region51: #{unsup_loss_07.1} parent=35 // pred_region
        %v1608 = vld [vmem:[#allocation2] sm:$0xff]
        %v1609 = vld [vmem:[#allocation2 + $0x8] sm:$0xff]
        %v1610 = vld [vmem:[#allocation2 + $0x10] sm:$0xff]
        %v1611 = vld [vmem:[#allocation2 + $0x18] sm:$0xff]
        %v1612 = vld [vmem:[#allocation2 + $0x20] sm:$0xff]
        %v1613 = vld [vmem:[#allocation2 + $0x28] sm:$0xff]
        %vm1614 = vcmp.lt.f32.partialorder %v1608, 10000.0
        %vm1615 = vcmp.lt.f32.partialorder %v1609, 10000.0
        %vm1616 = vcmp.lt.f32.partialorder %v1610, 10000.0
        %vm1617 = vcmp.lt.f32.partialorder %v1611, 10000.0
        %vm1618 = vcmp.lt.f32.partialorder %v1612, 10000.0
        %vm1619 = vcmp.lt.f32.partialorder %v1613, 10000.0
        %v1620 = vsel %vm1614, %v1608, 0.0
        %v1621 = vsel %vm1615, %v1609, 0.0
        %v1622 = vsel %vm1616, %v1610, 0.0
        %v1623 = vsel %vm1617, %v1611, 0.0
        %v1624 = vsel %vm1618, %v1612, 0.0
        %v1625 = vsel %vm1619, %v1613, 0.0
        %vm1626 = vcmask 130048
        %v1627 = vsel %vm1626, %v1620, 0.0
        %v1628 = vsel %vm1626, %v1621, 0.0
        %v1629 = vadd.f32 %v1627, %v1628
        %v1630 = vsel %vm1626, %v1622, 0.0
        %v1631 = vadd.f32 %v1629, %v1630
        %v1632 = vsel %vm1626, %v1623, 0.0
        %v1633 = vadd.f32 %v1631, %v1632
        %v1634 = vsel %vm1626, %v1624, 0.0
        %v1635 = vadd.f32 %v1633, %v1634
        %v1636 = vsel %vm1626, %v1625, 0.0
        %v1637 = vadd.f32 %v1635, %v1636
        %1638 = vadd.xlane.f32.xlu0 %v1637
        %v1639 = vpop.xlane.xlu0 %1638
        %v1640 = vrot.slane %v1639, 4
        %v1641 = vadd.f32 %v1639, %v1640
        %v1642 = vrot.slane %v1641, 2
        %v1643 = vadd.f32 %v1641, %v1642
        %v1644 = vrot.slane %v1643, 1
        %v1645 = vadd.f32 %v1643, %v1644
        %s1646 = vtos %v1645
        %vm1647 = vcmp.eq.s32.totalorder %v501, 0
        %vm1648 = vcmp.eq.s32.totalorder %v499, 0
        %vm1649 = vmand %vm1647, %vm1648
        %v1650 = vstv %s1646
        %v1651 = vsel %vm1649, %v1650, 0.0
        %vm1652 = vcmp.eq.s32.totalorder %v499, 1
        %vm1653 = vmand %vm1647, %vm1652
        %s1654 = sld [smem:[#allocation3]]
        %v1655 = vstv %s1654
        %v1656 = vsel %vm1653, %v1655, %v1651
        %vm1657 = vcmp.eq.s32.totalorder %v499, 2
        %vm1658 = vmand %vm1647, %vm1657
        %s1659 = sld [smem:[#allocation3 + $0x1]]
        %v1660 = vstv %s1659
        %v1661 = vsel %vm1658, %v1660, %v1656
        %vm1662 = vcmp.eq.s32.totalorder %v499, 3
        %vm1663 = vmand %vm1647, %vm1662
        %s1664 = sld [smem:[#allocation3 + $0x2]]
        %v1665 = vstv %s1664
        %v1666 = vsel %vm1663, %v1665, %v1661
        %1667 = vst [vmem:[%s295] sm:$0xff] %v1666
      $region52: #{unsup_loss_07.1} parent=35 // pred_fallthru
        _
      %p1668 = scmp.lt.s32.totalorder %s19, 1
      %s1669 = scalar_select %p1668, %s19, 1
      %s1670 = smul.addr %s1669, 8
      %s1671 = scalar_lea.vmem %s4, %s1670
      // Predicated region
      $region53: #{unsup_loss_07.1} parent=35 // pred_check
        %p1672 = pneg %p157
      $region54: #{unsup_loss_07.1} parent=35 // pred_check_branch
        %1674 = sbr.rel (%p1672) target = $region56
      $region55: #{unsup_loss_07.1} parent=35 // pred_region
        _
      $region56: #{unsup_loss_07.1} parent=35 // pred_fallthru
        _
    $region36: #{unsup_loss_07.1} parent=5 // pred_fallthru
      _
    %p1675 = scmp.le.s32.totalorder 2, %s10
    // Predicated region
    $region57: #{unsup_loss_07.1} parent=5 // pred_check
      %p1676 = pneg %p1675
    $region58: #{unsup_loss_07.1} parent=5 // pred_check_branch
      %1678 = sbr.rel (%p1676) target = $region60
    $region59: #{unsup_loss_07.1} parent=5 // pred_region
      %s1679 = ssub.s32 %s10, 2
      // Predicated region
      $region61: #{unsup_loss_07.1} parent=59 // pred_check
        %p1680 = pneg %p163
      $region62: #{unsup_loss_07.1} parent=59 // pred_check_branch
        %1682 = sbr.rel (%p1680) target = $region64
      $region63: #{unsup_loss_07.1} parent=59 // pred_region
        %p1683 = scmp.lt.s32.totalorder %s21, 1
        %s1684 = scalar_select %p1683, %s21, 1
        %s1685 = smul.addr %s1684, 8
        %s1686 = scalar_lea.vmem %s4, %s1685
      $region64: #{unsup_loss_07.1} parent=59 // pred_fallthru
        _
    $region60: #{unsup_loss_07.1} parent=5 // pred_fallthru
      _
  $region6: #{unsup_loss_07.1} parent=0 // loop_footer
    %s14 = sadd.s32 1, %s10
  $region7: #{unsup_loss_07.1} parent=0 // loop_footer_branch
    %9 = sbr.rel target = $region3
  $region8: #{unsup_loss_07.1} parent=0 // loop_exit
    _

</llo_original>
